<compile_context>
chip_gen: v7x
topology: tpu7x:2x2x1
jax: 0.10.0
libtpu: 0.0.40
codegen_flags: <defaults>
</compile_context>

<pallas_src>
import math

import jax
import jax.numpy as jnp
from jax.experimental import pallas as pl
from jax.experimental.pallas import tpu as pltpu  # noqa: F401  (TPU backend assumed)


# ----------------------------------------------------------------------------
# Pallas kernel: the entire network, fused.
#   h0 = x                                     (rows = padded batch, cols = C*H*W)
#   h_{l+1} = act_l( (h_l @ M_l) + shift_l )   l = 0..5
# M_l : bf16 dense linearization of conv layer l (BN scale folded in)
# shift_l : f32 per-output-column bias / BN shift
# ----------------------------------------------------------------------------
def _fused_net_kernel(x_ref,
                      m1, s1, m2, s2, m3, s3, m4, s4, m5, s5, m6, s6,
                      o_ref):
    h = x_ref[...]                                        # (8, 768) bf16
    for m_ref, s_ref in ((m1, s1), (m2, s2), (m3, s3), (m4, s4), (m5, s5)):
        z = jnp.dot(h, m_ref[...], preferred_element_type=jnp.float32)
        z = z + s_ref[...]                                # per-column affine, f32
        z = jnp.maximum(z, 0.2 * z)                       # LeakyReLU(0.2)
        h = z.astype(jnp.bfloat16)                        # bf16 feed for next MXU op
    z = jnp.dot(h, m6[...], preferred_element_type=jnp.float32) + s6[...]
    # 256 * sigmoid(z); the divide goes to the EUP slot via approx reciprocal.
    o_ref[...] = 256.0 * pl.reciprocal(1.0 + jnp.exp(-z), approx=True)


def fused_net(x_pad, packed):
    """x_pad: (rows, n_in0) bf16, rows a multiple of 8; packed: [(M, shift)]*6."""
    rows = x_pad.shape[0]
    n_out = packed[-1][0].shape[1]
    in_specs = [pl.BlockSpec(x_pad.shape, lambda: (0, 0))]
    args = [x_pad]
    for m, s in packed:
        in_specs.append(pl.BlockSpec(m.shape, lambda: (0, 0)))
        in_specs.append(pl.BlockSpec(s.shape, lambda: (0, 0)))
        args += [m, s]
    return pl.pallas_call(
        _fused_net_kernel,
        out_shape=jax.ShapeDtypeStruct((rows, n_out), jnp.float32),
        in_specs=in_specs,
        out_specs=pl.BlockSpec((rows, n_out), lambda: (0, 0)),
    )(*args)


# ----------------------------------------------------------------------------
# One-time weight packing (pure JAX, outside the forward / outside the kernel).
# ----------------------------------------------------------------------------
def _conv2d(x, w, stride=2, pad=1):
    # x: (N, Cin, H, W); w: (Cout, Cin, kh, kw)  ->  (N, Cout, Ho, Wo)
    return jax.lax.conv_general_dilated(
        x, w, window_strides=(stride, stride),
        padding=((pad, pad), (pad, pad)),
        dimension_numbers=("NCHW", "OIHW", "NCHW"),
        precision=jax.lax.Precision.HIGHEST)


def _conv_transpose2d(x, w, stride=2, pad=1):
    # PyTorch ConvTranspose2d semantics; w: (Cin, Cout, kh, kw).
    k = w.shape[2]
    wf = jnp.flip(w, axis=(2, 3)).transpose(1, 0, 2, 3)   # (Cout, Cin, kh, kw)
    return jax.lax.conv_general_dilated(
        x, wf, window_strides=(1, 1),
        padding=((k - 1 - pad, k - 1 - pad),) * 2,
        lhs_dilation=(stride, stride),                    # zero-insertion, fused in XLA
        dimension_numbers=("NCHW", "OIHW", "NCHW"),
        precision=jax.lax.Precision.HIGHEST)


def _linearize(conv_fn, in_shape):
    """Dense matrix M with  conv_fn(x).reshape(-1) == x.reshape(-1) @ M."""
    n_in = math.prod(in_shape)
    probes = jnp.eye(n_in, dtype=jnp.float32).reshape((n_in,) + tuple(in_shape))
    out = conv_fn(probes)                                 # (n_in, Cout, Ho, Wo)
    return out.reshape(n_in, -1), out.shape[1:]


def prepare(params, in_shape=(3, 16, 16), eps=1e-5):
    """Pack each conv layer into a bf16 (n_in, n_out) matrix + f32 shift row.

    Bias and eval-mode BatchNorm (gamma/sqrt(var+eps) scale, shifted mean/beta)
    are folded in, so the kernel only does matmul + add + activation.
    """
    packed = []
    shape = in_shape
    for w, b in params["enc"]:                            # Conv2d + LeakyReLU
        m, shape = _linearize(lambda x: _conv2d(x, w), shape)
        hw = shape[1] * shape[2]
        shift = jnp.repeat(b, hw)
        packed.append((m.astype(jnp.bfloat16),
                       shift.reshape(1, -1).astype(jnp.float32)))
    for i, (w, b, gamma, beta, rmean, rvar) in enumerate(params["dec"]):
        m, shape = _linearize(lambda x: _conv_transpose2d(x, w), shape)
        hw = shape[1] * shape[2]
        if i < 2:                                         # deconv + BN(eval) + LeakyReLU
            sc = gamma / jnp.sqrt(rvar + eps)
            m = m * jnp.repeat(sc, hw)[None, :]
            shift = jnp.repeat((b - rmean) * sc + beta, hw)
        else:                                             # last deconv; sigmoid in-kernel
            shift = jnp.repeat(b, hw)
        packed.append((m.astype(jnp.bfloat16),
                       shift.reshape(1, -1).astype(jnp.float32)))
    return packed


# ----------------------------------------------------------------------------
# Parameters + forward
# ----------------------------------------------------------------------------
def init_params(key):
    nc = 3
    enc = [(nc, 8), (8, 16), (16, 32)]        # Conv2d(Cin, Cout, 4, 2, 1)
    dec = [(32, 16), (16, 8), (8, nc)]        # ConvTranspose2d(Cin, Cout, 4, 2, 1)
    params = {"enc": [], "dec": []}
    for cin, cout in enc:
        key, k1, k2 = jax.random.split(key, 3)
        w = 0.05 * jax.random.normal(k1, (cout, cin, 4, 4), jnp.float32)
        b = 0.05 * jax.random.normal(k2, (cout,), jnp.float32)
        params["enc"].append((w, b))
    for cin, cout in dec:
        key, k1, k2 = jax.random.split(key, 3)
        w = 0.05 * jax.random.normal(k1, (cin, cout, 4, 4), jnp.float32)
        b = 0.05 * jax.random.normal(k2, (cout,), jnp.float32)
        # eval-mode BatchNorm defaults: gamma=1, beta=0, running_mean=0, running_var=1
        gamma = jnp.ones((cout,), jnp.float32)
        beta = jnp.zeros((cout,), jnp.float32)
        rmean = jnp.zeros((cout,), jnp.float32)
        rvar = jnp.ones((cout,), jnp.float32)
        params["dec"].append((w, b, gamma, beta, rmean, rvar))
    return params


@jax.jit
def net_forward(packed, tactile, action):
    del action                                    # unused in the PyTorch forward
    B = tactile.shape[0]
    n_in = packed[0][0].shape[0]
    x = tactile.reshape(B, n_in)                  # NCHW C-order flatten (no transpose)
    rows = ((B + 7) // 8) * 8                     # sublane-align the tiny batch dim
    xp = jnp.pad(x.astype(jnp.bfloat16), ((0, rows - B), (0, 0)))
    out = fused_net(xp, packed)                   # (rows, C*H*W) f32
    return out[:B].reshape(tactile.shape)         # autoencoder: output shape == input


# ----------------------------------------------------------------------------
# Pure-JAX f32 reference (same semantics as the PyTorch module in eval mode)
# ----------------------------------------------------------------------------
def net_reference(params, tactile, eps=1e-5):
    x = tactile
    for w, b in params["enc"]:
        x = _conv2d(x, w) + b[None, :, None, None]
        x = jnp.where(x >= 0, x, 0.2 * x)
    for i, (w, b, gamma, beta, rmean, rvar) in enumerate(params["dec"]):
        x = _conv_transpose2d(x, w) + b[None, :, None, None]
        if i < 2:
            sc = (gamma / jnp.sqrt(rvar + eps))[None, :, None, None]
            x = (x - rmean[None, :, None, None]) * sc + beta[None, :, None, None]
            x = jnp.where(x >= 0, x, 0.2 * x)
        else:
            x = 256.0 * jax.nn.sigmoid(x)
    return x


if __name__ == "__main__":
    key = jax.random.PRNGKey(0)
    kp, kt, ka = jax.random.split(key, 3)
    params = init_params(kp)
    packed = prepare(params)                      # one-time weight packing

    tactile = jax.random.uniform(kt, (2, 3, 16, 16), jnp.float32)
    action = jax.random.normal(ka, (2, 4), jnp.float32)   # unused by forward

    out = net_forward(packed, tactile, action)
    jax.block_until_ready(out)

    assert out.shape == (2, 3, 16, 16), out.shape
    assert bool(jnp.all(jnp.isfinite(out)))
    ref = net_reference(params, tactile)
    err = float(jnp.max(jnp.abs(out - ref)))
    assert err < 3.0, f"max abs error {err} on a 0..256 output range"
    print("KERNEL_OK")
</pallas_src>

<mosaic_0001>
module attributes {stable_mosaic.version = 11 : i64} {
  func.func @_fused_net_kernel(%arg0: memref<8x768xbf16, #tpu.memory_space<vmem>>, %arg1: memref<768x512xbf16, #tpu.memory_space<vmem>>, %arg2: memref<1x512xf32, #tpu.memory_space<vmem>>, %arg3: memref<512x256xbf16, #tpu.memory_space<vmem>>, %arg4: memref<1x256xf32, #tpu.memory_space<vmem>>, %arg5: memref<256x128xbf16, #tpu.memory_space<vmem>>, %arg6: memref<1x128xf32, #tpu.memory_space<vmem>>, %arg7: memref<128x256xbf16, #tpu.memory_space<vmem>>, %arg8: memref<1x256xf32, #tpu.memory_space<vmem>>, %arg9: memref<256x512xbf16, #tpu.memory_space<vmem>>, %arg10: memref<1x512xf32, #tpu.memory_space<vmem>>, %arg11: memref<512x768xbf16, #tpu.memory_space<vmem>>, %arg12: memref<1x768xf32, #tpu.memory_space<vmem>>, %arg13: memref<8x768xf32, #tpu.memory_space<vmem>>) attributes {dimension_semantics = [], scalar_prefetch = 0 : i64, scratch_operands = 0 : i64, tpu.core_type = #tpu.core_type<tc>} {
    %c0 = arith.constant 0 : index
    %c0_0 = arith.constant 0 : index
    %0 = vector.load %arg0[%c0, %c0_0] : memref<8x768xbf16, #tpu.memory_space<vmem>>, vector<8x768xbf16>
    %c0_1 = arith.constant 0 : index
    %c0_2 = arith.constant 0 : index
    %1 = vector.load %arg1[%c0_1, %c0_2] : memref<768x512xbf16, #tpu.memory_space<vmem>>, vector<768x512xbf16>
    %cst = arith.constant dense<0.000000e+00> : vector<8x512xf32>
    %2 = tpu.matmul %0, %1, %cst {dimension_numbers = #tpu.dot_dimension_numbers<[1], [0], [0], [1], [0, 0, 1, 1], [], []>} : vector<8x768xbf16>, vector<768x512xbf16>, vector<8x512xf32> -> vector<8x512xf32>
    %c0_3 = arith.constant 0 : index
    %c0_4 = arith.constant 0 : index
    %3 = vector.load %arg2[%c0_3, %c0_4] : memref<1x512xf32, #tpu.memory_space<vmem>>, vector<1x512xf32>
    %4 = vector.broadcast %3 : vector<1x512xf32> to vector<8x512xf32>
    %5 = arith.addf %2, %4 : vector<8x512xf32>
    %cst_5 = arith.constant 2.000000e-01 : f32
    %6 = vector.broadcast %cst_5 : f32 to vector<8x512xf32>
    %7 = arith.mulf %6, %5 : vector<8x512xf32>
    %8 = arith.maximumf %5, %7 : vector<8x512xf32>
    %9 = arith.truncf %8 : vector<8x512xf32> to vector<8x512xbf16>
    %c0_6 = arith.constant 0 : index
    %c0_7 = arith.constant 0 : index
    %10 = vector.load %arg3[%c0_6, %c0_7] : memref<512x256xbf16, #tpu.memory_space<vmem>>, vector<512x256xbf16>
    %cst_8 = arith.constant dense<0.000000e+00> : vector<8x256xf32>
    %11 = tpu.matmul %9, %10, %cst_8 {dimension_numbers = #tpu.dot_dimension_numbers<[1], [0], [0], [1], [0, 0, 1, 1], [], []>} : vector<8x512xbf16>, vector<512x256xbf16>, vector<8x256xf32> -> vector<8x256xf32>
    %c0_9 = arith.constant 0 : index
    %c0_10 = arith.constant 0 : index
    %12 = vector.load %arg4[%c0_9, %c0_10] : memref<1x256xf32, #tpu.memory_space<vmem>>, vector<1x256xf32>
    %13 = vector.broadcast %12 : vector<1x256xf32> to vector<8x256xf32>
    %14 = arith.addf %11, %13 : vector<8x256xf32>
    %cst_11 = arith.constant 2.000000e-01 : f32
    %15 = vector.broadcast %cst_11 : f32 to vector<8x256xf32>
    %16 = arith.mulf %15, %14 : vector<8x256xf32>
    %17 = arith.maximumf %14, %16 : vector<8x256xf32>
    %18 = arith.truncf %17 : vector<8x256xf32> to vector<8x256xbf16>
    %c0_12 = arith.constant 0 : index
    %c0_13 = arith.constant 0 : index
    %19 = vector.load %arg5[%c0_12, %c0_13] : memref<256x128xbf16, #tpu.memory_space<vmem>>, vector<256x128xbf16>
    %cst_14 = arith.constant dense<0.000000e+00> : vector<8x128xf32>
    %20 = tpu.matmul %18, %19, %cst_14 {dimension_numbers = #tpu.dot_dimension_numbers<[1], [0], [0], [1], [0, 0, 1, 1], [], []>} : vector<8x256xbf16>, vector<256x128xbf16>, vector<8x128xf32> -> vector<8x128xf32>
    %c0_15 = arith.constant 0 : index
    %c0_16 = arith.constant 0 : index
    %21 = vector.load %arg6[%c0_15, %c0_16] : memref<1x128xf32, #tpu.memory_space<vmem>>, vector<1x128xf32>
    %22 = vector.broadcast %21 : vector<1x128xf32> to vector<8x128xf32>
    %23 = arith.addf %20, %22 : vector<8x128xf32>
    %cst_17 = arith.constant 2.000000e-01 : f32
    %24 = vector.broadcast %cst_17 : f32 to vector<8x128xf32>
    %25 = arith.mulf %24, %23 : vector<8x128xf32>
    %26 = arith.maximumf %23, %25 : vector<8x128xf32>
    %27 = arith.truncf %26 : vector<8x128xf32> to vector<8x128xbf16>
    %c0_18 = arith.constant 0 : index
    %c0_19 = arith.constant 0 : index
    %28 = vector.load %arg7[%c0_18, %c0_19] : memref<128x256xbf16, #tpu.memory_space<vmem>>, vector<128x256xbf16>
    %cst_20 = arith.constant dense<0.000000e+00> : vector<8x256xf32>
    %29 = tpu.matmul %27, %28, %cst_20 {dimension_numbers = #tpu.dot_dimension_numbers<[1], [0], [0], [1], [0, 0, 1, 1], [], []>} : vector<8x128xbf16>, vector<128x256xbf16>, vector<8x256xf32> -> vector<8x256xf32>
    %c0_21 = arith.constant 0 : index
    %c0_22 = arith.constant 0 : index
    %30 = vector.load %arg8[%c0_21, %c0_22] : memref<1x256xf32, #tpu.memory_space<vmem>>, vector<1x256xf32>
    %31 = vector.broadcast %30 : vector<1x256xf32> to vector<8x256xf32>
    %32 = arith.addf %29, %31 : vector<8x256xf32>
    %cst_23 = arith.constant 2.000000e-01 : f32
    %33 = vector.broadcast %cst_23 : f32 to vector<8x256xf32>
    %34 = arith.mulf %33, %32 : vector<8x256xf32>
    %35 = arith.maximumf %32, %34 : vector<8x256xf32>
    %36 = arith.truncf %35 : vector<8x256xf32> to vector<8x256xbf16>
    %c0_24 = arith.constant 0 : index
    %c0_25 = arith.constant 0 : index
    %37 = vector.load %arg9[%c0_24, %c0_25] : memref<256x512xbf16, #tpu.memory_space<vmem>>, vector<256x512xbf16>
    %cst_26 = arith.constant dense<0.000000e+00> : vector<8x512xf32>
    %38 = tpu.matmul %36, %37, %cst_26 {dimension_numbers = #tpu.dot_dimension_numbers<[1], [0], [0], [1], [0, 0, 1, 1], [], []>} : vector<8x256xbf16>, vector<256x512xbf16>, vector<8x512xf32> -> vector<8x512xf32>
    %c0_27 = arith.constant 0 : index
    %c0_28 = arith.constant 0 : index
    %39 = vector.load %arg10[%c0_27, %c0_28] : memref<1x512xf32, #tpu.memory_space<vmem>>, vector<1x512xf32>
    %40 = vector.broadcast %39 : vector<1x512xf32> to vector<8x512xf32>
    %41 = arith.addf %38, %40 : vector<8x512xf32>
    %cst_29 = arith.constant 2.000000e-01 : f32
    %42 = vector.broadcast %cst_29 : f32 to vector<8x512xf32>
    %43 = arith.mulf %42, %41 : vector<8x512xf32>
    %44 = arith.maximumf %41, %43 : vector<8x512xf32>
    %45 = arith.truncf %44 : vector<8x512xf32> to vector<8x512xbf16>
    %c0_30 = arith.constant 0 : index
    %c0_31 = arith.constant 0 : index
    %46 = vector.load %arg11[%c0_30, %c0_31] : memref<512x768xbf16, #tpu.memory_space<vmem>>, vector<512x768xbf16>
    %cst_32 = arith.constant dense<0.000000e+00> : vector<8x768xf32>
    %47 = tpu.matmul %45, %46, %cst_32 {dimension_numbers = #tpu.dot_dimension_numbers<[1], [0], [0], [1], [0, 0, 1, 1], [], []>} : vector<8x512xbf16>, vector<512x768xbf16>, vector<8x768xf32> -> vector<8x768xf32>
    %c0_33 = arith.constant 0 : index
    %c0_34 = arith.constant 0 : index
    %48 = vector.load %arg12[%c0_33, %c0_34] : memref<1x768xf32, #tpu.memory_space<vmem>>, vector<1x768xf32>
    %49 = vector.broadcast %48 : vector<1x768xf32> to vector<8x768xf32>
    %50 = arith.addf %47, %49 : vector<8x768xf32>
    %cst_35 = arith.constant 0.000000e+00 : f32
    %51 = vector.broadcast %cst_35 : f32 to vector<8x768xf32>
    %52 = arith.subf %51, %50 : vector<8x768xf32>
    %53 = math.exp %52 : vector<8x768xf32>
    %cst_36 = arith.constant 1.000000e+00 : f32
    %54 = vector.broadcast %cst_36 : f32 to vector<8x768xf32>
    %55 = arith.addf %54, %53 : vector<8x768xf32>
    %56 = tpu.reciprocal %55 {approx = true} : vector<8x768xf32> -> vector<8x768xf32>
    %cst_37 = arith.constant 2.560000e+02 : f32
    %57 = vector.broadcast %cst_37 : f32 to vector<8x768xf32>
    %58 = arith.mulf %57, %56 : vector<8x768xf32>
    %c0_38 = arith.constant 0 : index
    %c0_39 = arith.constant 0 : index
    %59 = vector.load %arg13[%c0_38, %c0_39] : memref<8x768xf32, #tpu.memory_space<vmem>>, vector<8x768xf32>
    tpu.vector_store %arg13[%c0_38, %c0_39], %58 {strides = array<i32>} : memref<8x768xf32, #tpu.memory_space<vmem>>, vector<8x768xf32>,
    return
  }
}

</mosaic_0001>

<llo_original>
// kernel: net_forward.1
$region0: #{net_forward.1}
  #allocation0 [shape = 'u32[]', space=smem, size = 0x4, offset = 0x4, fixed_abs, tag = 'smem constant byte address 0x4 - core index']
  #allocation1 [shape = 'u32[144,128]{1,0:T(1,128)}', space=vmem, size = 0x12000, scoped, tag = 'internal scratch']
  %s0 = inlined_call_operand.vmem [shape: bf16[8,768], index: 0, kind: input, shape index: {}]
  %s1 = inlined_call_operand.hbm [shape: bf16[768,512], index: 1, kind: input, shape index: {}]
  %s2 = inlined_call_operand.vmem [shape: f32[1,512], index: 2, kind: input, shape index: {}]
  %s3 = inlined_call_operand.hbm [shape: bf16[512,256], index: 3, kind: input, shape index: {}]
  %s4 = inlined_call_operand.vmem [shape: f32[1,256], index: 4, kind: input, shape index: {}]
  %s5 = inlined_call_operand.vmem [shape: bf16[256,128], index: 5, kind: input, shape index: {}]
  %s6 = inlined_call_operand.vmem [shape: f32[1,128], index: 6, kind: input, shape index: {}]
  %s7 = inlined_call_operand.hbm [shape: bf16[128,256], index: 7, kind: input, shape index: {}]
  %s8 = inlined_call_operand.vmem [shape: f32[1,256], index: 8, kind: input, shape index: {}]
  %s9 = inlined_call_operand.hbm [shape: bf16[256,512], index: 9, kind: input, shape index: {}]
  %s10 = inlined_call_operand.vmem [shape: f32[1,512], index: 10, kind: input, shape index: {}]
  %s11 = inlined_call_operand.hbm [shape: bf16[512,768], index: 11, kind: input, shape index: {}]
  %s12 = inlined_call_operand.vmem [shape: f32[1,768], index: 12, kind: input, shape index: {}]
  %s13 = inlined_call_operand.vmem [shape: f32[8,768], index: 13, kind: output, shape index: {}]
  %s14 = sld [smem:[#allocation0]]
  $region82: #{net_forward.1} parent=0
    _
  %s16 = ssub.s32 1, %s14
  %s17 = scalar_select 0, %s16, %s14
  $region1: #{net_forward.1} parent=0
    #allocation2 [shape = 'u8[786432]{0}', space=vmem, size = 0xc0000, scoped, tag = 'input window, operand 1, single buffered']
    #allocation3 [shape = 's32[1]{0}', space=sflag, size = 0x4, scoped, tag = 'scoped memory for net_forward.1']
    #allocation4 [shape = 'u8[262144]{0}', space=vmem, size = 0x40000, scoped, tag = 'input window, operand 3, single buffered']
    #allocation5 [shape = 's32[1]{0}', space=sflag, size = 0x4, scoped, tag = 'scoped memory for net_forward.1']
    #allocation6 [shape = 'u8[65536]{0}', space=vmem, size = 0x10000, scoped, tag = 'input window, operand 7, single buffered']
    #allocation7 [shape = 'u8[262144]{0}', space=vmem, size = 0x40000, scoped, tag = 'input window, operand 9, single buffered']
    #allocation8 [shape = 's32[1]{0}', space=sflag, size = 0x4, scoped, tag = 'scoped memory for net_forward.1']
    #allocation9 [shape = 'u8[786432]{0}', space=vmem, size = 0xc0000, scoped, tag = 'input window, operand 11, single buffered']
    %18 = vsyncpa [#allocation3], 0
    %19 = vsyncpa [#allocation5], 0
    %20 = vsyncpa [#allocation8], 0
    // Predicated region
    $region2: #{net_forward.1} parent=1 // pred_check
      _
    $region3: #{net_forward.1} parent=1 // pred_check_branch
      %22 = sbr.rel (0) target = $region5
    $region4: #{net_forward.1} parent=1 // pred_region
      _
    $region5: #{net_forward.1} parent=1 // pred_fallthru
      _
    // Predicated region
    $region6: #{net_forward.1} parent=1 // pred_check
      _
    $region7: #{net_forward.1} parent=1 // pred_check_branch
      %24 = sbr.rel (0) target = $region9
    $region8: #{net_forward.1} parent=1 // pred_region
      %s26 = ssub.s32 24576, 24576
      %27 = vsyncadd [#allocation3], %s26
      %s28 = sshll.u32 [#allocation2], 4
      %s29 = int_to_ptr.vmem [resolvable:$true] %s28
      %34 = dma.hbm_to_vmem [thread:$0]  %s1, 24576, %s29, [#allocation3], 256, 256, 16
    $region9: #{net_forward.1} parent=1 // pred_fallthru
      _
    // Predicated region
    $region10: #{net_forward.1} parent=1 // pred_check
      _
    $region11: #{net_forward.1} parent=1 // pred_check_branch
      %36 = sbr.rel (0) target = $region13
    $region12: #{net_forward.1} parent=1 // pred_region
      _
    $region13: #{net_forward.1} parent=1 // pred_fallthru
      _
    // Predicated region
    $region14: #{net_forward.1} parent=1 // pred_check
      _
    $region15: #{net_forward.1} parent=1 // pred_check_branch
      %38 = sbr.rel (0) target = $region17
    $region16: #{net_forward.1} parent=1 // pred_region
      %s40 = ssub.s32 8192, 8192
      %41 = vsyncadd [#allocation5], %s40
      %s42 = sshll.u32 [#allocation4], 4
      %s43 = int_to_ptr.vmem [resolvable:$true] %s42
      %48 = dma.hbm_to_vmem [thread:$0]  %s3, 8192, %s43, [#allocation5], 128, 128, 8
    $region17: #{net_forward.1} parent=1 // pred_fallthru
      _
    // Predicated region
    $region18: #{net_forward.1} parent=1 // pred_check
      _
    $region19: #{net_forward.1} parent=1 // pred_check_branch
      %50 = sbr.rel (0) target = $region21
    $region20: #{net_forward.1} parent=1 // pred_region
      _
    $region21: #{net_forward.1} parent=1 // pred_fallthru
      _
    // Predicated region
    $region22: #{net_forward.1} parent=1 // pred_check
      _
    $region23: #{net_forward.1} parent=1 // pred_check_branch
      %52 = sbr.rel (0) target = $region25
    $region24: #{net_forward.1} parent=1 // pred_region
      _
    $region25: #{net_forward.1} parent=1 // pred_fallthru
      _
    // Predicated region
    $region26: #{net_forward.1} parent=1 // pred_check
      _
    $region27: #{net_forward.1} parent=1 // pred_check_branch
      %54 = sbr.rel (0) target = $region29
    $region28: #{net_forward.1} parent=1 // pred_region
      _
    $region29: #{net_forward.1} parent=1 // pred_fallthru
      _
    // Predicated region
    $region30: #{net_forward.1} parent=1 // pred_check
      _
    $region31: #{net_forward.1} parent=1 // pred_check_branch
      %56 = sbr.rel (0) target = $region33
    $region32: #{net_forward.1} parent=1 // pred_region
      %s58 = ssub.s32 2048, 2048
      %59 = vsyncadd [#allocation5], %s58
      %s60 = sshll.u32 [#allocation6], 4
      %s61 = int_to_ptr.vmem [resolvable:$true] %s60
      %66 = dma.hbm_to_vmem [thread:$0]  %s7, 2048, %s61, [#allocation5], 128, 128, 8
    $region33: #{net_forward.1} parent=1 // pred_fallthru
      _
    // Predicated region
    $region34: #{net_forward.1} parent=1 // pred_check
      _
    $region35: #{net_forward.1} parent=1 // pred_check_branch
      %68 = sbr.rel (0) target = $region37
    $region36: #{net_forward.1} parent=1 // pred_region
      _
    $region37: #{net_forward.1} parent=1 // pred_fallthru
      _
    // Predicated region
    $region38: #{net_forward.1} parent=1 // pred_check
      _
    $region39: #{net_forward.1} parent=1 // pred_check_branch
      %70 = sbr.rel (0) target = $region41
    $region40: #{net_forward.1} parent=1 // pred_region
      %s72 = ssub.s32 8192, 8192
      %73 = vsyncadd [#allocation8], %s72
      %s74 = sshll.u32 [#allocation7], 4
      %s75 = int_to_ptr.vmem [resolvable:$true] %s74
      %80 = dma.hbm_to_vmem [thread:$0]  %s9, 8192, %s75, [#allocation8], 256, 256, 16
    $region41: #{net_forward.1} parent=1 // pred_fallthru
      _
    // Predicated region
    $region42: #{net_forward.1} parent=1 // pred_check
      _
    $region43: #{net_forward.1} parent=1 // pred_check_branch
      %82 = sbr.rel (0) target = $region45
    $region44: #{net_forward.1} parent=1 // pred_region
      _
    $region45: #{net_forward.1} parent=1 // pred_fallthru
      _
    // Predicated region
    $region46: #{net_forward.1} parent=1 // pred_check
      _
    $region47: #{net_forward.1} parent=1 // pred_check_branch
      %84 = sbr.rel (0) target = $region49
    $region48: #{net_forward.1} parent=1 // pred_region
      %s86 = ssub.s32 24576, 24576
      %87 = vsyncadd [#allocation8], %s86
      %s88 = sshll.u32 [#allocation9], 4
      %s89 = int_to_ptr.vmem [resolvable:$true] %s88
      %94 = dma.hbm_to_vmem [thread:$0]  %s11, 24576, %s89, [#allocation8], 384, 384, 24
    $region49: #{net_forward.1} parent=1 // pred_fallthru
      _
    // Predicated region
    $region50: #{net_forward.1} parent=1 // pred_check
      _
    $region51: #{net_forward.1} parent=1 // pred_check_branch
      %96 = sbr.rel (0) target = $region53
    $region52: #{net_forward.1} parent=1 // pred_region
      _
    $region53: #{net_forward.1} parent=1 // pred_fallthru
      _
    // Predicated region
    $region54: #{net_forward.1} parent=1 // pred_check
      _
    $region55: #{net_forward.1} parent=1 // pred_check_branch
      %98 = sbr.rel (0) target = $region57
    $region56: #{net_forward.1} parent=1 // pred_region
      %99 = dma.done [#allocation3], 24576
    $region57: #{net_forward.1} parent=1 // pred_fallthru
      _
    // Predicated region
    $region58: #{net_forward.1} parent=1 // pred_check
      _
    $region59: #{net_forward.1} parent=1 // pred_check_branch
      %101 = sbr.rel (0) target = $region61
    $region60: #{net_forward.1} parent=1 // pred_region
      %102 = dma.done [#allocation5], 8192
    $region61: #{net_forward.1} parent=1 // pred_fallthru
      _
    // Predicated region
    $region62: #{net_forward.1} parent=1 // pred_check
      _
    $region63: #{net_forward.1} parent=1 // pred_check_branch
      %104 = sbr.rel (0) target = $region65
    $region64: #{net_forward.1} parent=1 // pred_region
      %105 = dma.done [#allocation5], 2048
    $region65: #{net_forward.1} parent=1 // pred_fallthru
      _
    // Predicated region
    $region66: #{net_forward.1} parent=1 // pred_check
      _
    $region67: #{net_forward.1} parent=1 // pred_check_branch
      %107 = sbr.rel (0) target = $region69
    $region68: #{net_forward.1} parent=1 // pred_region
      %108 = dma.done [#allocation8], 8192
    $region69: #{net_forward.1} parent=1 // pred_fallthru
      _
    // Predicated region
    $region70: #{net_forward.1} parent=1 // pred_check
      _
    $region71: #{net_forward.1} parent=1 // pred_check_branch
      %110 = sbr.rel (0) target = $region73
    $region72: #{net_forward.1} parent=1 // pred_region
      %111 = dma.done [#allocation8], 24576
    $region73: #{net_forward.1} parent=1 // pred_fallthru
      _
    %v113 = vld [vmem:[%s0] sm:$0xff]
    %v114 = vld [vmem:[%s0 + $0x8] sm:$0xff]
    %v115 = vld [vmem:[%s0 + $0x10] sm:$0xff]
    %v116 = vld [vmem:[#allocation2] sm:$0xff]
    %v117 = vld [vmem:[#allocation2 + $0x8] sm:$0xff]
    %v118 = vld [vmem:[#allocation2 + $0x10] sm:$0xff]
    %v119 = vld [vmem:[#allocation2 + $0x18] sm:$0xff]
    %v120 = vld [vmem:[#allocation2 + $0x20] sm:$0xff]
    %v121 = vld [vmem:[#allocation2 + $0x28] sm:$0xff]
    %v122 = vld [vmem:[#allocation2 + $0x30] sm:$0xff]
    %v123 = vld [vmem:[#allocation2 + $0x38] sm:$0xff]
    %v124 = vld [vmem:[#allocation2 + $0x40] sm:$0xff]
    %v125 = vld [vmem:[#allocation2 + $0x48] sm:$0xff]
    %v126 = vld [vmem:[#allocation2 + $0x50] sm:$0xff]
    %v127 = vld [vmem:[#allocation2 + $0x58] sm:$0xff]
    %v128 = vld [vmem:[#allocation2 + $0x60] sm:$0xff]
    %v129 = vld [vmem:[#allocation2 + $0x68] sm:$0xff]
    %v130 = vld [vmem:[#allocation2 + $0x70] sm:$0xff]
    %v131 = vld [vmem:[#allocation2 + $0x78] sm:$0xff]
    %v132 = vld [vmem:[#allocation2 + $0x80] sm:$0xff]
    %v133 = vld [vmem:[#allocation2 + $0x88] sm:$0xff]
    %v134 = vld [vmem:[#allocation2 + $0x90] sm:$0xff]
    %v135 = vld [vmem:[#allocation2 + $0x98] sm:$0xff]
    %v136 = vld [vmem:[#allocation2 + $0xa0] sm:$0xff]
    %v137 = vld [vmem:[#allocation2 + $0xa8] sm:$0xff]
    %v138 = vld [vmem:[#allocation2 + $0xb0] sm:$0xff]
    %v139 = vld [vmem:[#allocation2 + $0xb8] sm:$0xff]
    %v140 = vld [vmem:[#allocation2 + $0xc0] sm:$0xff]
    %v141 = vld [vmem:[#allocation2 + $0xc8] sm:$0xff]
    %v142 = vld [vmem:[#allocation2 + $0xd0] sm:$0xff]
    %v143 = vld [vmem:[#allocation2 + $0xd8] sm:$0xff]
    %v144 = vld [vmem:[#allocation2 + $0xe0] sm:$0xff]
    %v145 = vld [vmem:[#allocation2 + $0xe8] sm:$0xff]
    %v146 = vld [vmem:[#allocation2 + $0xf0] sm:$0xff]
    %v147 = vld [vmem:[#allocation2 + $0xf8] sm:$0xff]
    %v148 = vld [vmem:[#allocation2 + $0x100] sm:$0xff]
    %v149 = vld [vmem:[#allocation2 + $0x108] sm:$0xff]
    %v150 = vld [vmem:[#allocation2 + $0x110] sm:$0xff]
    %v151 = vld [vmem:[#allocation2 + $0x118] sm:$0xff]
    %v152 = vld [vmem:[#allocation2 + $0x120] sm:$0xff]
    %v153 = vld [vmem:[#allocation2 + $0x128] sm:$0xff]
    %v154 = vld [vmem:[#allocation2 + $0x130] sm:$0xff]
    %v155 = vld [vmem:[#allocation2 + $0x138] sm:$0xff]
    %v156 = vld [vmem:[#allocation2 + $0x140] sm:$0xff]
    %v157 = vld [vmem:[#allocation2 + $0x148] sm:$0xff]
    %v158 = vld [vmem:[#allocation2 + $0x150] sm:$0xff]
    %v159 = vld [vmem:[#allocation2 + $0x158] sm:$0xff]
    %v160 = vld [vmem:[#allocation2 + $0x160] sm:$0xff]
    %v161 = vld [vmem:[#allocation2 + $0x168] sm:$0xff]
    %v162 = vld [vmem:[#allocation2 + $0x170] sm:$0xff]
    %v163 = vld [vmem:[#allocation2 + $0x178] sm:$0xff]
    %v164 = vld [vmem:[#allocation2 + $0x180] sm:$0xff]
    %v165 = vld [vmem:[#allocation2 + $0x188] sm:$0xff]
    %v166 = vld [vmem:[#allocation2 + $0x190] sm:$0xff]
    %v167 = vld [vmem:[#allocation2 + $0x198] sm:$0xff]
    %v168 = vld [vmem:[#allocation2 + $0x1a0] sm:$0xff]
    %v169 = vld [vmem:[#allocation2 + $0x1a8] sm:$0xff]
    %v170 = vld [vmem:[#allocation2 + $0x1b0] sm:$0xff]
    %v171 = vld [vmem:[#allocation2 + $0x1b8] sm:$0xff]
    %v172 = vld [vmem:[#allocation2 + $0x1c0] sm:$0xff]
    %v173 = vld [vmem:[#allocation2 + $0x1c8] sm:$0xff]
    %v174 = vld [vmem:[#allocation2 + $0x1d0] sm:$0xff]
    %v175 = vld [vmem:[#allocation2 + $0x1d8] sm:$0xff]
    %v176 = vld [vmem:[#allocation2 + $0x1e0] sm:$0xff]
    %v177 = vld [vmem:[#allocation2 + $0x1e8] sm:$0xff]
    %v178 = vld [vmem:[#allocation2 + $0x1f0] sm:$0xff]
    %v179 = vld [vmem:[#allocation2 + $0x1f8] sm:$0xff]
    %v180 = vld [vmem:[#allocation2 + $0x200] sm:$0xff]
    %v181 = vld [vmem:[#allocation2 + $0x208] sm:$0xff]
    %v182 = vld [vmem:[#allocation2 + $0x210] sm:$0xff]
    %v183 = vld [vmem:[#allocation2 + $0x218] sm:$0xff]
    %v184 = vld [vmem:[#allocation2 + $0x220] sm:$0xff]
    %v185 = vld [vmem:[#allocation2 + $0x228] sm:$0xff]
    %v186 = vld [vmem:[#allocation2 + $0x230] sm:$0xff]
    %v187 = vld [vmem:[#allocation2 + $0x238] sm:$0xff]
    %v188 = vld [vmem:[#allocation2 + $0x240] sm:$0xff]
    %v189 = vld [vmem:[#allocation2 + $0x248] sm:$0xff]
    %v190 = vld [vmem:[#allocation2 + $0x250] sm:$0xff]
    %v191 = vld [vmem:[#allocation2 + $0x258] sm:$0xff]
    %v192 = vld [vmem:[#allocation2 + $0x260] sm:$0xff]
    %v193 = vld [vmem:[#allocation2 + $0x268] sm:$0xff]
    %v194 = vld [vmem:[#allocation2 + $0x270] sm:$0xff]
    %v195 = vld [vmem:[#allocation2 + $0x278] sm:$0xff]
    %v196 = vld [vmem:[#allocation2 + $0x280] sm:$0xff]
    %v197 = vld [vmem:[#allocation2 + $0x288] sm:$0xff]
    %v198 = vld [vmem:[#allocation2 + $0x290] sm:$0xff]
    %v199 = vld [vmem:[#allocation2 + $0x298] sm:$0xff]
    %v200 = vld [vmem:[#allocation2 + $0x2a0] sm:$0xff]
    %v201 = vld [vmem:[#allocation2 + $0x2a8] sm:$0xff]
    %v202 = vld [vmem:[#allocation2 + $0x2b0] sm:$0xff]
    %v203 = vld [vmem:[#allocation2 + $0x2b8] sm:$0xff]
    %v204 = vld [vmem:[#allocation2 + $0x2c0] sm:$0xff]
    %v205 = vld [vmem:[#allocation2 + $0x2c8] sm:$0xff]
    %v206 = vld [vmem:[#allocation2 + $0x2d0] sm:$0xff]
    %v207 = vld [vmem:[#allocation2 + $0x2d8] sm:$0xff]
    %v208 = vld [vmem:[#allocation2 + $0x2e0] sm:$0xff]
    %v209 = vld [vmem:[#allocation2 + $0x2e8] sm:$0xff]
    %v210 = vld [vmem:[#allocation2 + $0x2f0] sm:$0xff]
    %v211 = vld [vmem:[#allocation2 + $0x2f8] sm:$0xff]
    %v212 = vld [vmem:[#allocation2 + $0x300] sm:$0xff]
    %v213 = vld [vmem:[#allocation2 + $0x308] sm:$0xff]
    %v214 = vld [vmem:[#allocation2 + $0x310] sm:$0xff]
    %v215 = vld [vmem:[#allocation2 + $0x318] sm:$0xff]
    %v216 = vld [vmem:[#allocation2 + $0x320] sm:$0xff]
    %v217 = vld [vmem:[#allocation2 + $0x328] sm:$0xff]
    %v218 = vld [vmem:[#allocation2 + $0x330] sm:$0xff]
    %v219 = vld [vmem:[#allocation2 + $0x338] sm:$0xff]
    %v220 = vld [vmem:[#allocation2 + $0x340] sm:$0xff]
    %v221 = vld [vmem:[#allocation2 + $0x348] sm:$0xff]
    %v222 = vld [vmem:[#allocation2 + $0x350] sm:$0xff]
    %v223 = vld [vmem:[#allocation2 + $0x358] sm:$0xff]
    %v224 = vld [vmem:[#allocation2 + $0x360] sm:$0xff]
    %v225 = vld [vmem:[#allocation2 + $0x368] sm:$0xff]
    %v226 = vld [vmem:[#allocation2 + $0x370] sm:$0xff]
    %v227 = vld [vmem:[#allocation2 + $0x378] sm:$0xff]
    %v228 = vld [vmem:[#allocation2 + $0x380] sm:$0xff]
    %v229 = vld [vmem:[#allocation2 + $0x388] sm:$0xff]
    %v230 = vld [vmem:[#allocation2 + $0x390] sm:$0xff]
    %v231 = vld [vmem:[#allocation2 + $0x398] sm:$0xff]
    %v232 = vld [vmem:[#allocation2 + $0x3a0] sm:$0xff]
    %v233 = vld [vmem:[#allocation2 + $0x3a8] sm:$0xff]
    %v234 = vld [vmem:[#allocation2 + $0x3b0] sm:$0xff]
    %v235 = vld [vmem:[#allocation2 + $0x3b8] sm:$0xff]
    %v236 = vld [vmem:[#allocation2 + $0x3c0] sm:$0xff]
    %v237 = vld [vmem:[#allocation2 + $0x3c8] sm:$0xff]
    %v238 = vld [vmem:[#allocation2 + $0x3d0] sm:$0xff]
    %v239 = vld [vmem:[#allocation2 + $0x3d8] sm:$0xff]
    %v240 = vld [vmem:[#allocation2 + $0x3e0] sm:$0xff]
    %v241 = vld [vmem:[#allocation2 + $0x3e8] sm:$0xff]
    %v242 = vld [vmem:[#allocation2 + $0x3f0] sm:$0xff]
    %v243 = vld [vmem:[#allocation2 + $0x3f8] sm:$0xff]
    %v244 = vld [vmem:[#allocation2 + $0x400] sm:$0xff]
    %v245 = vld [vmem:[#allocation2 + $0x408] sm:$0xff]
    %v246 = vld [vmem:[#allocation2 + $0x410] sm:$0xff]
    %v247 = vld [vmem:[#allocation2 + $0x418] sm:$0xff]
    %v248 = vld [vmem:[#allocation2 + $0x420] sm:$0xff]
    %v249 = vld [vmem:[#allocation2 + $0x428] sm:$0xff]
    %v250 = vld [vmem:[#allocation2 + $0x430] sm:$0xff]
    %v251 = vld [vmem:[#allocation2 + $0x438] sm:$0xff]
    %v252 = vld [vmem:[#allocation2 + $0x440] sm:$0xff]
    %v253 = vld [vmem:[#allocation2 + $0x448] sm:$0xff]
    %v254 = vld [vmem:[#allocation2 + $0x450] sm:$0xff]
    %v255 = vld [vmem:[#allocation2 + $0x458] sm:$0xff]
    %v256 = vld [vmem:[#allocation2 + $0x460] sm:$0xff]
    %v257 = vld [vmem:[#allocation2 + $0x468] sm:$0xff]
    %v258 = vld [vmem:[#allocation2 + $0x470] sm:$0xff]
    %v259 = vld [vmem:[#allocation2 + $0x478] sm:$0xff]
    %v260 = vld [vmem:[#allocation2 + $0x480] sm:$0xff]
    %v261 = vld [vmem:[#allocation2 + $0x488] sm:$0xff]
    %v262 = vld [vmem:[#allocation2 + $0x490] sm:$0xff]
    %v263 = vld [vmem:[#allocation2 + $0x498] sm:$0xff]
    %v264 = vld [vmem:[#allocation2 + $0x4a0] sm:$0xff]
    %v265 = vld [vmem:[#allocation2 + $0x4a8] sm:$0xff]
    %v266 = vld [vmem:[#allocation2 + $0x4b0] sm:$0xff]
    %v267 = vld [vmem:[#allocation2 + $0x4b8] sm:$0xff]
    %v268 = vld [vmem:[#allocation2 + $0x4c0] sm:$0xff]
    %v269 = vld [vmem:[#allocation2 + $0x4c8] sm:$0xff]
    %v270 = vld [vmem:[#allocation2 + $0x4d0] sm:$0xff]
    %v271 = vld [vmem:[#allocation2 + $0x4d8] sm:$0xff]
    %v272 = vld [vmem:[#allocation2 + $0x4e0] sm:$0xff]
    %v273 = vld [vmem:[#allocation2 + $0x4e8] sm:$0xff]
    %v274 = vld [vmem:[#allocation2 + $0x4f0] sm:$0xff]
    %v275 = vld [vmem:[#allocation2 + $0x4f8] sm:$0xff]
    %v276 = vld [vmem:[#allocation2 + $0x500] sm:$0xff]
    %v277 = vld [vmem:[#allocation2 + $0x508] sm:$0xff]
    %v278 = vld [vmem:[#allocation2 + $0x510] sm:$0xff]
    %v279 = vld [vmem:[#allocation2 + $0x518] sm:$0xff]
    %v280 = vld [vmem:[#allocation2 + $0x520] sm:$0xff]
    %v281 = vld [vmem:[#allocation2 + $0x528] sm:$0xff]
    %v282 = vld [vmem:[#allocation2 + $0x530] sm:$0xff]
    %v283 = vld [vmem:[#allocation2 + $0x538] sm:$0xff]
    %v284 = vld [vmem:[#allocation2 + $0x540] sm:$0xff]
    %v285 = vld [vmem:[#allocation2 + $0x548] sm:$0xff]
    %v286 = vld [vmem:[#allocation2 + $0x550] sm:$0xff]
    %v287 = vld [vmem:[#allocation2 + $0x558] sm:$0xff]
    %v288 = vld [vmem:[#allocation2 + $0x560] sm:$0xff]
    %v289 = vld [vmem:[#allocation2 + $0x568] sm:$0xff]
    %v290 = vld [vmem:[#allocation2 + $0x570] sm:$0xff]
    %v291 = vld [vmem:[#allocation2 + $0x578] sm:$0xff]
    %v292 = vld [vmem:[#allocation2 + $0x580] sm:$0xff]
    %v293 = vld [vmem:[#allocation2 + $0x588] sm:$0xff]
    %v294 = vld [vmem:[#allocation2 + $0x590] sm:$0xff]
    %v295 = vld [vmem:[#allocation2 + $0x598] sm:$0xff]
    %v296 = vld [vmem:[#allocation2 + $0x5a0] sm:$0xff]
    %v297 = vld [vmem:[#allocation2 + $0x5a8] sm:$0xff]
    %v298 = vld [vmem:[#allocation2 + $0x5b0] sm:$0xff]
    %v299 = vld [vmem:[#allocation2 + $0x5b8] sm:$0xff]
    %v300 = vld [vmem:[#allocation2 + $0x5c0] sm:$0xff]
    %v301 = vld [vmem:[#allocation2 + $0x5c8] sm:$0xff]
    %v302 = vld [vmem:[#allocation2 + $0x5d0] sm:$0xff]
    %v303 = vld [vmem:[#allocation2 + $0x5d8] sm:$0xff]
    %v304 = vld [vmem:[#allocation2 + $0x5e0] sm:$0xff]
    %v305 = vld [vmem:[#allocation2 + $0x5e8] sm:$0xff]
    %v306 = vld [vmem:[#allocation2 + $0x5f0] sm:$0xff]
    %v307 = vld [vmem:[#allocation2 + $0x5f8] sm:$0xff]
    %v308 = vld [vmem:[%s2] sm:$0xf]
    %v310 = vlaneseq
    %v311 = vshrl.u32 %v310, 7
    %v312 = vsub.s32 0, %v311
    %v313 = vrot.slane %v308, %v312
    %v314 = vlaneseq
    %v315 = vshrl.u32 %v314, 7
    %v316 = vsub.s32 1, %v315
    %v317 = vrot.slane %v308, %v316
    %v318 = vlaneseq
    %v319 = vshrl.u32 %v318, 7
    %v320 = vsub.s32 2, %v319
    %v321 = vrot.slane %v308, %v320
    %v322 = vlaneseq
    %v323 = vshrl.u32 %v322, 7
    %v324 = vsub.s32 3, %v323
    %v325 = vrot.slane %v308, %v324
    %v333 = vunpack.c.l.b16 %v113
    %v334 = vunpack.c.h.b16 %v113
    %v335 = vunpack.c.l.b16 %v114
    %v336 = vunpack.c.h.b16 %v114
    %v337 = vunpack.c.l.b16 %v115
    %v338 = vunpack.c.h.b16 %v115
    %v339 = vpack.c.b16 %v333, %v333
    %v340 = vpack.c.b16 %v334, %v334
    %v341 = vpack.c.b16 %v335, %v335
    %v342 = vpack.c.b16 %v336, %v336
    %v343 = vpack.c.b16 %v337, %v337
    %v344 = vpack.c.b16 %v338, %v338
    %v543 = vunpack.c.l.b16 %v116
    %v544 = vunpack.c.h.b16 %v116
    %v545 = vunpack.c.l.b16 %v117
    %v546 = vunpack.c.h.b16 %v117
    %v547 = vunpack.c.l.b16 %v118
    %v548 = vunpack.c.h.b16 %v118
    %v549 = vunpack.c.l.b16 %v119
    %v550 = vunpack.c.h.b16 %v119
    %v551 = vunpack.c.l.b16 %v120
    %v552 = vunpack.c.h.b16 %v120
    %v553 = vunpack.c.l.b16 %v121
    %v554 = vunpack.c.h.b16 %v121
    %v555 = vunpack.c.l.b16 %v122
    %v556 = vunpack.c.h.b16 %v122
    %v557 = vunpack.c.l.b16 %v123
    %v558 = vunpack.c.h.b16 %v123
    %v559 = vunpack.c.l.b16 %v124
    %v560 = vunpack.c.h.b16 %v124
    %v561 = vunpack.c.l.b16 %v125
    %v562 = vunpack.c.h.b16 %v125
    %v563 = vunpack.c.l.b16 %v126
    %v564 = vunpack.c.h.b16 %v126
    %v565 = vunpack.c.l.b16 %v127
    %v566 = vunpack.c.h.b16 %v127
    %v567 = vunpack.c.l.b16 %v128
    %v568 = vunpack.c.h.b16 %v128
    %v569 = vunpack.c.l.b16 %v129
    %v570 = vunpack.c.h.b16 %v129
    %v571 = vunpack.c.l.b16 %v130
    %v572 = vunpack.c.h.b16 %v130
    %v573 = vunpack.c.l.b16 %v131
    %v574 = vunpack.c.h.b16 %v131
    %v575 = vunpack.c.l.b16 %v132
    %v576 = vunpack.c.h.b16 %v132
    %v577 = vunpack.c.l.b16 %v133
    %v578 = vunpack.c.h.b16 %v133
    %v579 = vunpack.c.l.b16 %v134
    %v580 = vunpack.c.h.b16 %v134
    %v581 = vunpack.c.l.b16 %v135
    %v582 = vunpack.c.h.b16 %v135
    %v583 = vunpack.c.l.b16 %v136
    %v584 = vunpack.c.h.b16 %v136
    %v585 = vunpack.c.l.b16 %v137
    %v586 = vunpack.c.h.b16 %v137
    %v587 = vunpack.c.l.b16 %v138
    %v588 = vunpack.c.h.b16 %v138
    %v589 = vunpack.c.l.b16 %v139
    %v590 = vunpack.c.h.b16 %v139
    %v591 = vunpack.c.l.b16 %v140
    %v592 = vunpack.c.h.b16 %v140
    %v593 = vunpack.c.l.b16 %v141
    %v594 = vunpack.c.h.b16 %v141
    %v595 = vunpack.c.l.b16 %v142
    %v596 = vunpack.c.h.b16 %v142
    %v597 = vunpack.c.l.b16 %v143
    %v598 = vunpack.c.h.b16 %v143
    %v599 = vunpack.c.l.b16 %v144
    %v600 = vunpack.c.h.b16 %v144
    %v601 = vunpack.c.l.b16 %v145
    %v602 = vunpack.c.h.b16 %v145
    %v603 = vunpack.c.l.b16 %v146
    %v604 = vunpack.c.h.b16 %v146
    %v605 = vunpack.c.l.b16 %v147
    %v606 = vunpack.c.h.b16 %v147
    %v607 = vunpack.c.l.b16 %v148
    %v608 = vunpack.c.h.b16 %v148
    %v609 = vunpack.c.l.b16 %v149
    %v610 = vunpack.c.h.b16 %v149
    %v611 = vunpack.c.l.b16 %v150
    %v612 = vunpack.c.h.b16 %v150
    %v613 = vunpack.c.l.b16 %v151
    %v614 = vunpack.c.h.b16 %v151
    %v615 = vunpack.c.l.b16 %v152
    %v616 = vunpack.c.h.b16 %v152
    %v617 = vunpack.c.l.b16 %v153
    %v618 = vunpack.c.h.b16 %v153
    %v619 = vunpack.c.l.b16 %v154
    %v620 = vunpack.c.h.b16 %v154
    %v621 = vunpack.c.l.b16 %v155
    %v622 = vunpack.c.h.b16 %v155
    %v623 = vunpack.c.l.b16 %v156
    %v624 = vunpack.c.h.b16 %v156
    %v625 = vunpack.c.l.b16 %v157
    %v626 = vunpack.c.h.b16 %v157
    %v627 = vunpack.c.l.b16 %v158
    %v628 = vunpack.c.h.b16 %v158
    %v629 = vunpack.c.l.b16 %v159
    %v630 = vunpack.c.h.b16 %v159
    %v631 = vunpack.c.l.b16 %v160
    %v632 = vunpack.c.h.b16 %v160
    %v633 = vunpack.c.l.b16 %v161
    %v634 = vunpack.c.h.b16 %v161
    %v635 = vunpack.c.l.b16 %v162
    %v636 = vunpack.c.h.b16 %v162
    %v637 = vunpack.c.l.b16 %v163
    %v638 = vunpack.c.h.b16 %v163
    %v639 = vunpack.c.l.b16 %v164
    %v640 = vunpack.c.h.b16 %v164
    %v641 = vunpack.c.l.b16 %v165
    %v642 = vunpack.c.h.b16 %v165
    %v643 = vunpack.c.l.b16 %v166
    %v644 = vunpack.c.h.b16 %v166
    %v645 = vunpack.c.l.b16 %v167
    %v646 = vunpack.c.h.b16 %v167
    %v647 = vunpack.c.l.b16 %v168
    %v648 = vunpack.c.h.b16 %v168
    %v649 = vunpack.c.l.b16 %v169
    %v650 = vunpack.c.h.b16 %v169
    %v651 = vunpack.c.l.b16 %v170
    %v652 = vunpack.c.h.b16 %v170
    %v653 = vunpack.c.l.b16 %v171
    %v654 = vunpack.c.h.b16 %v171
    %v655 = vunpack.c.l.b16 %v172
    %v656 = vunpack.c.h.b16 %v172
    %v657 = vunpack.c.l.b16 %v173
    %v658 = vunpack.c.h.b16 %v173
    %v659 = vunpack.c.l.b16 %v174
    %v660 = vunpack.c.h.b16 %v174
    %v661 = vunpack.c.l.b16 %v175
    %v662 = vunpack.c.h.b16 %v175
    %v663 = vunpack.c.l.b16 %v176
    %v664 = vunpack.c.h.b16 %v176
    %v665 = vunpack.c.l.b16 %v177
    %v666 = vunpack.c.h.b16 %v177
    %v667 = vunpack.c.l.b16 %v178
    %v668 = vunpack.c.h.b16 %v178
    %v669 = vunpack.c.l.b16 %v179
    %v670 = vunpack.c.h.b16 %v179
    %v671 = vunpack.c.l.b16 %v180
    %v672 = vunpack.c.h.b16 %v180
    %v673 = vunpack.c.l.b16 %v181
    %v674 = vunpack.c.h.b16 %v181
    %v675 = vunpack.c.l.b16 %v182
    %v676 = vunpack.c.h.b16 %v182
    %v677 = vunpack.c.l.b16 %v183
    %v678 = vunpack.c.h.b16 %v183
    %v679 = vunpack.c.l.b16 %v184
    %v680 = vunpack.c.h.b16 %v184
    %v681 = vunpack.c.l.b16 %v185
    %v682 = vunpack.c.h.b16 %v185
    %v683 = vunpack.c.l.b16 %v186
    %v684 = vunpack.c.h.b16 %v186
    %v685 = vunpack.c.l.b16 %v187
    %v686 = vunpack.c.h.b16 %v187
    %v687 = vunpack.c.l.b16 %v188
    %v688 = vunpack.c.h.b16 %v188
    %v689 = vunpack.c.l.b16 %v189
    %v690 = vunpack.c.h.b16 %v189
    %v691 = vunpack.c.l.b16 %v190
    %v692 = vunpack.c.h.b16 %v190
    %v693 = vunpack.c.l.b16 %v191
    %v694 = vunpack.c.h.b16 %v191
    %v695 = vunpack.c.l.b16 %v192
    %v696 = vunpack.c.h.b16 %v192
    %v697 = vunpack.c.l.b16 %v193
    %v698 = vunpack.c.h.b16 %v193
    %v699 = vunpack.c.l.b16 %v194
    %v700 = vunpack.c.h.b16 %v194
    %v701 = vunpack.c.l.b16 %v195
    %v702 = vunpack.c.h.b16 %v195
    %v703 = vunpack.c.l.b16 %v196
    %v704 = vunpack.c.h.b16 %v196
    %v705 = vunpack.c.l.b16 %v197
    %v706 = vunpack.c.h.b16 %v197
    %v707 = vunpack.c.l.b16 %v198
    %v708 = vunpack.c.h.b16 %v198
    %v709 = vunpack.c.l.b16 %v199
    %v710 = vunpack.c.h.b16 %v199
    %v711 = vunpack.c.l.b16 %v200
    %v712 = vunpack.c.h.b16 %v200
    %v713 = vunpack.c.l.b16 %v201
    %v714 = vunpack.c.h.b16 %v201
    %v715 = vunpack.c.l.b16 %v202
    %v716 = vunpack.c.h.b16 %v202
    %v717 = vunpack.c.l.b16 %v203
    %v718 = vunpack.c.h.b16 %v203
    %v719 = vunpack.c.l.b16 %v204
    %v720 = vunpack.c.h.b16 %v204
    %v721 = vunpack.c.l.b16 %v205
    %v722 = vunpack.c.h.b16 %v205
    %v723 = vunpack.c.l.b16 %v206
    %v724 = vunpack.c.h.b16 %v206
    %v725 = vunpack.c.l.b16 %v207
    %v726 = vunpack.c.h.b16 %v207
    %v727 = vunpack.c.l.b16 %v208
    %v728 = vunpack.c.h.b16 %v208
    %v729 = vunpack.c.l.b16 %v209
    %v730 = vunpack.c.h.b16 %v209
    %v731 = vunpack.c.l.b16 %v210
    %v732 = vunpack.c.h.b16 %v210
    %v733 = vunpack.c.l.b16 %v211
    %v734 = vunpack.c.h.b16 %v211
    %v735 = vunpack.c.l.b16 %v212
    %v736 = vunpack.c.h.b16 %v212
    %v737 = vunpack.c.l.b16 %v213
    %v738 = vunpack.c.h.b16 %v213
    %v739 = vunpack.c.l.b16 %v214
    %v740 = vunpack.c.h.b16 %v214
    %v741 = vunpack.c.l.b16 %v215
    %v742 = vunpack.c.h.b16 %v215
    %v743 = vunpack.c.l.b16 %v216
    %v744 = vunpack.c.h.b16 %v216
    %v745 = vunpack.c.l.b16 %v217
    %v746 = vunpack.c.h.b16 %v217
    %v747 = vunpack.c.l.b16 %v218
    %v748 = vunpack.c.h.b16 %v218
    %v749 = vunpack.c.l.b16 %v219
    %v750 = vunpack.c.h.b16 %v219
    %v751 = vunpack.c.l.b16 %v220
    %v752 = vunpack.c.h.b16 %v220
    %v753 = vunpack.c.l.b16 %v221
    %v754 = vunpack.c.h.b16 %v221
    %v755 = vunpack.c.l.b16 %v222
    %v756 = vunpack.c.h.b16 %v222
    %v757 = vunpack.c.l.b16 %v223
    %v758 = vunpack.c.h.b16 %v223
    %v759 = vunpack.c.l.b16 %v224
    %v760 = vunpack.c.h.b16 %v224
    %v761 = vunpack.c.l.b16 %v225
    %v762 = vunpack.c.h.b16 %v225
    %v763 = vunpack.c.l.b16 %v226
    %v764 = vunpack.c.h.b16 %v226
    %v765 = vunpack.c.l.b16 %v227
    %v766 = vunpack.c.h.b16 %v227
    %v767 = vunpack.c.l.b16 %v228
    %v768 = vunpack.c.h.b16 %v228
    %v769 = vunpack.c.l.b16 %v229
    %v770 = vunpack.c.h.b16 %v229
    %v771 = vunpack.c.l.b16 %v230
    %v772 = vunpack.c.h.b16 %v230
    %v773 = vunpack.c.l.b16 %v231
    %v774 = vunpack.c.h.b16 %v231
    %v775 = vunpack.c.l.b16 %v232
    %v776 = vunpack.c.h.b16 %v232
    %v777 = vunpack.c.l.b16 %v233
    %v778 = vunpack.c.h.b16 %v233
    %v779 = vunpack.c.l.b16 %v234
    %v780 = vunpack.c.h.b16 %v234
    %v781 = vunpack.c.l.b16 %v235
    %v782 = vunpack.c.h.b16 %v235
    %v783 = vunpack.c.l.b16 %v236
    %v784 = vunpack.c.h.b16 %v236
    %v785 = vunpack.c.l.b16 %v237
    %v786 = vunpack.c.h.b16 %v237
    %v787 = vunpack.c.l.b16 %v238
    %v788 = vunpack.c.h.b16 %v238
    %v789 = vunpack.c.l.b16 %v239
    %v790 = vunpack.c.h.b16 %v239
    %v791 = vunpack.c.l.b16 %v240
    %v792 = vunpack.c.h.b16 %v240
    %v793 = vunpack.c.l.b16 %v241
    %v794 = vunpack.c.h.b16 %v241
    %v795 = vunpack.c.l.b16 %v242
    %v796 = vunpack.c.h.b16 %v242
    %v797 = vunpack.c.l.b16 %v243
    %v798 = vunpack.c.h.b16 %v243
    %v799 = vunpack.c.l.b16 %v244
    %v800 = vunpack.c.h.b16 %v244
    %v801 = vunpack.c.l.b16 %v245
    %v802 = vunpack.c.h.b16 %v245
    %v803 = vunpack.c.l.b16 %v246
    %v804 = vunpack.c.h.b16 %v246
    %v805 = vunpack.c.l.b16 %v247
    %v806 = vunpack.c.h.b16 %v247
    %v807 = vunpack.c.l.b16 %v248
    %v808 = vunpack.c.h.b16 %v248
    %v809 = vunpack.c.l.b16 %v249
    %v810 = vunpack.c.h.b16 %v249
    %v811 = vunpack.c.l.b16 %v250
    %v812 = vunpack.c.h.b16 %v250
    %v813 = vunpack.c.l.b16 %v251
    %v814 = vunpack.c.h.b16 %v251
    %v815 = vunpack.c.l.b16 %v252
    %v816 = vunpack.c.h.b16 %v252
    %v817 = vunpack.c.l.b16 %v253
    %v818 = vunpack.c.h.b16 %v253
    %v819 = vunpack.c.l.b16 %v254
    %v820 = vunpack.c.h.b16 %v254
    %v821 = vunpack.c.l.b16 %v255
    %v822 = vunpack.c.h.b16 %v255
    %v823 = vunpack.c.l.b16 %v256
    %v824 = vunpack.c.h.b16 %v256
    %v825 = vunpack.c.l.b16 %v257
    %v826 = vunpack.c.h.b16 %v257
    %v827 = vunpack.c.l.b16 %v258
    %v828 = vunpack.c.h.b16 %v258
    %v829 = vunpack.c.l.b16 %v259
    %v830 = vunpack.c.h.b16 %v259
    %v831 = vunpack.c.l.b16 %v260
    %v832 = vunpack.c.h.b16 %v260
    %v833 = vunpack.c.l.b16 %v261
    %v834 = vunpack.c.h.b16 %v261
    %v835 = vunpack.c.l.b16 %v262
    %v836 = vunpack.c.h.b16 %v262
    %v837 = vunpack.c.l.b16 %v263
    %v838 = vunpack.c.h.b16 %v263
    %v839 = vunpack.c.l.b16 %v264
    %v840 = vunpack.c.h.b16 %v264
    %v841 = vunpack.c.l.b16 %v265
    %v842 = vunpack.c.h.b16 %v265
    %v843 = vunpack.c.l.b16 %v266
    %v844 = vunpack.c.h.b16 %v266
    %v845 = vunpack.c.l.b16 %v267
    %v846 = vunpack.c.h.b16 %v267
    %v847 = vunpack.c.l.b16 %v268
    %v848 = vunpack.c.h.b16 %v268
    %v849 = vunpack.c.l.b16 %v269
    %v850 = vunpack.c.h.b16 %v269
    %v851 = vunpack.c.l.b16 %v270
    %v852 = vunpack.c.h.b16 %v270
    %v853 = vunpack.c.l.b16 %v271
    %v854 = vunpack.c.h.b16 %v271
    %v855 = vunpack.c.l.b16 %v272
    %v856 = vunpack.c.h.b16 %v272
    %v857 = vunpack.c.l.b16 %v273
    %v858 = vunpack.c.h.b16 %v273
    %v859 = vunpack.c.l.b16 %v274
    %v860 = vunpack.c.h.b16 %v274
    %v861 = vunpack.c.l.b16 %v275
    %v862 = vunpack.c.h.b16 %v275
    %v863 = vunpack.c.l.b16 %v276
    %v864 = vunpack.c.h.b16 %v276
    %v865 = vunpack.c.l.b16 %v277
    %v866 = vunpack.c.h.b16 %v277
    %v867 = vunpack.c.l.b16 %v278
    %v868 = vunpack.c.h.b16 %v278
    %v869 = vunpack.c.l.b16 %v279
    %v870 = vunpack.c.h.b16 %v279
    %v871 = vunpack.c.l.b16 %v280
    %v872 = vunpack.c.h.b16 %v280
    %v873 = vunpack.c.l.b16 %v281
    %v874 = vunpack.c.h.b16 %v281
    %v875 = vunpack.c.l.b16 %v282
    %v876 = vunpack.c.h.b16 %v282
    %v877 = vunpack.c.l.b16 %v283
    %v878 = vunpack.c.h.b16 %v283
    %v879 = vunpack.c.l.b16 %v284
    %v880 = vunpack.c.h.b16 %v284
    %v881 = vunpack.c.l.b16 %v285
    %v882 = vunpack.c.h.b16 %v285
    %v883 = vunpack.c.l.b16 %v286
    %v884 = vunpack.c.h.b16 %v286
    %v885 = vunpack.c.l.b16 %v287
    %v886 = vunpack.c.h.b16 %v287
    %v887 = vunpack.c.l.b16 %v288
    %v888 = vunpack.c.h.b16 %v288
    %v889 = vunpack.c.l.b16 %v289
    %v890 = vunpack.c.h.b16 %v289
    %v891 = vunpack.c.l.b16 %v290
    %v892 = vunpack.c.h.b16 %v290
    %v893 = vunpack.c.l.b16 %v291
    %v894 = vunpack.c.h.b16 %v291
    %v895 = vunpack.c.l.b16 %v292
    %v896 = vunpack.c.h.b16 %v292
    %v897 = vunpack.c.l.b16 %v293
    %v898 = vunpack.c.h.b16 %v293
    %v899 = vunpack.c.l.b16 %v294
    %v900 = vunpack.c.h.b16 %v294
    %v901 = vunpack.c.l.b16 %v295
    %v902 = vunpack.c.h.b16 %v295
    %v903 = vunpack.c.l.b16 %v296
    %v904 = vunpack.c.h.b16 %v296
    %v905 = vunpack.c.l.b16 %v297
    %v906 = vunpack.c.h.b16 %v297
    %v907 = vunpack.c.l.b16 %v298
    %v908 = vunpack.c.h.b16 %v298
    %v909 = vunpack.c.l.b16 %v299
    %v910 = vunpack.c.h.b16 %v299
    %v911 = vunpack.c.l.b16 %v300
    %v912 = vunpack.c.h.b16 %v300
    %v913 = vunpack.c.l.b16 %v301
    %v914 = vunpack.c.h.b16 %v301
    %v915 = vunpack.c.l.b16 %v302
    %v916 = vunpack.c.h.b16 %v302
    %v917 = vunpack.c.l.b16 %v303
    %v918 = vunpack.c.h.b16 %v303
    %v919 = vunpack.c.l.b16 %v304
    %v920 = vunpack.c.h.b16 %v304
    %v921 = vunpack.c.l.b16 %v305
    %v922 = vunpack.c.h.b16 %v305
    %v923 = vunpack.c.l.b16 %v306
    %v924 = vunpack.c.h.b16 %v306
    %v925 = vunpack.c.l.b16 %v307
    %v926 = vunpack.c.h.b16 %v307
    %v927 = vpack.c.b16 %v547, %v543
    %v928 = vpack.c.b16 %v548, %v544
    %v929 = vpack.c.b16 %v549, %v545
    %v930 = vpack.c.b16 %v550, %v546
    %v931 = vpack.c.b16 %v555, %v551
    %v932 = vpack.c.b16 %v556, %v552
    %v933 = vpack.c.b16 %v557, %v553
    %v934 = vpack.c.b16 %v558, %v554
    %v935 = vpack.c.b16 %v563, %v559
    %v936 = vpack.c.b16 %v564, %v560
    %v937 = vpack.c.b16 %v565, %v561
    %v938 = vpack.c.b16 %v566, %v562
    %v939 = vpack.c.b16 %v571, %v567
    %v940 = vpack.c.b16 %v572, %v568
    %v941 = vpack.c.b16 %v573, %v569
    %v942 = vpack.c.b16 %v574, %v570
    %v943 = vpack.c.b16 %v579, %v575
    %v944 = vpack.c.b16 %v580, %v576
    %v945 = vpack.c.b16 %v581, %v577
    %v946 = vpack.c.b16 %v582, %v578
    %v947 = vpack.c.b16 %v587, %v583
    %v948 = vpack.c.b16 %v588, %v584
    %v949 = vpack.c.b16 %v589, %v585
    %v950 = vpack.c.b16 %v590, %v586
    %v951 = vpack.c.b16 %v595, %v591
    %v952 = vpack.c.b16 %v596, %v592
    %v953 = vpack.c.b16 %v597, %v593
    %v954 = vpack.c.b16 %v598, %v594
    %v955 = vpack.c.b16 %v603, %v599
    %v956 = vpack.c.b16 %v604, %v600
    %v957 = vpack.c.b16 %v605, %v601
    %v958 = vpack.c.b16 %v606, %v602
    %v959 = vpack.c.b16 %v611, %v607
    %v960 = vpack.c.b16 %v612, %v608
    %v961 = vpack.c.b16 %v613, %v609
    %v962 = vpack.c.b16 %v614, %v610
    %v963 = vpack.c.b16 %v619, %v615
    %v964 = vpack.c.b16 %v620, %v616
    %v965 = vpack.c.b16 %v621, %v617
    %v966 = vpack.c.b16 %v622, %v618
    %v967 = vpack.c.b16 %v627, %v623
    %v968 = vpack.c.b16 %v628, %v624
    %v969 = vpack.c.b16 %v629, %v625
    %v970 = vpack.c.b16 %v630, %v626
    %v971 = vpack.c.b16 %v635, %v631
    %v972 = vpack.c.b16 %v636, %v632
    %v973 = vpack.c.b16 %v637, %v633
    %v974 = vpack.c.b16 %v638, %v634
    %v975 = vpack.c.b16 %v643, %v639
    %v976 = vpack.c.b16 %v644, %v640
    %v977 = vpack.c.b16 %v645, %v641
    %v978 = vpack.c.b16 %v646, %v642
    %v979 = vpack.c.b16 %v651, %v647
    %v980 = vpack.c.b16 %v652, %v648
    %v981 = vpack.c.b16 %v653, %v649
    %v982 = vpack.c.b16 %v654, %v650
    %v983 = vpack.c.b16 %v659, %v655
    %v984 = vpack.c.b16 %v660, %v656
    %v985 = vpack.c.b16 %v661, %v657
    %v986 = vpack.c.b16 %v662, %v658
    %v987 = vpack.c.b16 %v667, %v663
    %v988 = vpack.c.b16 %v668, %v664
    %v989 = vpack.c.b16 %v669, %v665
    %v990 = vpack.c.b16 %v670, %v666
    %v991 = vpack.c.b16 %v675, %v671
    %v992 = vpack.c.b16 %v676, %v672
    %v993 = vpack.c.b16 %v677, %v673
    %v994 = vpack.c.b16 %v678, %v674
    %v995 = vpack.c.b16 %v683, %v679
    %v996 = vpack.c.b16 %v684, %v680
    %v997 = vpack.c.b16 %v685, %v681
    %v998 = vpack.c.b16 %v686, %v682
    %v999 = vpack.c.b16 %v691, %v687
    %v1000 = vpack.c.b16 %v692, %v688
    %v1001 = vpack.c.b16 %v693, %v689
    %v1002 = vpack.c.b16 %v694, %v690
    %v1003 = vpack.c.b16 %v699, %v695
    %v1004 = vpack.c.b16 %v700, %v696
    %v1005 = vpack.c.b16 %v701, %v697
    %v1006 = vpack.c.b16 %v702, %v698
    %v1007 = vpack.c.b16 %v707, %v703
    %v1008 = vpack.c.b16 %v708, %v704
    %v1009 = vpack.c.b16 %v709, %v705
    %v1010 = vpack.c.b16 %v710, %v706
    %v1011 = vpack.c.b16 %v715, %v711
    %v1012 = vpack.c.b16 %v716, %v712
    %v1013 = vpack.c.b16 %v717, %v713
    %v1014 = vpack.c.b16 %v718, %v714
    %v1015 = vpack.c.b16 %v723, %v719
    %v1016 = vpack.c.b16 %v724, %v720
    %v1017 = vpack.c.b16 %v725, %v721
    %v1018 = vpack.c.b16 %v726, %v722
    %v1019 = vpack.c.b16 %v731, %v727
    %v1020 = vpack.c.b16 %v732, %v728
    %v1021 = vpack.c.b16 %v733, %v729
    %v1022 = vpack.c.b16 %v734, %v730
    %v1023 = vpack.c.b16 %v739, %v735
    %v1024 = vpack.c.b16 %v740, %v736
    %v1025 = vpack.c.b16 %v741, %v737
    %v1026 = vpack.c.b16 %v742, %v738
    %v1027 = vpack.c.b16 %v747, %v743
    %v1028 = vpack.c.b16 %v748, %v744
    %v1029 = vpack.c.b16 %v749, %v745
    %v1030 = vpack.c.b16 %v750, %v746
    %v1031 = vpack.c.b16 %v755, %v751
    %v1032 = vpack.c.b16 %v756, %v752
    %v1033 = vpack.c.b16 %v757, %v753
    %v1034 = vpack.c.b16 %v758, %v754
    %v1035 = vpack.c.b16 %v763, %v759
    %v1036 = vpack.c.b16 %v764, %v760
    %v1037 = vpack.c.b16 %v765, %v761
    %v1038 = vpack.c.b16 %v766, %v762
    %v1039 = vpack.c.b16 %v771, %v767
    %v1040 = vpack.c.b16 %v772, %v768
    %v1041 = vpack.c.b16 %v773, %v769
    %v1042 = vpack.c.b16 %v774, %v770
    %v1043 = vpack.c.b16 %v779, %v775
    %v1044 = vpack.c.b16 %v780, %v776
    %v1045 = vpack.c.b16 %v781, %v777
    %v1046 = vpack.c.b16 %v782, %v778
    %v1047 = vpack.c.b16 %v787, %v783
    %v1048 = vpack.c.b16 %v788, %v784
    %v1049 = vpack.c.b16 %v789, %v785
    %v1050 = vpack.c.b16 %v790, %v786
    %v1051 = vpack.c.b16 %v795, %v791
    %v1052 = vpack.c.b16 %v796, %v792
    %v1053 = vpack.c.b16 %v797, %v793
    %v1054 = vpack.c.b16 %v798, %v794
    %v1055 = vpack.c.b16 %v803, %v799
    %v1056 = vpack.c.b16 %v804, %v800
    %v1057 = vpack.c.b16 %v805, %v801
    %v1058 = vpack.c.b16 %v806, %v802
    %v1059 = vpack.c.b16 %v811, %v807
    %v1060 = vpack.c.b16 %v812, %v808
    %v1061 = vpack.c.b16 %v813, %v809
    %v1062 = vpack.c.b16 %v814, %v810
    %v1063 = vpack.c.b16 %v819, %v815
    %v1064 = vpack.c.b16 %v820, %v816
    %v1065 = vpack.c.b16 %v821, %v817
    %v1066 = vpack.c.b16 %v822, %v818
    %v1067 = vpack.c.b16 %v827, %v823
    %v1068 = vpack.c.b16 %v828, %v824
    %v1069 = vpack.c.b16 %v829, %v825
    %v1070 = vpack.c.b16 %v830, %v826
    %v1071 = vpack.c.b16 %v835, %v831
    %v1072 = vpack.c.b16 %v836, %v832
    %v1073 = vpack.c.b16 %v837, %v833
    %v1074 = vpack.c.b16 %v838, %v834
    %v1075 = vpack.c.b16 %v843, %v839
    %v1076 = vpack.c.b16 %v844, %v840
    %v1077 = vpack.c.b16 %v845, %v841
    %v1078 = vpack.c.b16 %v846, %v842
    %v1079 = vpack.c.b16 %v851, %v847
    %v1080 = vpack.c.b16 %v852, %v848
    %v1081 = vpack.c.b16 %v853, %v849
    %v1082 = vpack.c.b16 %v854, %v850
    %v1083 = vpack.c.b16 %v859, %v855
    %v1084 = vpack.c.b16 %v860, %v856
    %v1085 = vpack.c.b16 %v861, %v857
    %v1086 = vpack.c.b16 %v862, %v858
    %v1087 = vpack.c.b16 %v867, %v863
    %v1088 = vpack.c.b16 %v868, %v864
    %v1089 = vpack.c.b16 %v869, %v865
    %v1090 = vpack.c.b16 %v870, %v866
    %v1091 = vpack.c.b16 %v875, %v871
    %v1092 = vpack.c.b16 %v876, %v872
    %v1093 = vpack.c.b16 %v877, %v873
    %v1094 = vpack.c.b16 %v878, %v874
    %v1095 = vpack.c.b16 %v883, %v879
    %v1096 = vpack.c.b16 %v884, %v880
    %v1097 = vpack.c.b16 %v885, %v881
    %v1098 = vpack.c.b16 %v886, %v882
    %v1099 = vpack.c.b16 %v891, %v887
    %v1100 = vpack.c.b16 %v892, %v888
    %v1101 = vpack.c.b16 %v893, %v889
    %v1102 = vpack.c.b16 %v894, %v890
    %v1103 = vpack.c.b16 %v899, %v895
    %v1104 = vpack.c.b16 %v900, %v896
    %v1105 = vpack.c.b16 %v901, %v897
    %v1106 = vpack.c.b16 %v902, %v898
    %v1107 = vpack.c.b16 %v907, %v903
    %v1108 = vpack.c.b16 %v908, %v904
    %v1109 = vpack.c.b16 %v909, %v905
    %v1110 = vpack.c.b16 %v910, %v906
    %v1111 = vpack.c.b16 %v915, %v911
    %v1112 = vpack.c.b16 %v916, %v912
    %v1113 = vpack.c.b16 %v917, %v913
    %v1114 = vpack.c.b16 %v918, %v914
    %v1115 = vpack.c.b16 %v923, %v919
    %v1116 = vpack.c.b16 %v924, %v920
    %v1117 = vpack.c.b16 %v925, %v921
    %v1118 = vpack.c.b16 %v926, %v922
    %1311 = vmatprep.subr.bf16.mxu0 %v928
    %1312 = vmatpush1.bf16.msra.mxu0 %v927
    %1313 = vmatprep.subr.bf16.mxu0 %v932
    %1314 = vmatpush1.bf16.msra.mxu0 %v931
    %1315 = vmatprep.subr.bf16.mxu0 %v936
    %1316 = vmatpush1.bf16.msra.mxu0 %v935
    %1317 = vmatprep.subr.bf16.mxu0 %v940
    %1318 = vmatpush1.bf16.msra.mxu0 %v939
    %1319 = vmatprep.subr.bf16.mxu0 %v944
    %1320 = vmatpush1.bf16.msra.mxu0 %v943
    %1321 = vmatprep.subr.bf16.mxu0 %v948
    %1322 = vmatpush1.bf16.msra.mxu0 %v947
    %1323 = vmatprep.subr.bf16.mxu0 %v952
    %1324 = vmatpush1.bf16.msra.mxu0 %v951
    %1325 = vmatprep.subr.bf16.mxu0 %v956
    %1326 = vmatpush1.bf16.msra.mxu0 %v955
    %1327 = vmatprep.subr.bf16.mxu0 %v960
    %1328 = vmatpush1.bf16.msra.mxu0 %v959
    %1329 = vmatprep.subr.bf16.mxu0 %v964
    %1330 = vmatpush1.bf16.msra.mxu0 %v963
    %1331 = vmatprep.subr.bf16.mxu0 %v968
    %1332 = vmatpush1.bf16.msra.mxu0 %v967
    %1333 = vmatprep.subr.bf16.mxu0 %v972
    %1334 = vmatpush1.bf16.msra.mxu0 %v971
    %1335 = vmatprep.subr.bf16.mxu0 %v976
    %1336 = vmatpush1.bf16.msra.mxu0 %v975
    %1337 = vmatprep.subr.bf16.mxu0 %v980
    %1338 = vmatpush1.bf16.msra.mxu0 %v979
    %1339 = vmatprep.subr.bf16.mxu0 %v984
    %1340 = vmatpush1.bf16.msra.mxu0 %v983
    %1341 = vmatprep.subr.bf16.mxu0 %v988
    %1342 = vmatpush1.bf16.msra.mxu0 %v987
    %1343 = vmatprep.mubr.bf16.mxu0 %v340
    %1344 = vmatmul.mubr.bf16.gmra.mrb[0].mxu0 %v339
    %v1345 = vpop.f32.mrb[0].mxu0
    %v1346 = vadd.f32 %v313, %v1345
    %v1347 = vpop.f32.mrb[0].mxu0
    %v1348 = vadd.f32 %v317, %v1347
    %v1349 = vpop.f32.mrb[0].mxu0
    %v1350 = vpop.f32.mrb[0].mxu0
    %1351 = vdwg.mxu0
    %1352 = vmatprep.subr.bf16.mxu0 %v992
    %1353 = vmatpush1.bf16.msra.mxu0 %v991
    %1354 = vmatprep.subr.bf16.mxu0 %v996
    %1355 = vmatpush1.bf16.msra.mxu0 %v995
    %1356 = vmatprep.subr.bf16.mxu0 %v1000
    %1357 = vmatpush1.bf16.msra.mxu0 %v999
    %1358 = vmatprep.subr.bf16.mxu0 %v1004
    %1359 = vmatpush1.bf16.msra.mxu0 %v1003
    %1360 = vmatprep.subr.bf16.mxu0 %v1008
    %1361 = vmatpush1.bf16.msra.mxu0 %v1007
    %1362 = vmatprep.subr.bf16.mxu0 %v1012
    %1363 = vmatpush1.bf16.msra.mxu0 %v1011
    %1364 = vmatprep.subr.bf16.mxu0 %v1016
    %1365 = vmatpush1.bf16.msra.mxu0 %v1015
    %1366 = vmatprep.subr.bf16.mxu0 %v1020
    %1367 = vmatpush1.bf16.msra.mxu0 %v1019
    %1368 = vmatprep.subr.bf16.mxu0 %v1024
    %1369 = vmatpush1.bf16.msra.mxu0 %v1023
    %1370 = vmatprep.subr.bf16.mxu0 %v1028
    %1371 = vmatpush1.bf16.msra.mxu0 %v1027
    %1372 = vmatprep.subr.bf16.mxu0 %v1032
    %1373 = vmatpush1.bf16.msra.mxu0 %v1031
    %1374 = vmatprep.subr.bf16.mxu0 %v1036
    %1375 = vmatpush1.bf16.msra.mxu0 %v1035
    %1376 = vmatprep.subr.bf16.mxu0 %v1040
    %1377 = vmatpush1.bf16.msra.mxu0 %v1039
    %1378 = vmatprep.subr.bf16.mxu0 %v1044
    %1379 = vmatpush1.bf16.msra.mxu0 %v1043
    %1380 = vmatprep.subr.bf16.mxu0 %v1048
    %1381 = vmatpush1.bf16.msra.mxu0 %v1047
    %1382 = vmatprep.subr.bf16.mxu0 %v1052
    %1383 = vmatpush1.bf16.msra.mxu0 %v1051
    %1384 = vmatprep.mubr.bf16.mxu0 %v342
    %1385 = vmatmul.mubr.bf16.gmra.mrb[0].mxu0 %v341
    %v1386 = vpop.f32.mrb[0].mxu0
    %v1387 = vadd.f32 %v1346, %v1386
    %v1388 = vpop.f32.mrb[0].mxu0
    %v1389 = vadd.f32 %v1348, %v1388
    %v1390 = vpop.f32.mrb[0].mxu0
    %v1391 = vpop.f32.mrb[0].mxu0
    %1392 = vdwg.mxu0
    %1393 = vmatprep.subr.bf16.mxu0 %v1056
    %1394 = vmatpush1.bf16.msra.mxu0 %v1055
    %1395 = vmatprep.subr.bf16.mxu0 %v1060
    %1396 = vmatpush1.bf16.msra.mxu0 %v1059
    %1397 = vmatprep.subr.bf16.mxu0 %v1064
    %1398 = vmatpush1.bf16.msra.mxu0 %v1063
    %1399 = vmatprep.subr.bf16.mxu0 %v1068
    %1400 = vmatpush1.bf16.msra.mxu0 %v1067
    %1401 = vmatprep.subr.bf16.mxu0 %v1072
    %1402 = vmatpush1.bf16.msra.mxu0 %v1071
    %1403 = vmatprep.subr.bf16.mxu0 %v1076
    %1404 = vmatpush1.bf16.msra.mxu0 %v1075
    %1405 = vmatprep.subr.bf16.mxu0 %v1080
    %1406 = vmatpush1.bf16.msra.mxu0 %v1079
    %1407 = vmatprep.subr.bf16.mxu0 %v1084
    %1408 = vmatpush1.bf16.msra.mxu0 %v1083
    %1409 = vmatprep.subr.bf16.mxu0 %v1088
    %1410 = vmatpush1.bf16.msra.mxu0 %v1087
    %1411 = vmatprep.subr.bf16.mxu0 %v1092
    %1412 = vmatpush1.bf16.msra.mxu0 %v1091
    %1413 = vmatprep.subr.bf16.mxu0 %v1096
    %1414 = vmatpush1.bf16.msra.mxu0 %v1095
    %1415 = vmatprep.subr.bf16.mxu0 %v1100
    %1416 = vmatpush1.bf16.msra.mxu0 %v1099
    %1417 = vmatprep.subr.bf16.mxu0 %v1104
    %1418 = vmatpush1.bf16.msra.mxu0 %v1103
    %1419 = vmatprep.subr.bf16.mxu0 %v1108
    %1420 = vmatpush1.bf16.msra.mxu0 %v1107
    %1421 = vmatprep.subr.bf16.mxu0 %v1112
    %1422 = vmatpush1.bf16.msra.mxu0 %v1111
    %1423 = vmatprep.subr.bf16.mxu0 %v1116
    %1424 = vmatpush1.bf16.msra.mxu0 %v1115
    %1425 = vmatprep.mubr.bf16.mxu0 %v344
    %1426 = vmatmul.mubr.bf16.gmra.mrb[0].mxu0 %v343
    %v1427 = vpop.f32.mrb[0].mxu0
    %v1428 = vadd.f32 %v1387, %v1427
    %v1429 = vpop.f32.mrb[0].mxu0
    %v1430 = vadd.f32 %v1389, %v1429
    %v1431 = vpop.f32.mrb[0].mxu0
    %v1432 = vpop.f32.mrb[0].mxu0
    %1433 = vdwg.mxu0
    %1434 = vmatprep.subr.bf16.mxu0 %v930
    %1435 = vmatpush1.bf16.msra.mxu0 %v929
    %1436 = vmatprep.subr.bf16.mxu0 %v934
    %1437 = vmatpush1.bf16.msra.mxu0 %v933
    %1438 = vmatprep.subr.bf16.mxu0 %v938
    %1439 = vmatpush1.bf16.msra.mxu0 %v937
    %1440 = vmatprep.subr.bf16.mxu0 %v942
    %1441 = vmatpush1.bf16.msra.mxu0 %v941
    %1442 = vmatprep.subr.bf16.mxu0 %v946
    %1443 = vmatpush1.bf16.msra.mxu0 %v945
    %1444 = vmatprep.subr.bf16.mxu0 %v950
    %1445 = vmatpush1.bf16.msra.mxu0 %v949
    %1446 = vmatprep.subr.bf16.mxu0 %v954
    %1447 = vmatpush1.bf16.msra.mxu0 %v953
    %1448 = vmatprep.subr.bf16.mxu0 %v958
    %1449 = vmatpush1.bf16.msra.mxu0 %v957
    %1450 = vmatprep.subr.bf16.mxu0 %v962
    %1451 = vmatpush1.bf16.msra.mxu0 %v961
    %1452 = vmatprep.subr.bf16.mxu0 %v966
    %1453 = vmatpush1.bf16.msra.mxu0 %v965
    %1454 = vmatprep.subr.bf16.mxu0 %v970
    %1455 = vmatpush1.bf16.msra.mxu0 %v969
    %1456 = vmatprep.subr.bf16.mxu0 %v974
    %1457 = vmatpush1.bf16.msra.mxu0 %v973
    %1458 = vmatprep.subr.bf16.mxu0 %v978
    %1459 = vmatpush1.bf16.msra.mxu0 %v977
    %1460 = vmatprep.subr.bf16.mxu0 %v982
    %1461 = vmatpush1.bf16.msra.mxu0 %v981
    %1462 = vmatprep.subr.bf16.mxu0 %v986
    %1463 = vmatpush1.bf16.msra.mxu0 %v985
    %1464 = vmatprep.subr.bf16.mxu0 %v990
    %1465 = vmatpush1.bf16.msra.mxu0 %v989
    %1466 = vmatprep.mubr.bf16.mxu0 %v340
    %1467 = vmatmul.mubr.bf16.gmra.mrb[0].mxu0 %v339
    %v1468 = vpop.f32.mrb[0].mxu0
    %v1469 = vadd.f32 %v321, %v1468
    %v1470 = vpop.f32.mrb[0].mxu0
    %v1471 = vadd.f32 %v325, %v1470
    %v1472 = vpop.f32.mrb[0].mxu0
    %v1473 = vpop.f32.mrb[0].mxu0
    %1474 = vdwg.mxu0
    %1475 = vmatprep.subr.bf16.mxu0 %v994
    %1476 = vmatpush1.bf16.msra.mxu0 %v993
    %1477 = vmatprep.subr.bf16.mxu0 %v998
    %1478 = vmatpush1.bf16.msra.mxu0 %v997
    %1479 = vmatprep.subr.bf16.mxu0 %v1002
    %1480 = vmatpush1.bf16.msra.mxu0 %v1001
    %1481 = vmatprep.subr.bf16.mxu0 %v1006
    %1482 = vmatpush1.bf16.msra.mxu0 %v1005
    %1483 = vmatprep.subr.bf16.mxu0 %v1010
    %1484 = vmatpush1.bf16.msra.mxu0 %v1009
    %1485 = vmatprep.subr.bf16.mxu0 %v1014
    %1486 = vmatpush1.bf16.msra.mxu0 %v1013
    %1487 = vmatprep.subr.bf16.mxu0 %v1018
    %1488 = vmatpush1.bf16.msra.mxu0 %v1017
    %1489 = vmatprep.subr.bf16.mxu0 %v1022
    %1490 = vmatpush1.bf16.msra.mxu0 %v1021
    %1491 = vmatprep.subr.bf16.mxu0 %v1026
    %1492 = vmatpush1.bf16.msra.mxu0 %v1025
    %1493 = vmatprep.subr.bf16.mxu0 %v1030
    %1494 = vmatpush1.bf16.msra.mxu0 %v1029
    %1495 = vmatprep.subr.bf16.mxu0 %v1034
    %1496 = vmatpush1.bf16.msra.mxu0 %v1033
    %1497 = vmatprep.subr.bf16.mxu0 %v1038
    %1498 = vmatpush1.bf16.msra.mxu0 %v1037
    %1499 = vmatprep.subr.bf16.mxu0 %v1042
    %1500 = vmatpush1.bf16.msra.mxu0 %v1041
    %1501 = vmatprep.subr.bf16.mxu0 %v1046
    %1502 = vmatpush1.bf16.msra.mxu0 %v1045
    %1503 = vmatprep.subr.bf16.mxu0 %v1050
    %1504 = vmatpush1.bf16.msra.mxu0 %v1049
    %1505 = vmatprep.subr.bf16.mxu0 %v1054
    %1506 = vmatpush1.bf16.msra.mxu0 %v1053
    %1507 = vmatprep.mubr.bf16.mxu0 %v342
    %1508 = vmatmul.mubr.bf16.gmra.mrb[0].mxu0 %v341
    %v1509 = vpop.f32.mrb[0].mxu0
    %v1510 = vadd.f32 %v1469, %v1509
    %v1511 = vpop.f32.mrb[0].mxu0
    %v1512 = vadd.f32 %v1471, %v1511
    %v1513 = vpop.f32.mrb[0].mxu0
    %v1514 = vpop.f32.mrb[0].mxu0
    %1515 = vdwg.mxu0
    %1516 = vmatprep.subr.bf16.mxu0 %v1058
    %1517 = vmatpush1.bf16.msra.mxu0 %v1057
    %1518 = vmatprep.subr.bf16.mxu0 %v1062
    %1519 = vmatpush1.bf16.msra.mxu0 %v1061
    %1520 = vmatprep.subr.bf16.mxu0 %v1066
    %1521 = vmatpush1.bf16.msra.mxu0 %v1065
    %1522 = vmatprep.subr.bf16.mxu0 %v1070
    %1523 = vmatpush1.bf16.msra.mxu0 %v1069
    %1524 = vmatprep.subr.bf16.mxu0 %v1074
    %1525 = vmatpush1.bf16.msra.mxu0 %v1073
    %1526 = vmatprep.subr.bf16.mxu0 %v1078
    %1527 = vmatpush1.bf16.msra.mxu0 %v1077
    %1528 = vmatprep.subr.bf16.mxu0 %v1082
    %1529 = vmatpush1.bf16.msra.mxu0 %v1081
    %1530 = vmatprep.subr.bf16.mxu0 %v1086
    %1531 = vmatpush1.bf16.msra.mxu0 %v1085
    %1532 = vmatprep.subr.bf16.mxu0 %v1090
    %1533 = vmatpush1.bf16.msra.mxu0 %v1089
    %1534 = vmatprep.subr.bf16.mxu0 %v1094
    %1535 = vmatpush1.bf16.msra.mxu0 %v1093
    %1536 = vmatprep.subr.bf16.mxu0 %v1098
    %1537 = vmatpush1.bf16.msra.mxu0 %v1097
    %1538 = vmatprep.subr.bf16.mxu0 %v1102
    %1539 = vmatpush1.bf16.msra.mxu0 %v1101
    %1540 = vmatprep.subr.bf16.mxu0 %v1106
    %1541 = vmatpush1.bf16.msra.mxu0 %v1105
    %1542 = vmatprep.subr.bf16.mxu0 %v1110
    %1543 = vmatpush1.bf16.msra.mxu0 %v1109
    %1544 = vmatprep.subr.bf16.mxu0 %v1114
    %1545 = vmatpush1.bf16.msra.mxu0 %v1113
    %1546 = vmatprep.subr.bf16.mxu0 %v1118
    %1547 = vmatpush1.bf16.msra.mxu0 %v1117
    %1548 = vmatprep.mubr.bf16.mxu0 %v344
    %1549 = vmatmul.mubr.bf16.gmra.mrb[0].mxu0 %v343
    %v1550 = vpop.f32.mrb[0].mxu0
    %v1551 = vadd.f32 %v1510, %v1550
    %v1552 = vpop.f32.mrb[0].mxu0
    %v1553 = vadd.f32 %v1512, %v1552
    %v1554 = vpop.f32.mrb[0].mxu0
    %v1555 = vpop.f32.mrb[0].mxu0
    %1556 = vdwg.mxu0
    %v1557 = vmul.f32 %v1428, 0.2
    %v1558 = vmul.f32 %v1430, 0.2
    %v1559 = vmul.f32 %v1551, 0.2
    %v1560 = vmul.f32 %v1553, 0.2
    %v1561 = vmax.f32 %v1428, %v1557
    %v1562 = vmax.f32 %v1430, %v1558
    %v1563 = vmax.f32 %v1551, %v1559
    %v1564 = vmax.f32 %v1553, %v1560
    %v1565 = vpack.c.bf16 %v1561, %v1561
    %v1566 = vpack.c.bf16 %v1562, %v1562
    %v1567 = vpack.c.bf16 %v1563, %v1563
    %v1568 = vpack.c.bf16 %v1564, %v1564
    %v1569 = vld [vmem:[#allocation4] sm:$0xff]
    %v1570 = vld [vmem:[#allocation4 + $0x8] sm:$0xff]
    %v1571 = vld [vmem:[#allocation4 + $0x10] sm:$0xff]
    %v1572 = vld [vmem:[#allocation4 + $0x18] sm:$0xff]
    %v1573 = vld [vmem:[#allocation4 + $0x20] sm:$0xff]
    %v1574 = vld [vmem:[#allocation4 + $0x28] sm:$0xff]
    %v1575 = vld [vmem:[#allocation4 + $0x30] sm:$0xff]
    %v1576 = vld [vmem:[#allocation4 + $0x38] sm:$0xff]
    %v1577 = vld [vmem:[#allocation4 + $0x40] sm:$0xff]
    %v1578 = vld [vmem:[#allocation4 + $0x48] sm:$0xff]
    %v1579 = vld [vmem:[#allocation4 + $0x50] sm:$0xff]
    %v1580 = vld [vmem:[#allocation4 + $0x58] sm:$0xff]
    %v1581 = vld [vmem:[#allocation4 + $0x60] sm:$0xff]
    %v1582 = vld [vmem:[#allocation4 + $0x68] sm:$0xff]
    %v1583 = vld [vmem:[#allocation4 + $0x70] sm:$0xff]
    %v1584 = vld [vmem:[#allocation4 + $0x78] sm:$0xff]
    %v1585 = vld [vmem:[#allocation4 + $0x80] sm:$0xff]
    %v1586 = vld [vmem:[#allocation4 + $0x88] sm:$0xff]
    %v1587 = vld [vmem:[#allocation4 + $0x90] sm:$0xff]
    %v1588 = vld [vmem:[#allocation4 + $0x98] sm:$0xff]
    %v1589 = vld [vmem:[#allocation4 + $0xa0] sm:$0xff]
    %v1590 = vld [vmem:[#allocation4 + $0xa8] sm:$0xff]
    %v1591 = vld [vmem:[#allocation4 + $0xb0] sm:$0xff]
    %v1592 = vld [vmem:[#allocation4 + $0xb8] sm:$0xff]
    %v1593 = vld [vmem:[#allocation4 + $0xc0] sm:$0xff]
    %v1594 = vld [vmem:[#allocation4 + $0xc8] sm:$0xff]
    %v1595 = vld [vmem:[#allocation4 + $0xd0] sm:$0xff]
    %v1596 = vld [vmem:[#allocation4 + $0xd8] sm:$0xff]
    %v1597 = vld [vmem:[#allocation4 + $0xe0] sm:$0xff]
    %v1598 = vld [vmem:[#allocation4 + $0xe8] sm:$0xff]
    %v1599 = vld [vmem:[#allocation4 + $0xf0] sm:$0xff]
    %v1600 = vld [vmem:[#allocation4 + $0xf8] sm:$0xff]
    %v1601 = vld [vmem:[#allocation4 + $0x100] sm:$0xff]
    %v1602 = vld [vmem:[#allocation4 + $0x108] sm:$0xff]
    %v1603 = vld [vmem:[#allocation4 + $0x110] sm:$0xff]
    %v1604 = vld [vmem:[#allocation4 + $0x118] sm:$0xff]
    %v1605 = vld [vmem:[#allocation4 + $0x120] sm:$0xff]
    %v1606 = vld [vmem:[#allocation4 + $0x128] sm:$0xff]
    %v1607 = vld [vmem:[#allocation4 + $0x130] sm:$0xff]
    %v1608 = vld [vmem:[#allocation4 + $0x138] sm:$0xff]
    %v1609 = vld [vmem:[#allocation4 + $0x140] sm:$0xff]
    %v1610 = vld [vmem:[#allocation4 + $0x148] sm:$0xff]
    %v1611 = vld [vmem:[#allocation4 + $0x150] sm:$0xff]
    %v1612 = vld [vmem:[#allocation4 + $0x158] sm:$0xff]
    %v1613 = vld [vmem:[#allocation4 + $0x160] sm:$0xff]
    %v1614 = vld [vmem:[#allocation4 + $0x168] sm:$0xff]
    %v1615 = vld [vmem:[#allocation4 + $0x170] sm:$0xff]
    %v1616 = vld [vmem:[#allocation4 + $0x178] sm:$0xff]
    %v1617 = vld [vmem:[#allocation4 + $0x180] sm:$0xff]
    %v1618 = vld [vmem:[#allocation4 + $0x188] sm:$0xff]
    %v1619 = vld [vmem:[#allocation4 + $0x190] sm:$0xff]
    %v1620 = vld [vmem:[#allocation4 + $0x198] sm:$0xff]
    %v1621 = vld [vmem:[#allocation4 + $0x1a0] sm:$0xff]
    %v1622 = vld [vmem:[#allocation4 + $0x1a8] sm:$0xff]
    %v1623 = vld [vmem:[#allocation4 + $0x1b0] sm:$0xff]
    %v1624 = vld [vmem:[#allocation4 + $0x1b8] sm:$0xff]
    %v1625 = vld [vmem:[#allocation4 + $0x1c0] sm:$0xff]
    %v1626 = vld [vmem:[#allocation4 + $0x1c8] sm:$0xff]
    %v1627 = vld [vmem:[#allocation4 + $0x1d0] sm:$0xff]
    %v1628 = vld [vmem:[#allocation4 + $0x1d8] sm:$0xff]
    %v1629 = vld [vmem:[#allocation4 + $0x1e0] sm:$0xff]
    %v1630 = vld [vmem:[#allocation4 + $0x1e8] sm:$0xff]
    %v1631 = vld [vmem:[#allocation4 + $0x1f0] sm:$0xff]
    %v1632 = vld [vmem:[#allocation4 + $0x1f8] sm:$0xff]
    %v1633 = vld [vmem:[%s4] sm:$0x3]
    %v1635 = vlaneseq
    %v1636 = vshrl.u32 %v1635, 7
    %v1637 = vsub.s32 0, %v1636
    %v1638 = vrot.slane %v1633, %v1637
    %v1639 = vlaneseq
    %v1640 = vshrl.u32 %v1639, 7
    %v1641 = vsub.s32 1, %v1640
    %v1642 = vrot.slane %v1633, %v1641
    %v1709 = vunpack.c.l.b16 %v1569
    %v1710 = vunpack.c.h.b16 %v1569
    %v1711 = vunpack.c.l.b16 %v1570
    %v1712 = vunpack.c.h.b16 %v1570
    %v1713 = vunpack.c.l.b16 %v1571
    %v1714 = vunpack.c.h.b16 %v1571
    %v1715 = vunpack.c.l.b16 %v1572
    %v1716 = vunpack.c.h.b16 %v1572
    %v1717 = vunpack.c.l.b16 %v1573
    %v1718 = vunpack.c.h.b16 %v1573
    %v1719 = vunpack.c.l.b16 %v1574
    %v1720 = vunpack.c.h.b16 %v1574
    %v1721 = vunpack.c.l.b16 %v1575
    %v1722 = vunpack.c.h.b16 %v1575
    %v1723 = vunpack.c.l.b16 %v1576
    %v1724 = vunpack.c.h.b16 %v1576
    %v1725 = vunpack.c.l.b16 %v1577
    %v1726 = vunpack.c.h.b16 %v1577
    %v1727 = vunpack.c.l.b16 %v1578
    %v1728 = vunpack.c.h.b16 %v1578
    %v1729 = vunpack.c.l.b16 %v1579
    %v1730 = vunpack.c.h.b16 %v1579
    %v1731 = vunpack.c.l.b16 %v1580
    %v1732 = vunpack.c.h.b16 %v1580
    %v1733 = vunpack.c.l.b16 %v1581
    %v1734 = vunpack.c.h.b16 %v1581
    %v1735 = vunpack.c.l.b16 %v1582
    %v1736 = vunpack.c.h.b16 %v1582
    %v1737 = vunpack.c.l.b16 %v1583
    %v1738 = vunpack.c.h.b16 %v1583
    %v1739 = vunpack.c.l.b16 %v1584
    %v1740 = vunpack.c.h.b16 %v1584
    %v1741 = vunpack.c.l.b16 %v1585
    %v1742 = vunpack.c.h.b16 %v1585
    %v1743 = vunpack.c.l.b16 %v1586
    %v1744 = vunpack.c.h.b16 %v1586
    %v1745 = vunpack.c.l.b16 %v1587
    %v1746 = vunpack.c.h.b16 %v1587
    %v1747 = vunpack.c.l.b16 %v1588
    %v1748 = vunpack.c.h.b16 %v1588
    %v1749 = vunpack.c.l.b16 %v1589
    %v1750 = vunpack.c.h.b16 %v1589
    %v1751 = vunpack.c.l.b16 %v1590
    %v1752 = vunpack.c.h.b16 %v1590
    %v1753 = vunpack.c.l.b16 %v1591
    %v1754 = vunpack.c.h.b16 %v1591
    %v1755 = vunpack.c.l.b16 %v1592
    %v1756 = vunpack.c.h.b16 %v1592
    %v1757 = vunpack.c.l.b16 %v1593
    %v1758 = vunpack.c.h.b16 %v1593
    %v1759 = vunpack.c.l.b16 %v1594
    %v1760 = vunpack.c.h.b16 %v1594
    %v1761 = vunpack.c.l.b16 %v1595
    %v1762 = vunpack.c.h.b16 %v1595
    %v1763 = vunpack.c.l.b16 %v1596
    %v1764 = vunpack.c.h.b16 %v1596
    %v1765 = vunpack.c.l.b16 %v1597
    %v1766 = vunpack.c.h.b16 %v1597
    %v1767 = vunpack.c.l.b16 %v1598
    %v1768 = vunpack.c.h.b16 %v1598
    %v1769 = vunpack.c.l.b16 %v1599
    %v1770 = vunpack.c.h.b16 %v1599
    %v1771 = vunpack.c.l.b16 %v1600
    %v1772 = vunpack.c.h.b16 %v1600
    %v1773 = vunpack.c.l.b16 %v1601
    %v1774 = vunpack.c.h.b16 %v1601
    %v1775 = vunpack.c.l.b16 %v1602
    %v1776 = vunpack.c.h.b16 %v1602
    %v1777 = vunpack.c.l.b16 %v1603
    %v1778 = vunpack.c.h.b16 %v1603
    %v1779 = vunpack.c.l.b16 %v1604
    %v1780 = vunpack.c.h.b16 %v1604
    %v1781 = vunpack.c.l.b16 %v1605
    %v1782 = vunpack.c.h.b16 %v1605
    %v1783 = vunpack.c.l.b16 %v1606
    %v1784 = vunpack.c.h.b16 %v1606
    %v1785 = vunpack.c.l.b16 %v1607
    %v1786 = vunpack.c.h.b16 %v1607
    %v1787 = vunpack.c.l.b16 %v1608
    %v1788 = vunpack.c.h.b16 %v1608
    %v1789 = vunpack.c.l.b16 %v1609
    %v1790 = vunpack.c.h.b16 %v1609
    %v1791 = vunpack.c.l.b16 %v1610
    %v1792 = vunpack.c.h.b16 %v1610
    %v1793 = vunpack.c.l.b16 %v1611
    %v1794 = vunpack.c.h.b16 %v1611
    %v1795 = vunpack.c.l.b16 %v1612
    %v1796 = vunpack.c.h.b16 %v1612
    %v1797 = vunpack.c.l.b16 %v1613
    %v1798 = vunpack.c.h.b16 %v1613
    %v1799 = vunpack.c.l.b16 %v1614
    %v1800 = vunpack.c.h.b16 %v1614
    %v1801 = vunpack.c.l.b16 %v1615
    %v1802 = vunpack.c.h.b16 %v1615
    %v1803 = vunpack.c.l.b16 %v1616
    %v1804 = vunpack.c.h.b16 %v1616
    %v1805 = vunpack.c.l.b16 %v1617
    %v1806 = vunpack.c.h.b16 %v1617
    %v1807 = vunpack.c.l.b16 %v1618
    %v1808 = vunpack.c.h.b16 %v1618
    %v1809 = vunpack.c.l.b16 %v1619
    %v1810 = vunpack.c.h.b16 %v1619
    %v1811 = vunpack.c.l.b16 %v1620
    %v1812 = vunpack.c.h.b16 %v1620
    %v1813 = vunpack.c.l.b16 %v1621
    %v1814 = vunpack.c.h.b16 %v1621
    %v1815 = vunpack.c.l.b16 %v1622
    %v1816 = vunpack.c.h.b16 %v1622
    %v1817 = vunpack.c.l.b16 %v1623
    %v1818 = vunpack.c.h.b16 %v1623
    %v1819 = vunpack.c.l.b16 %v1624
    %v1820 = vunpack.c.h.b16 %v1624
    %v1821 = vunpack.c.l.b16 %v1625
    %v1822 = vunpack.c.h.b16 %v1625
    %v1823 = vunpack.c.l.b16 %v1626
    %v1824 = vunpack.c.h.b16 %v1626
    %v1825 = vunpack.c.l.b16 %v1627
    %v1826 = vunpack.c.h.b16 %v1627
    %v1827 = vunpack.c.l.b16 %v1628
    %v1828 = vunpack.c.h.b16 %v1628
    %v1829 = vunpack.c.l.b16 %v1629
    %v1830 = vunpack.c.h.b16 %v1629
    %v1831 = vunpack.c.l.b16 %v1630
    %v1832 = vunpack.c.h.b16 %v1630
    %v1833 = vunpack.c.l.b16 %v1631
    %v1834 = vunpack.c.h.b16 %v1631
    %v1835 = vunpack.c.l.b16 %v1632
    %v1836 = vunpack.c.h.b16 %v1632
    %v1837 = vpack.c.b16 %v1711, %v1709
    %v1838 = vpack.c.b16 %v1712, %v1710
    %v1839 = vpack.c.b16 %v1715, %v1713
    %v1840 = vpack.c.b16 %v1716, %v1714
    %v1841 = vpack.c.b16 %v1719, %v1717
    %v1842 = vpack.c.b16 %v1720, %v1718
    %v1843 = vpack.c.b16 %v1723, %v1721
    %v1844 = vpack.c.b16 %v1724, %v1722
    %v1845 = vpack.c.b16 %v1727, %v1725
    %v1846 = vpack.c.b16 %v1728, %v1726
    %v1847 = vpack.c.b16 %v1731, %v1729
    %v1848 = vpack.c.b16 %v1732, %v1730
    %v1849 = vpack.c.b16 %v1735, %v1733
    %v1850 = vpack.c.b16 %v1736, %v1734
    %v1851 = vpack.c.b16 %v1739, %v1737
    %v1852 = vpack.c.b16 %v1740, %v1738
    %v1853 = vpack.c.b16 %v1743, %v1741
    %v1854 = vpack.c.b16 %v1744, %v1742
    %v1855 = vpack.c.b16 %v1747, %v1745
    %v1856 = vpack.c.b16 %v1748, %v1746
    %v1857 = vpack.c.b16 %v1751, %v1749
    %v1858 = vpack.c.b16 %v1752, %v1750
    %v1859 = vpack.c.b16 %v1755, %v1753
    %v1860 = vpack.c.b16 %v1756, %v1754
    %v1861 = vpack.c.b16 %v1759, %v1757
    %v1862 = vpack.c.b16 %v1760, %v1758
    %v1863 = vpack.c.b16 %v1763, %v1761
    %v1864 = vpack.c.b16 %v1764, %v1762
    %v1865 = vpack.c.b16 %v1767, %v1765
    %v1866 = vpack.c.b16 %v1768, %v1766
    %v1867 = vpack.c.b16 %v1771, %v1769
    %v1868 = vpack.c.b16 %v1772, %v1770
    %v1869 = vpack.c.b16 %v1775, %v1773
    %v1870 = vpack.c.b16 %v1776, %v1774
    %v1871 = vpack.c.b16 %v1779, %v1777
    %v1872 = vpack.c.b16 %v1780, %v1778
    %v1873 = vpack.c.b16 %v1783, %v1781
    %v1874 = vpack.c.b16 %v1784, %v1782
    %v1875 = vpack.c.b16 %v1787, %v1785
    %v1876 = vpack.c.b16 %v1788, %v1786
    %v1877 = vpack.c.b16 %v1791, %v1789
    %v1878 = vpack.c.b16 %v1792, %v1790
    %v1879 = vpack.c.b16 %v1795, %v1793
    %v1880 = vpack.c.b16 %v1796, %v1794
    %v1881 = vpack.c.b16 %v1799, %v1797
    %v1882 = vpack.c.b16 %v1800, %v1798
    %v1883 = vpack.c.b16 %v1803, %v1801
    %v1884 = vpack.c.b16 %v1804, %v1802
    %v1885 = vpack.c.b16 %v1807, %v1805
    %v1886 = vpack.c.b16 %v1808, %v1806
    %v1887 = vpack.c.b16 %v1811, %v1809
    %v1888 = vpack.c.b16 %v1812, %v1810
    %v1889 = vpack.c.b16 %v1815, %v1813
    %v1890 = vpack.c.b16 %v1816, %v1814
    %v1891 = vpack.c.b16 %v1819, %v1817
    %v1892 = vpack.c.b16 %v1820, %v1818
    %v1893 = vpack.c.b16 %v1823, %v1821
    %v1894 = vpack.c.b16 %v1824, %v1822
    %v1895 = vpack.c.b16 %v1827, %v1825
    %v1896 = vpack.c.b16 %v1828, %v1826
    %v1897 = vpack.c.b16 %v1831, %v1829
    %v1898 = vpack.c.b16 %v1832, %v1830
    %v1899 = vpack.c.b16 %v1835, %v1833
    %v1900 = vpack.c.b16 %v1836, %v1834
    %1965 = vmatprep.subr.bf16.mxu0 %v1838
    %1966 = vmatpush1.bf16.msra.mxu0 %v1837
    %1967 = vmatprep.subr.bf16.mxu0 %v1840
    %1968 = vmatpush1.bf16.msra.mxu0 %v1839
    %1969 = vmatprep.subr.bf16.mxu0 %v1842
    %1970 = vmatpush1.bf16.msra.mxu0 %v1841
    %1971 = vmatprep.subr.bf16.mxu0 %v1844
    %1972 = vmatpush1.bf16.msra.mxu0 %v1843
    %1973 = vmatprep.subr.bf16.mxu0 %v1846
    %1974 = vmatpush1.bf16.msra.mxu0 %v1845
    %1975 = vmatprep.subr.bf16.mxu0 %v1848
    %1976 = vmatpush1.bf16.msra.mxu0 %v1847
    %1977 = vmatprep.subr.bf16.mxu0 %v1850
    %1978 = vmatpush1.bf16.msra.mxu0 %v1849
    %1979 = vmatprep.subr.bf16.mxu0 %v1852
    %1980 = vmatpush1.bf16.msra.mxu0 %v1851
    %1981 = vmatprep.subr.bf16.mxu0 %v1854
    %1982 = vmatpush1.bf16.msra.mxu0 %v1853
    %1983 = vmatprep.subr.bf16.mxu0 %v1856
    %1984 = vmatpush1.bf16.msra.mxu0 %v1855
    %1985 = vmatprep.subr.bf16.mxu0 %v1858
    %1986 = vmatpush1.bf16.msra.mxu0 %v1857
    %1987 = vmatprep.subr.bf16.mxu0 %v1860
    %1988 = vmatpush1.bf16.msra.mxu0 %v1859
    %1989 = vmatprep.subr.bf16.mxu0 %v1862
    %1990 = vmatpush1.bf16.msra.mxu0 %v1861
    %1991 = vmatprep.subr.bf16.mxu0 %v1864
    %1992 = vmatpush1.bf16.msra.mxu0 %v1863
    %1993 = vmatprep.subr.bf16.mxu0 %v1866
    %1994 = vmatpush1.bf16.msra.mxu0 %v1865
    %1995 = vmatprep.subr.bf16.mxu0 %v1868
    %1996 = vmatpush1.bf16.msra.mxu0 %v1867
    %1997 = vmatprep.mubr.bf16.mxu0 %v1566
    %1998 = vmatmul.mubr.bf16.gmra.mrb[0].mxu0 %v1565
    %v1999 = vpop.f32.mrb[0].mxu0
    %v2000 = vadd.f32 %v1638, %v1999
    %v2001 = vpop.f32.mrb[0].mxu0
    %v2002 = vadd.f32 %v1642, %v2001
    %v2003 = vpop.f32.mrb[0].mxu0
    %v2004 = vpop.f32.mrb[0].mxu0
    %2005 = vdwg.mxu0
    %2006 = vmatprep.subr.bf16.mxu0 %v1870
    %2007 = vmatpush1.bf16.msra.mxu0 %v1869
    %2008 = vmatprep.subr.bf16.mxu0 %v1872
    %2009 = vmatpush1.bf16.msra.mxu0 %v1871
    %2010 = vmatprep.subr.bf16.mxu0 %v1874
    %2011 = vmatpush1.bf16.msra.mxu0 %v1873
    %2012 = vmatprep.subr.bf16.mxu0 %v1876
    %2013 = vmatpush1.bf16.msra.mxu0 %v1875
    %2014 = vmatprep.subr.bf16.mxu0 %v1878
    %2015 = vmatpush1.bf16.msra.mxu0 %v1877
    %2016 = vmatprep.subr.bf16.mxu0 %v1880
    %2017 = vmatpush1.bf16.msra.mxu0 %v1879
    %2018 = vmatprep.subr.bf16.mxu0 %v1882
    %2019 = vmatpush1.bf16.msra.mxu0 %v1881
    %2020 = vmatprep.subr.bf16.mxu0 %v1884
    %2021 = vmatpush1.bf16.msra.mxu0 %v1883
    %2022 = vmatprep.subr.bf16.mxu0 %v1886
    %2023 = vmatpush1.bf16.msra.mxu0 %v1885
    %2024 = vmatprep.subr.bf16.mxu0 %v1888
    %2025 = vmatpush1.bf16.msra.mxu0 %v1887
    %2026 = vmatprep.subr.bf16.mxu0 %v1890
    %2027 = vmatpush1.bf16.msra.mxu0 %v1889
    %2028 = vmatprep.subr.bf16.mxu0 %v1892
    %2029 = vmatpush1.bf16.msra.mxu0 %v1891
    %2030 = vmatprep.subr.bf16.mxu0 %v1894
    %2031 = vmatpush1.bf16.msra.mxu0 %v1893
    %2032 = vmatprep.subr.bf16.mxu0 %v1896
    %2033 = vmatpush1.bf16.msra.mxu0 %v1895
    %2034 = vmatprep.subr.bf16.mxu0 %v1898
    %2035 = vmatpush1.bf16.msra.mxu0 %v1897
    %2036 = vmatprep.subr.bf16.mxu0 %v1900
    %2037 = vmatpush1.bf16.msra.mxu0 %v1899
    %2038 = vmatprep.mubr.bf16.mxu0 %v1568
    %2039 = vmatmul.mubr.bf16.gmra.mrb[0].mxu0 %v1567
    %v2040 = vpop.f32.mrb[0].mxu0
    %v2041 = vadd.f32 %v2000, %v2040
    %v2042 = vpop.f32.mrb[0].mxu0
    %v2043 = vadd.f32 %v2002, %v2042
    %v2044 = vpop.f32.mrb[0].mxu0
    %v2045 = vpop.f32.mrb[0].mxu0
    %2046 = vdwg.mxu0
    %v2047 = vmul.f32 %v2041, 0.2
    %v2048 = vmul.f32 %v2043, 0.2
    %v2049 = vmax.f32 %v2041, %v2047
    %v2050 = vmax.f32 %v2043, %v2048
    %v2051 = vpack.c.bf16 %v2049, %v2049
    %v2052 = vpack.c.bf16 %v2050, %v2050
    %v2053 = vld [vmem:[%s5] sm:$0xf]
    %v2054 = vld [vmem:[%s5 + $0x4] sm:$0xf]
    %v2055 = vld [vmem:[%s5 + $0x8] sm:$0xf]
    %v2056 = vld [vmem:[%s5 + $0xc] sm:$0xf]
    %v2057 = vld [vmem:[%s5 + $0x10] sm:$0xf]
    %v2058 = vld [vmem:[%s5 + $0x14] sm:$0xf]
    %v2059 = vld [vmem:[%s5 + $0x18] sm:$0xf]
    %v2060 = vld [vmem:[%s5 + $0x1c] sm:$0xf]
    %v2061 = vld [vmem:[%s5 + $0x20] sm:$0xf]
    %v2062 = vld [vmem:[%s5 + $0x24] sm:$0xf]
    %v2063 = vld [vmem:[%s5 + $0x28] sm:$0xf]
    %v2064 = vld [vmem:[%s5 + $0x2c] sm:$0xf]
    %v2065 = vld [vmem:[%s5 + $0x30] sm:$0xf]
    %v2066 = vld [vmem:[%s5 + $0x34] sm:$0xf]
    %v2067 = vld [vmem:[%s5 + $0x38] sm:$0xf]
    %v2068 = vld [vmem:[%s5 + $0x3c] sm:$0xf]
    %v2069 = vld [vmem:[%s5 + $0x40] sm:$0xf]
    %v2070 = vld [vmem:[%s5 + $0x44] sm:$0xf]
    %v2071 = vld [vmem:[%s5 + $0x48] sm:$0xf]
    %v2072 = vld [vmem:[%s5 + $0x4c] sm:$0xf]
    %v2073 = vld [vmem:[%s5 + $0x50] sm:$0xf]
    %v2074 = vld [vmem:[%s5 + $0x54] sm:$0xf]
    %v2075 = vld [vmem:[%s5 + $0x58] sm:$0xf]
    %v2076 = vld [vmem:[%s5 + $0x5c] sm:$0xf]
    %v2077 = vld [vmem:[%s5 + $0x60] sm:$0xf]
    %v2078 = vld [vmem:[%s5 + $0x64] sm:$0xf]
    %v2079 = vld [vmem:[%s5 + $0x68] sm:$0xf]
    %v2080 = vld [vmem:[%s5 + $0x6c] sm:$0xf]
    %v2081 = vld [vmem:[%s5 + $0x70] sm:$0xf]
    %v2082 = vld [vmem:[%s5 + $0x74] sm:$0xf]
    %v2083 = vld [vmem:[%s5 + $0x78] sm:$0xf]
    %v2084 = vld [vmem:[%s5 + $0x7c] sm:$0xf]
    %v2085 = vld [vmem:[%s6] sm:$0x1]
    %v2087 = vlaneseq
    %v2088 = vshrl.u32 %v2087, 7
    %v2089 = vsub.s32 0, %v2088
    %v2090 = vrot.slane %v2085, %v2089
    %v2124 = vunpack.c.l.b16 %v2053
    %v2125 = vunpack.c.l.b16 %v2054
    %v2126 = vunpack.c.l.b16 %v2055
    %v2127 = vunpack.c.l.b16 %v2056
    %v2128 = vunpack.c.l.b16 %v2057
    %v2129 = vunpack.c.l.b16 %v2058
    %v2130 = vunpack.c.l.b16 %v2059
    %v2131 = vunpack.c.l.b16 %v2060
    %v2132 = vunpack.c.l.b16 %v2061
    %v2133 = vunpack.c.l.b16 %v2062
    %v2134 = vunpack.c.l.b16 %v2063
    %v2135 = vunpack.c.l.b16 %v2064
    %v2136 = vunpack.c.l.b16 %v2065
    %v2137 = vunpack.c.l.b16 %v2066
    %v2138 = vunpack.c.l.b16 %v2067
    %v2139 = vunpack.c.l.b16 %v2068
    %v2140 = vunpack.c.l.b16 %v2069
    %v2141 = vunpack.c.l.b16 %v2070
    %v2142 = vunpack.c.l.b16 %v2071
    %v2143 = vunpack.c.l.b16 %v2072
    %v2144 = vunpack.c.l.b16 %v2073
    %v2145 = vunpack.c.l.b16 %v2074
    %v2146 = vunpack.c.l.b16 %v2075
    %v2147 = vunpack.c.l.b16 %v2076
    %v2148 = vunpack.c.l.b16 %v2077
    %v2149 = vunpack.c.l.b16 %v2078
    %v2150 = vunpack.c.l.b16 %v2079
    %v2151 = vunpack.c.l.b16 %v2080
    %v2152 = vunpack.c.l.b16 %v2081
    %v2153 = vunpack.c.l.b16 %v2082
    %v2154 = vunpack.c.l.b16 %v2083
    %v2155 = vunpack.c.l.b16 %v2084
    %v2156 = vpack.c.b16 %v2125, %v2124
    %v2157 = vpack.c.b16 %v2127, %v2126
    %v2158 = vpack.c.b16 %v2129, %v2128
    %v2159 = vpack.c.b16 %v2131, %v2130
    %v2160 = vpack.c.b16 %v2133, %v2132
    %v2161 = vpack.c.b16 %v2135, %v2134
    %v2162 = vpack.c.b16 %v2137, %v2136
    %v2163 = vpack.c.b16 %v2139, %v2138
    %v2164 = vpack.c.b16 %v2141, %v2140
    %v2165 = vpack.c.b16 %v2143, %v2142
    %v2166 = vpack.c.b16 %v2145, %v2144
    %v2167 = vpack.c.b16 %v2147, %v2146
    %v2168 = vpack.c.b16 %v2149, %v2148
    %v2169 = vpack.c.b16 %v2151, %v2150
    %v2170 = vpack.c.b16 %v2153, %v2152
    %v2171 = vpack.c.b16 %v2155, %v2154
    %2188 = vmatprep.subr.bf16.mxu0 0
    %2189 = vmatpush1.bf16.msra.mxu0 %v2156
    %2190 = vmatprep.subr.bf16.mxu0 0
    %2191 = vmatpush1.bf16.msra.mxu0 %v2157
    %2192 = vmatprep.subr.bf16.mxu0 0
    %2193 = vmatpush1.bf16.msra.mxu0 %v2158
    %2194 = vmatprep.subr.bf16.mxu0 0
    %2195 = vmatpush1.bf16.msra.mxu0 %v2159
    %2196 = vmatprep.subr.bf16.mxu0 0
    %2197 = vmatpush1.bf16.msra.mxu0 %v2160
    %2198 = vmatprep.subr.bf16.mxu0 0
    %2199 = vmatpush1.bf16.msra.mxu0 %v2161
    %2200 = vmatprep.subr.bf16.mxu0 0
    %2201 = vmatpush1.bf16.msra.mxu0 %v2162
    %2202 = vmatprep.subr.bf16.mxu0 0
    %2203 = vmatpush1.bf16.msra.mxu0 %v2163
    %2204 = vmatprep.subr.bf16.mxu0 0
    %2205 = vmatpush1.bf16.msra.mxu0 %v2164
    %2206 = vmatprep.subr.bf16.mxu0 0
    %2207 = vmatpush1.bf16.msra.mxu0 %v2165
    %2208 = vmatprep.subr.bf16.mxu0 0
    %2209 = vmatpush1.bf16.msra.mxu0 %v2166
    %2210 = vmatprep.subr.bf16.mxu0 0
    %2211 = vmatpush1.bf16.msra.mxu0 %v2167
    %2212 = vmatprep.subr.bf16.mxu0 0
    %2213 = vmatpush1.bf16.msra.mxu0 %v2168
    %2214 = vmatprep.subr.bf16.mxu0 0
    %2215 = vmatpush1.bf16.msra.mxu0 %v2169
    %2216 = vmatprep.subr.bf16.mxu0 0
    %2217 = vmatpush1.bf16.msra.mxu0 %v2170
    %2218 = vmatprep.subr.bf16.mxu0 0
    %2219 = vmatpush1.bf16.msra.mxu0 %v2171
    %2220 = vmatprep.mubr.bf16.mxu0 %v2052
    %2221 = vmatmul.mubr.bf16.gmra.mrb[0].mxu0 %v2051
    %v2222 = vpop.f32.mrb[0].mxu0
    %v2223 = vadd.f32 %v2090, %v2222
    %v2224 = vpop.f32.mrb[0].mxu0
    %v2225 = vpop.f32.mrb[0].mxu0
    %v2226 = vpop.f32.mrb[0].mxu0
    %2227 = vdwg.mxu0
    %v2228 = vmul.f32 %v2223, 0.2
    %v2229 = vmax.f32 %v2223, %v2228
    %v2230 = vpack.c.bf16 %v2229, %v2229
    %v2231 = vld [vmem:[#allocation6] sm:$0xff]
    %v2232 = vld [vmem:[#allocation6 + $0x8] sm:$0xff]
    %v2233 = vld [vmem:[#allocation6 + $0x10] sm:$0xff]
    %v2234 = vld [vmem:[#allocation6 + $0x18] sm:$0xff]
    %v2235 = vld [vmem:[#allocation6 + $0x20] sm:$0xff]
    %v2236 = vld [vmem:[#allocation6 + $0x28] sm:$0xff]
    %v2237 = vld [vmem:[#allocation6 + $0x30] sm:$0xff]
    %v2238 = vld [vmem:[#allocation6 + $0x38] sm:$0xff]
    %v2239 = vld [vmem:[#allocation6 + $0x40] sm:$0xff]
    %v2240 = vld [vmem:[#allocation6 + $0x48] sm:$0xff]
    %v2241 = vld [vmem:[#allocation6 + $0x50] sm:$0xff]
    %v2242 = vld [vmem:[#allocation6 + $0x58] sm:$0xff]
    %v2243 = vld [vmem:[#allocation6 + $0x60] sm:$0xff]
    %v2244 = vld [vmem:[#allocation6 + $0x68] sm:$0xff]
    %v2245 = vld [vmem:[#allocation6 + $0x70] sm:$0xff]
    %v2246 = vld [vmem:[#allocation6 + $0x78] sm:$0xff]
    %v2247 = vld [vmem:[%s8] sm:$0x3]
    %v2249 = vlaneseq
    %v2250 = vshrl.u32 %v2249, 7
    %v2251 = vsub.s32 0, %v2250
    %v2252 = vrot.slane %v2247, %v2251
    %v2253 = vlaneseq
    %v2254 = vshrl.u32 %v2253, 7
    %v2255 = vsub.s32 1, %v2254
    %v2256 = vrot.slane %v2247, %v2255
    %v2275 = vunpack.c.l.b16 %v2231
    %v2276 = vunpack.c.h.b16 %v2231
    %v2277 = vunpack.c.l.b16 %v2232
    %v2278 = vunpack.c.h.b16 %v2232
    %v2279 = vunpack.c.l.b16 %v2233
    %v2280 = vunpack.c.h.b16 %v2233
    %v2281 = vunpack.c.l.b16 %v2234
    %v2282 = vunpack.c.h.b16 %v2234
    %v2283 = vunpack.c.l.b16 %v2235
    %v2284 = vunpack.c.h.b16 %v2235
    %v2285 = vunpack.c.l.b16 %v2236
    %v2286 = vunpack.c.h.b16 %v2236
    %v2287 = vunpack.c.l.b16 %v2237
    %v2288 = vunpack.c.h.b16 %v2237
    %v2289 = vunpack.c.l.b16 %v2238
    %v2290 = vunpack.c.h.b16 %v2238
    %v2291 = vunpack.c.l.b16 %v2239
    %v2292 = vunpack.c.h.b16 %v2239
    %v2293 = vunpack.c.l.b16 %v2240
    %v2294 = vunpack.c.h.b16 %v2240
    %v2295 = vunpack.c.l.b16 %v2241
    %v2296 = vunpack.c.h.b16 %v2241
    %v2297 = vunpack.c.l.b16 %v2242
    %v2298 = vunpack.c.h.b16 %v2242
    %v2299 = vunpack.c.l.b16 %v2243
    %v2300 = vunpack.c.h.b16 %v2243
    %v2301 = vunpack.c.l.b16 %v2244
    %v2302 = vunpack.c.h.b16 %v2244
    %v2303 = vunpack.c.l.b16 %v2245
    %v2304 = vunpack.c.h.b16 %v2245
    %v2305 = vunpack.c.l.b16 %v2246
    %v2306 = vunpack.c.h.b16 %v2246
    %v2307 = vpack.c.b16 %v2277, %v2275
    %v2308 = vpack.c.b16 %v2278, %v2276
    %v2309 = vpack.c.b16 %v2281, %v2279
    %v2310 = vpack.c.b16 %v2282, %v2280
    %v2311 = vpack.c.b16 %v2285, %v2283
    %v2312 = vpack.c.b16 %v2286, %v2284
    %v2313 = vpack.c.b16 %v2289, %v2287
    %v2314 = vpack.c.b16 %v2290, %v2288
    %v2315 = vpack.c.b16 %v2293, %v2291
    %v2316 = vpack.c.b16 %v2294, %v2292
    %v2317 = vpack.c.b16 %v2297, %v2295
    %v2318 = vpack.c.b16 %v2298, %v2296
    %v2319 = vpack.c.b16 %v2301, %v2299
    %v2320 = vpack.c.b16 %v2302, %v2300
    %v2321 = vpack.c.b16 %v2305, %v2303
    %v2322 = vpack.c.b16 %v2306, %v2304
    %2339 = vmatprep.subr.bf16.mxu0 %v2308
    %2340 = vmatpush1.bf16.msra.mxu0 %v2307
    %2341 = vmatprep.subr.bf16.mxu0 %v2310
    %2342 = vmatpush1.bf16.msra.mxu0 %v2309
    %2343 = vmatprep.subr.bf16.mxu0 %v2312
    %2344 = vmatpush1.bf16.msra.mxu0 %v2311
    %2345 = vmatprep.subr.bf16.mxu0 %v2314
    %2346 = vmatpush1.bf16.msra.mxu0 %v2313
    %2347 = vmatprep.subr.bf16.mxu0 %v2316
    %2348 = vmatpush1.bf16.msra.mxu0 %v2315
    %2349 = vmatprep.subr.bf16.mxu0 %v2318
    %2350 = vmatpush1.bf16.msra.mxu0 %v2317
    %2351 = vmatprep.subr.bf16.mxu0 %v2320
    %2352 = vmatpush1.bf16.msra.mxu0 %v2319
    %2353 = vmatprep.subr.bf16.mxu0 %v2322
    %2354 = vmatpush1.bf16.msra.mxu0 %v2321
    %2355 = vmatprep.subr.bf16.mxu0 0
    %2356 = vmatpush1.bf16.msra.mxu0 0
    %2357 = vmatprep.subr.bf16.mxu0 0
    %2358 = vmatpush1.bf16.msra.mxu0 0
    %2359 = vmatprep.subr.bf16.mxu0 0
    %2360 = vmatpush1.bf16.msra.mxu0 0
    %2361 = vmatprep.subr.bf16.mxu0 0
    %2362 = vmatpush1.bf16.msra.mxu0 0
    %2363 = vmatprep.subr.bf16.mxu0 0
    %2364 = vmatpush1.bf16.msra.mxu0 0
    %2365 = vmatprep.subr.bf16.mxu0 0
    %2366 = vmatpush1.bf16.msra.mxu0 0
    %2367 = vmatprep.subr.bf16.mxu0 0
    %2368 = vmatpush1.bf16.msra.mxu0 0
    %2369 = vmatprep.subr.bf16.mxu0 0
    %2370 = vmatpush1.bf16.msra.mxu0 0
    %2371 = vmatprep.mubr.bf16.mxu0 0
    %2372 = vmatmul.mubr.bf16.gmra.mrb[0].mxu0 %v2230
    %v2373 = vpop.f32.mrb[0].mxu0
    %v2374 = vadd.f32 %v2252, %v2373
    %v2375 = vpop.f32.mrb[0].mxu0
    %v2376 = vadd.f32 %v2256, %v2375
    %v2377 = vpop.f32.mrb[0].mxu0
    %v2378 = vpop.f32.mrb[0].mxu0
    %2379 = vdwg.mxu0
    %v2380 = vmul.f32 %v2374, 0.2
    %v2381 = vmul.f32 %v2376, 0.2
    %v2382 = vmax.f32 %v2374, %v2380
    %v2383 = vmax.f32 %v2376, %v2381
    %v2384 = vpack.c.bf16 %v2382, %v2382
    %v2385 = vpack.c.bf16 %v2383, %v2383
    %v2386 = vld [vmem:[#allocation7] sm:$0xff]
    %v2387 = vld [vmem:[#allocation7 + $0x8] sm:$0xff]
    %v2388 = vld [vmem:[#allocation7 + $0x10] sm:$0xff]
    %v2389 = vld [vmem:[#allocation7 + $0x18] sm:$0xff]
    %v2390 = vld [vmem:[#allocation7 + $0x20] sm:$0xff]
    %v2391 = vld [vmem:[#allocation7 + $0x28] sm:$0xff]
    %v2392 = vld [vmem:[#allocation7 + $0x30] sm:$0xff]
    %v2393 = vld [vmem:[#allocation7 + $0x38] sm:$0xff]
    %v2394 = vld [vmem:[#allocation7 + $0x40] sm:$0xff]
    %v2395 = vld [vmem:[#allocation7 + $0x48] sm:$0xff]
    %v2396 = vld [vmem:[#allocation7 + $0x50] sm:$0xff]
    %v2397 = vld [vmem:[#allocation7 + $0x58] sm:$0xff]
    %v2398 = vld [vmem:[#allocation7 + $0x60] sm:$0xff]
    %v2399 = vld [vmem:[#allocation7 + $0x68] sm:$0xff]
    %v2400 = vld [vmem:[#allocation7 + $0x70] sm:$0xff]
    %v2401 = vld [vmem:[#allocation7 + $0x78] sm:$0xff]
    %v2402 = vld [vmem:[#allocation7 + $0x80] sm:$0xff]
    %v2403 = vld [vmem:[#allocation7 + $0x88] sm:$0xff]
    %v2404 = vld [vmem:[#allocation7 + $0x90] sm:$0xff]
    %v2405 = vld [vmem:[#allocation7 + $0x98] sm:$0xff]
    %v2406 = vld [vmem:[#allocation7 + $0xa0] sm:$0xff]
    %v2407 = vld [vmem:[#allocation7 + $0xa8] sm:$0xff]
    %v2408 = vld [vmem:[#allocation7 + $0xb0] sm:$0xff]
    %v2409 = vld [vmem:[#allocation7 + $0xb8] sm:$0xff]
    %v2410 = vld [vmem:[#allocation7 + $0xc0] sm:$0xff]
    %v2411 = vld [vmem:[#allocation7 + $0xc8] sm:$0xff]
    %v2412 = vld [vmem:[#allocation7 + $0xd0] sm:$0xff]
    %v2413 = vld [vmem:[#allocation7 + $0xd8] sm:$0xff]
    %v2414 = vld [vmem:[#allocation7 + $0xe0] sm:$0xff]
    %v2415 = vld [vmem:[#allocation7 + $0xe8] sm:$0xff]
    %v2416 = vld [vmem:[#allocation7 + $0xf0] sm:$0xff]
    %v2417 = vld [vmem:[#allocation7 + $0xf8] sm:$0xff]
    %v2418 = vld [vmem:[#allocation7 + $0x100] sm:$0xff]
    %v2419 = vld [vmem:[#allocation7 + $0x108] sm:$0xff]
    %v2420 = vld [vmem:[#allocation7 + $0x110] sm:$0xff]
    %v2421 = vld [vmem:[#allocation7 + $0x118] sm:$0xff]
    %v2422 = vld [vmem:[#allocation7 + $0x120] sm:$0xff]
    %v2423 = vld [vmem:[#allocation7 + $0x128] sm:$0xff]
    %v2424 = vld [vmem:[#allocation7 + $0x130] sm:$0xff]
    %v2425 = vld [vmem:[#allocation7 + $0x138] sm:$0xff]
    %v2426 = vld [vmem:[#allocation7 + $0x140] sm:$0xff]
    %v2427 = vld [vmem:[#allocation7 + $0x148] sm:$0xff]
    %v2428 = vld [vmem:[#allocation7 + $0x150] sm:$0xff]
    %v2429 = vld [vmem:[#allocation7 + $0x158] sm:$0xff]
    %v2430 = vld [vmem:[#allocation7 + $0x160] sm:$0xff]
    %v2431 = vld [vmem:[#allocation7 + $0x168] sm:$0xff]
    %v2432 = vld [vmem:[#allocation7 + $0x170] sm:$0xff]
    %v2433 = vld [vmem:[#allocation7 + $0x178] sm:$0xff]
    %v2434 = vld [vmem:[#allocation7 + $0x180] sm:$0xff]
    %v2435 = vld [vmem:[#allocation7 + $0x188] sm:$0xff]
    %v2436 = vld [vmem:[#allocation7 + $0x190] sm:$0xff]
    %v2437 = vld [vmem:[#allocation7 + $0x198] sm:$0xff]
    %v2438 = vld [vmem:[#allocation7 + $0x1a0] sm:$0xff]
    %v2439 = vld [vmem:[#allocation7 + $0x1a8] sm:$0xff]
    %v2440 = vld [vmem:[#allocation7 + $0x1b0] sm:$0xff]
    %v2441 = vld [vmem:[#allocation7 + $0x1b8] sm:$0xff]
    %v2442 = vld [vmem:[#allocation7 + $0x1c0] sm:$0xff]
    %v2443 = vld [vmem:[#allocation7 + $0x1c8] sm:$0xff]
    %v2444 = vld [vmem:[#allocation7 + $0x1d0] sm:$0xff]
    %v2445 = vld [vmem:[#allocation7 + $0x1d8] sm:$0xff]
    %v2446 = vld [vmem:[#allocation7 + $0x1e0] sm:$0xff]
    %v2447 = vld [vmem:[#allocation7 + $0x1e8] sm:$0xff]
    %v2448 = vld [vmem:[#allocation7 + $0x1f0] sm:$0xff]
    %v2449 = vld [vmem:[#allocation7 + $0x1f8] sm:$0xff]
    %v2450 = vld [vmem:[%s10] sm:$0xf]
    %v2452 = vlaneseq
    %v2453 = vshrl.u32 %v2452, 7
    %v2454 = vsub.s32 0, %v2453
    %v2455 = vrot.slane %v2450, %v2454
    %v2456 = vlaneseq
    %v2457 = vshrl.u32 %v2456, 7
    %v2458 = vsub.s32 1, %v2457
    %v2459 = vrot.slane %v2450, %v2458
    %v2460 = vlaneseq
    %v2461 = vshrl.u32 %v2460, 7
    %v2462 = vsub.s32 2, %v2461
    %v2463 = vrot.slane %v2450, %v2462
    %v2464 = vlaneseq
    %v2465 = vshrl.u32 %v2464, 7
    %v2466 = vsub.s32 3, %v2465
    %v2467 = vrot.slane %v2450, %v2466
    %v2536 = vunpack.c.l.b16 %v2386
    %v2537 = vunpack.c.h.b16 %v2386
    %v2538 = vunpack.c.l.b16 %v2387
    %v2539 = vunpack.c.h.b16 %v2387
    %v2540 = vunpack.c.l.b16 %v2388
    %v2541 = vunpack.c.h.b16 %v2388
    %v2542 = vunpack.c.l.b16 %v2389
    %v2543 = vunpack.c.h.b16 %v2389
    %v2544 = vunpack.c.l.b16 %v2390
    %v2545 = vunpack.c.h.b16 %v2390
    %v2546 = vunpack.c.l.b16 %v2391
    %v2547 = vunpack.c.h.b16 %v2391
    %v2548 = vunpack.c.l.b16 %v2392
    %v2549 = vunpack.c.h.b16 %v2392
    %v2550 = vunpack.c.l.b16 %v2393
    %v2551 = vunpack.c.h.b16 %v2393
    %v2552 = vunpack.c.l.b16 %v2394
    %v2553 = vunpack.c.h.b16 %v2394
    %v2554 = vunpack.c.l.b16 %v2395
    %v2555 = vunpack.c.h.b16 %v2395
    %v2556 = vunpack.c.l.b16 %v2396
    %v2557 = vunpack.c.h.b16 %v2396
    %v2558 = vunpack.c.l.b16 %v2397
    %v2559 = vunpack.c.h.b16 %v2397
    %v2560 = vunpack.c.l.b16 %v2398
    %v2561 = vunpack.c.h.b16 %v2398
    %v2562 = vunpack.c.l.b16 %v2399
    %v2563 = vunpack.c.h.b16 %v2399
    %v2564 = vunpack.c.l.b16 %v2400
    %v2565 = vunpack.c.h.b16 %v2400
    %v2566 = vunpack.c.l.b16 %v2401
    %v2567 = vunpack.c.h.b16 %v2401
    %v2568 = vunpack.c.l.b16 %v2402
    %v2569 = vunpack.c.h.b16 %v2402
    %v2570 = vunpack.c.l.b16 %v2403
    %v2571 = vunpack.c.h.b16 %v2403
    %v2572 = vunpack.c.l.b16 %v2404
    %v2573 = vunpack.c.h.b16 %v2404
    %v2574 = vunpack.c.l.b16 %v2405
    %v2575 = vunpack.c.h.b16 %v2405
    %v2576 = vunpack.c.l.b16 %v2406
    %v2577 = vunpack.c.h.b16 %v2406
    %v2578 = vunpack.c.l.b16 %v2407
    %v2579 = vunpack.c.h.b16 %v2407
    %v2580 = vunpack.c.l.b16 %v2408
    %v2581 = vunpack.c.h.b16 %v2408
    %v2582 = vunpack.c.l.b16 %v2409
    %v2583 = vunpack.c.h.b16 %v2409
    %v2584 = vunpack.c.l.b16 %v2410
    %v2585 = vunpack.c.h.b16 %v2410
    %v2586 = vunpack.c.l.b16 %v2411
    %v2587 = vunpack.c.h.b16 %v2411
    %v2588 = vunpack.c.l.b16 %v2412
    %v2589 = vunpack.c.h.b16 %v2412
    %v2590 = vunpack.c.l.b16 %v2413
    %v2591 = vunpack.c.h.b16 %v2413
    %v2592 = vunpack.c.l.b16 %v2414
    %v2593 = vunpack.c.h.b16 %v2414
    %v2594 = vunpack.c.l.b16 %v2415
    %v2595 = vunpack.c.h.b16 %v2415
    %v2596 = vunpack.c.l.b16 %v2416
    %v2597 = vunpack.c.h.b16 %v2416
    %v2598 = vunpack.c.l.b16 %v2417
    %v2599 = vunpack.c.h.b16 %v2417
    %v2600 = vunpack.c.l.b16 %v2418
    %v2601 = vunpack.c.h.b16 %v2418
    %v2602 = vunpack.c.l.b16 %v2419
    %v2603 = vunpack.c.h.b16 %v2419
    %v2604 = vunpack.c.l.b16 %v2420
    %v2605 = vunpack.c.h.b16 %v2420
    %v2606 = vunpack.c.l.b16 %v2421
    %v2607 = vunpack.c.h.b16 %v2421
    %v2608 = vunpack.c.l.b16 %v2422
    %v2609 = vunpack.c.h.b16 %v2422
    %v2610 = vunpack.c.l.b16 %v2423
    %v2611 = vunpack.c.h.b16 %v2423
    %v2612 = vunpack.c.l.b16 %v2424
    %v2613 = vunpack.c.h.b16 %v2424
    %v2614 = vunpack.c.l.b16 %v2425
    %v2615 = vunpack.c.h.b16 %v2425
    %v2616 = vunpack.c.l.b16 %v2426
    %v2617 = vunpack.c.h.b16 %v2426
    %v2618 = vunpack.c.l.b16 %v2427
    %v2619 = vunpack.c.h.b16 %v2427
    %v2620 = vunpack.c.l.b16 %v2428
    %v2621 = vunpack.c.h.b16 %v2428
    %v2622 = vunpack.c.l.b16 %v2429
    %v2623 = vunpack.c.h.b16 %v2429
    %v2624 = vunpack.c.l.b16 %v2430
    %v2625 = vunpack.c.h.b16 %v2430
    %v2626 = vunpack.c.l.b16 %v2431
    %v2627 = vunpack.c.h.b16 %v2431
    %v2628 = vunpack.c.l.b16 %v2432
    %v2629 = vunpack.c.h.b16 %v2432
    %v2630 = vunpack.c.l.b16 %v2433
    %v2631 = vunpack.c.h.b16 %v2433
    %v2632 = vunpack.c.l.b16 %v2434
    %v2633 = vunpack.c.h.b16 %v2434
    %v2634 = vunpack.c.l.b16 %v2435
    %v2635 = vunpack.c.h.b16 %v2435
    %v2636 = vunpack.c.l.b16 %v2436
    %v2637 = vunpack.c.h.b16 %v2436
    %v2638 = vunpack.c.l.b16 %v2437
    %v2639 = vunpack.c.h.b16 %v2437
    %v2640 = vunpack.c.l.b16 %v2438
    %v2641 = vunpack.c.h.b16 %v2438
    %v2642 = vunpack.c.l.b16 %v2439
    %v2643 = vunpack.c.h.b16 %v2439
    %v2644 = vunpack.c.l.b16 %v2440
    %v2645 = vunpack.c.h.b16 %v2440
    %v2646 = vunpack.c.l.b16 %v2441
    %v2647 = vunpack.c.h.b16 %v2441
    %v2648 = vunpack.c.l.b16 %v2442
    %v2649 = vunpack.c.h.b16 %v2442
    %v2650 = vunpack.c.l.b16 %v2443
    %v2651 = vunpack.c.h.b16 %v2443
    %v2652 = vunpack.c.l.b16 %v2444
    %v2653 = vunpack.c.h.b16 %v2444
    %v2654 = vunpack.c.l.b16 %v2445
    %v2655 = vunpack.c.h.b16 %v2445
    %v2656 = vunpack.c.l.b16 %v2446
    %v2657 = vunpack.c.h.b16 %v2446
    %v2658 = vunpack.c.l.b16 %v2447
    %v2659 = vunpack.c.h.b16 %v2447
    %v2660 = vunpack.c.l.b16 %v2448
    %v2661 = vunpack.c.h.b16 %v2448
    %v2662 = vunpack.c.l.b16 %v2449
    %v2663 = vunpack.c.h.b16 %v2449
    %v2664 = vpack.c.b16 %v2540, %v2536
    %v2665 = vpack.c.b16 %v2541, %v2537
    %v2666 = vpack.c.b16 %v2542, %v2538
    %v2667 = vpack.c.b16 %v2543, %v2539
    %v2668 = vpack.c.b16 %v2548, %v2544
    %v2669 = vpack.c.b16 %v2549, %v2545
    %v2670 = vpack.c.b16 %v2550, %v2546
    %v2671 = vpack.c.b16 %v2551, %v2547
    %v2672 = vpack.c.b16 %v2556, %v2552
    %v2673 = vpack.c.b16 %v2557, %v2553
    %v2674 = vpack.c.b16 %v2558, %v2554
    %v2675 = vpack.c.b16 %v2559, %v2555
    %v2676 = vpack.c.b16 %v2564, %v2560
    %v2677 = vpack.c.b16 %v2565, %v2561
    %v2678 = vpack.c.b16 %v2566, %v2562
    %v2679 = vpack.c.b16 %v2567, %v2563
    %v2680 = vpack.c.b16 %v2572, %v2568
    %v2681 = vpack.c.b16 %v2573, %v2569
    %v2682 = vpack.c.b16 %v2574, %v2570
    %v2683 = vpack.c.b16 %v2575, %v2571
    %v2684 = vpack.c.b16 %v2580, %v2576
    %v2685 = vpack.c.b16 %v2581, %v2577
    %v2686 = vpack.c.b16 %v2582, %v2578
    %v2687 = vpack.c.b16 %v2583, %v2579
    %v2688 = vpack.c.b16 %v2588, %v2584
    %v2689 = vpack.c.b16 %v2589, %v2585
    %v2690 = vpack.c.b16 %v2590, %v2586
    %v2691 = vpack.c.b16 %v2591, %v2587
    %v2692 = vpack.c.b16 %v2596, %v2592
    %v2693 = vpack.c.b16 %v2597, %v2593
    %v2694 = vpack.c.b16 %v2598, %v2594
    %v2695 = vpack.c.b16 %v2599, %v2595
    %v2696 = vpack.c.b16 %v2604, %v2600
    %v2697 = vpack.c.b16 %v2605, %v2601
    %v2698 = vpack.c.b16 %v2606, %v2602
    %v2699 = vpack.c.b16 %v2607, %v2603
    %v2700 = vpack.c.b16 %v2612, %v2608
    %v2701 = vpack.c.b16 %v2613, %v2609
    %v2702 = vpack.c.b16 %v2614, %v2610
    %v2703 = vpack.c.b16 %v2615, %v2611
    %v2704 = vpack.c.b16 %v2620, %v2616
    %v2705 = vpack.c.b16 %v2621, %v2617
    %v2706 = vpack.c.b16 %v2622, %v2618
    %v2707 = vpack.c.b16 %v2623, %v2619
    %v2708 = vpack.c.b16 %v2628, %v2624
    %v2709 = vpack.c.b16 %v2629, %v2625
    %v2710 = vpack.c.b16 %v2630, %v2626
    %v2711 = vpack.c.b16 %v2631, %v2627
    %v2712 = vpack.c.b16 %v2636, %v2632
    %v2713 = vpack.c.b16 %v2637, %v2633
    %v2714 = vpack.c.b16 %v2638, %v2634
    %v2715 = vpack.c.b16 %v2639, %v2635
    %v2716 = vpack.c.b16 %v2644, %v2640
    %v2717 = vpack.c.b16 %v2645, %v2641
    %v2718 = vpack.c.b16 %v2646, %v2642
    %v2719 = vpack.c.b16 %v2647, %v2643
    %v2720 = vpack.c.b16 %v2652, %v2648
    %v2721 = vpack.c.b16 %v2653, %v2649
    %v2722 = vpack.c.b16 %v2654, %v2650
    %v2723 = vpack.c.b16 %v2655, %v2651
    %v2724 = vpack.c.b16 %v2660, %v2656
    %v2725 = vpack.c.b16 %v2661, %v2657
    %v2726 = vpack.c.b16 %v2662, %v2658
    %v2727 = vpack.c.b16 %v2663, %v2659
    %2792 = vmatprep.subr.bf16.mxu0 %v2665
    %2793 = vmatpush1.bf16.msra.mxu0 %v2664
    %2794 = vmatprep.subr.bf16.mxu0 %v2669
    %2795 = vmatpush1.bf16.msra.mxu0 %v2668
    %2796 = vmatprep.subr.bf16.mxu0 %v2673
    %2797 = vmatpush1.bf16.msra.mxu0 %v2672
    %2798 = vmatprep.subr.bf16.mxu0 %v2677
    %2799 = vmatpush1.bf16.msra.mxu0 %v2676
    %2800 = vmatprep.subr.bf16.mxu0 %v2681
    %2801 = vmatpush1.bf16.msra.mxu0 %v2680
    %2802 = vmatprep.subr.bf16.mxu0 %v2685
    %2803 = vmatpush1.bf16.msra.mxu0 %v2684
    %2804 = vmatprep.subr.bf16.mxu0 %v2689
    %2805 = vmatpush1.bf16.msra.mxu0 %v2688
    %2806 = vmatprep.subr.bf16.mxu0 %v2693
    %2807 = vmatpush1.bf16.msra.mxu0 %v2692
    %2808 = vmatprep.subr.bf16.mxu0 %v2697
    %2809 = vmatpush1.bf16.msra.mxu0 %v2696
    %2810 = vmatprep.subr.bf16.mxu0 %v2701
    %2811 = vmatpush1.bf16.msra.mxu0 %v2700
    %2812 = vmatprep.subr.bf16.mxu0 %v2705
    %2813 = vmatpush1.bf16.msra.mxu0 %v2704
    %2814 = vmatprep.subr.bf16.mxu0 %v2709
    %2815 = vmatpush1.bf16.msra.mxu0 %v2708
    %2816 = vmatprep.subr.bf16.mxu0 %v2713
    %2817 = vmatpush1.bf16.msra.mxu0 %v2712
    %2818 = vmatprep.subr.bf16.mxu0 %v2717
    %2819 = vmatpush1.bf16.msra.mxu0 %v2716
    %2820 = vmatprep.subr.bf16.mxu0 %v2721
    %2821 = vmatpush1.bf16.msra.mxu0 %v2720
    %2822 = vmatprep.subr.bf16.mxu0 %v2725
    %2823 = vmatpush1.bf16.msra.mxu0 %v2724
    %2824 = vmatprep.mubr.bf16.mxu0 %v2385
    %2825 = vmatmul.mubr.bf16.gmra.mrb[0].mxu0 %v2384
    %v2826 = vpop.f32.mrb[0].mxu0
    %v2827 = vadd.f32 %v2455, %v2826
    %v2828 = vpop.f32.mrb[0].mxu0
    %v2829 = vadd.f32 %v2459, %v2828
    %v2830 = vpop.f32.mrb[0].mxu0
    %v2831 = vpop.f32.mrb[0].mxu0
    %2832 = vdwg.mxu0
    %2833 = vmatprep.subr.bf16.mxu0 %v2667
    %2834 = vmatpush1.bf16.msra.mxu0 %v2666
    %2835 = vmatprep.subr.bf16.mxu0 %v2671
    %2836 = vmatpush1.bf16.msra.mxu0 %v2670
    %2837 = vmatprep.subr.bf16.mxu0 %v2675
    %2838 = vmatpush1.bf16.msra.mxu0 %v2674
    %2839 = vmatprep.subr.bf16.mxu0 %v2679
    %2840 = vmatpush1.bf16.msra.mxu0 %v2678
    %2841 = vmatprep.subr.bf16.mxu0 %v2683
    %2842 = vmatpush1.bf16.msra.mxu0 %v2682
    %2843 = vmatprep.subr.bf16.mxu0 %v2687
    %2844 = vmatpush1.bf16.msra.mxu0 %v2686
    %2845 = vmatprep.subr.bf16.mxu0 %v2691
    %2846 = vmatpush1.bf16.msra.mxu0 %v2690
    %2847 = vmatprep.subr.bf16.mxu0 %v2695
    %2848 = vmatpush1.bf16.msra.mxu0 %v2694
    %2849 = vmatprep.subr.bf16.mxu0 %v2699
    %2850 = vmatpush1.bf16.msra.mxu0 %v2698
    %2851 = vmatprep.subr.bf16.mxu0 %v2703
    %2852 = vmatpush1.bf16.msra.mxu0 %v2702
    %2853 = vmatprep.subr.bf16.mxu0 %v2707
    %2854 = vmatpush1.bf16.msra.mxu0 %v2706
    %2855 = vmatprep.subr.bf16.mxu0 %v2711
    %2856 = vmatpush1.bf16.msra.mxu0 %v2710
    %2857 = vmatprep.subr.bf16.mxu0 %v2715
    %2858 = vmatpush1.bf16.msra.mxu0 %v2714
    %2859 = vmatprep.subr.bf16.mxu0 %v2719
    %2860 = vmatpush1.bf16.msra.mxu0 %v2718
    %2861 = vmatprep.subr.bf16.mxu0 %v2723
    %2862 = vmatpush1.bf16.msra.mxu0 %v2722
    %2863 = vmatprep.subr.bf16.mxu0 %v2727
    %2864 = vmatpush1.bf16.msra.mxu0 %v2726
    %2865 = vmatprep.mubr.bf16.mxu0 %v2385
    %2866 = vmatmul.mubr.bf16.gmra.mrb[0].mxu0 %v2384
    %v2867 = vpop.f32.mrb[0].mxu0
    %v2868 = vadd.f32 %v2463, %v2867
    %v2869 = vpop.f32.mrb[0].mxu0
    %v2870 = vadd.f32 %v2467, %v2869
    %v2871 = vpop.f32.mrb[0].mxu0
    %v2872 = vpop.f32.mrb[0].mxu0
    %2873 = vdwg.mxu0
    %v2874 = vmul.f32 %v2827, 0.2
    %v2875 = vmul.f32 %v2829, 0.2
    %v2876 = vmul.f32 %v2868, 0.2
    %v2877 = vmul.f32 %v2870, 0.2
    %v2878 = vmax.f32 %v2827, %v2874
    %v2879 = vmax.f32 %v2829, %v2875
    %v2880 = vmax.f32 %v2868, %v2876
    %v2881 = vmax.f32 %v2870, %v2877
    %v2882 = vpack.c.bf16 %v2878, %v2878
    %v2883 = vpack.c.bf16 %v2879, %v2879
    %v2884 = vpack.c.bf16 %v2880, %v2880
    %v2885 = vpack.c.bf16 %v2881, %v2881
    %v2886 = vld [vmem:[#allocation9] sm:$0xff]
    %v2887 = vld [vmem:[#allocation9 + $0x8] sm:$0xff]
    %v2888 = vld [vmem:[#allocation9 + $0x10] sm:$0xff]
    %v2889 = vld [vmem:[#allocation9 + $0x18] sm:$0xff]
    %v2890 = vld [vmem:[#allocation9 + $0x20] sm:$0xff]
    %v2891 = vld [vmem:[#allocation9 + $0x28] sm:$0xff]
    %v2892 = vld [vmem:[#allocation9 + $0x30] sm:$0xff]
    %v2893 = vld [vmem:[#allocation9 + $0x38] sm:$0xff]
    %v2894 = vld [vmem:[#allocation9 + $0x40] sm:$0xff]
    %v2895 = vld [vmem:[#allocation9 + $0x48] sm:$0xff]
    %v2896 = vld [vmem:[#allocation9 + $0x50] sm:$0xff]
    %v2897 = vld [vmem:[#allocation9 + $0x58] sm:$0xff]
    %v2898 = vld [vmem:[#allocation9 + $0x60] sm:$0xff]
    %v2899 = vld [vmem:[#allocation9 + $0x68] sm:$0xff]
    %v2900 = vld [vmem:[#allocation9 + $0x70] sm:$0xff]
    %v2901 = vld [vmem:[#allocation9 + $0x78] sm:$0xff]
    %v2902 = vld [vmem:[#allocation9 + $0x80] sm:$0xff]
    %v2903 = vld [vmem:[#allocation9 + $0x88] sm:$0xff]
    %v2904 = vld [vmem:[#allocation9 + $0x90] sm:$0xff]
    %v2905 = vld [vmem:[#allocation9 + $0x98] sm:$0xff]
    %v2906 = vld [vmem:[#allocation9 + $0xa0] sm:$0xff]
    %v2907 = vld [vmem:[#allocation9 + $0xa8] sm:$0xff]
    %v2908 = vld [vmem:[#allocation9 + $0xb0] sm:$0xff]
    %v2909 = vld [vmem:[#allocation9 + $0xb8] sm:$0xff]
    %v2910 = vld [vmem:[#allocation9 + $0xc0] sm:$0xff]
    %v2911 = vld [vmem:[#allocation9 + $0xc8] sm:$0xff]
    %v2912 = vld [vmem:[#allocation9 + $0xd0] sm:$0xff]
    %v2913 = vld [vmem:[#allocation9 + $0xd8] sm:$0xff]
    %v2914 = vld [vmem:[#allocation9 + $0xe0] sm:$0xff]
    %v2915 = vld [vmem:[#allocation9 + $0xe8] sm:$0xff]
    %v2916 = vld [vmem:[#allocation9 + $0xf0] sm:$0xff]
    %v2917 = vld [vmem:[#allocation9 + $0xf8] sm:$0xff]
    %v2918 = vld [vmem:[#allocation9 + $0x100] sm:$0xff]
    %v2919 = vld [vmem:[#allocation9 + $0x108] sm:$0xff]
    %v2920 = vld [vmem:[#allocation9 + $0x110] sm:$0xff]
    %v2921 = vld [vmem:[#allocation9 + $0x118] sm:$0xff]
    %v2922 = vld [vmem:[#allocation9 + $0x120] sm:$0xff]
    %v2923 = vld [vmem:[#allocation9 + $0x128] sm:$0xff]
    %v2924 = vld [vmem:[#allocation9 + $0x130] sm:$0xff]
    %v2925 = vld [vmem:[#allocation9 + $0x138] sm:$0xff]
    %v2926 = vld [vmem:[#allocation9 + $0x140] sm:$0xff]
    %v2927 = vld [vmem:[#allocation9 + $0x148] sm:$0xff]
    %v2928 = vld [vmem:[#allocation9 + $0x150] sm:$0xff]
    %v2929 = vld [vmem:[#allocation9 + $0x158] sm:$0xff]
    %v2930 = vld [vmem:[#allocation9 + $0x160] sm:$0xff]
    %v2931 = vld [vmem:[#allocation9 + $0x168] sm:$0xff]
    %v2932 = vld [vmem:[#allocation9 + $0x170] sm:$0xff]
    %v2933 = vld [vmem:[#allocation9 + $0x178] sm:$0xff]
    %v2934 = vld [vmem:[#allocation9 + $0x180] sm:$0xff]
    %v2935 = vld [vmem:[#allocation9 + $0x188] sm:$0xff]
    %v2936 = vld [vmem:[#allocation9 + $0x190] sm:$0xff]
    %v2937 = vld [vmem:[#allocation9 + $0x198] sm:$0xff]
    %v2938 = vld [vmem:[#allocation9 + $0x1a0] sm:$0xff]
    %v2939 = vld [vmem:[#allocation9 + $0x1a8] sm:$0xff]
    %v2940 = vld [vmem:[#allocation9 + $0x1b0] sm:$0xff]
    %v2941 = vld [vmem:[#allocation9 + $0x1b8] sm:$0xff]
    %v2942 = vld [vmem:[#allocation9 + $0x1c0] sm:$0xff]
    %v2943 = vld [vmem:[#allocation9 + $0x1c8] sm:$0xff]
    %v2944 = vld [vmem:[#allocation9 + $0x1d0] sm:$0xff]
    %v2945 = vld [vmem:[#allocation9 + $0x1d8] sm:$0xff]
    %v2946 = vld [vmem:[#allocation9 + $0x1e0] sm:$0xff]
    %v2947 = vld [vmem:[#allocation9 + $0x1e8] sm:$0xff]
    %v2948 = vld [vmem:[#allocation9 + $0x1f0] sm:$0xff]
    %v2949 = vld [vmem:[#allocation9 + $0x1f8] sm:$0xff]
    %v2950 = vld [vmem:[#allocation9 + $0x200] sm:$0xff]
    %v2951 = vld [vmem:[#allocation9 + $0x208] sm:$0xff]
    %v2952 = vld [vmem:[#allocation9 + $0x210] sm:$0xff]
    %v2953 = vld [vmem:[#allocation9 + $0x218] sm:$0xff]
    %v2954 = vld [vmem:[#allocation9 + $0x220] sm:$0xff]
    %v2955 = vld [vmem:[#allocation9 + $0x228] sm:$0xff]
    %v2956 = vld [vmem:[#allocation9 + $0x230] sm:$0xff]
    %v2957 = vld [vmem:[#allocation9 + $0x238] sm:$0xff]
    %v2958 = vld [vmem:[#allocation9 + $0x240] sm:$0xff]
    %v2959 = vld [vmem:[#allocation9 + $0x248] sm:$0xff]
    %v2960 = vld [vmem:[#allocation9 + $0x250] sm:$0xff]
    %v2961 = vld [vmem:[#allocation9 + $0x258] sm:$0xff]
    %v2962 = vld [vmem:[#allocation9 + $0x260] sm:$0xff]
    %v2963 = vld [vmem:[#allocation9 + $0x268] sm:$0xff]
    %v2964 = vld [vmem:[#allocation9 + $0x270] sm:$0xff]
    %v2965 = vld [vmem:[#allocation9 + $0x278] sm:$0xff]
    %v2966 = vld [vmem:[#allocation9 + $0x280] sm:$0xff]
    %v2967 = vld [vmem:[#allocation9 + $0x288] sm:$0xff]
    %v2968 = vld [vmem:[#allocation9 + $0x290] sm:$0xff]
    %v2969 = vld [vmem:[#allocation9 + $0x298] sm:$0xff]
    %v2970 = vld [vmem:[#allocation9 + $0x2a0] sm:$0xff]
    %v2971 = vld [vmem:[#allocation9 + $0x2a8] sm:$0xff]
    %v2972 = vld [vmem:[#allocation9 + $0x2b0] sm:$0xff]
    %v2973 = vld [vmem:[#allocation9 + $0x2b8] sm:$0xff]
    %v2974 = vld [vmem:[#allocation9 + $0x2c0] sm:$0xff]
    %v2975 = vld [vmem:[#allocation9 + $0x2c8] sm:$0xff]
    %v2976 = vld [vmem:[#allocation9 + $0x2d0] sm:$0xff]
    %v2977 = vld [vmem:[#allocation9 + $0x2d8] sm:$0xff]
    %v2978 = vld [vmem:[#allocation9 + $0x2e0] sm:$0xff]
    %v2979 = vld [vmem:[#allocation9 + $0x2e8] sm:$0xff]
    %v2980 = vld [vmem:[#allocation9 + $0x2f0] sm:$0xff]
    %v2981 = vld [vmem:[#allocation9 + $0x2f8] sm:$0xff]
    %v2982 = vld [vmem:[#allocation9 + $0x300] sm:$0xff]
    %v2983 = vld [vmem:[#allocation9 + $0x308] sm:$0xff]
    %v2984 = vld [vmem:[#allocation9 + $0x310] sm:$0xff]
    %v2985 = vld [vmem:[#allocation9 + $0x318] sm:$0xff]
    %v2986 = vld [vmem:[#allocation9 + $0x320] sm:$0xff]
    %v2987 = vld [vmem:[#allocation9 + $0x328] sm:$0xff]
    %v2988 = vld [vmem:[#allocation9 + $0x330] sm:$0xff]
    %v2989 = vld [vmem:[#allocation9 + $0x338] sm:$0xff]
    %v2990 = vld [vmem:[#allocation9 + $0x340] sm:$0xff]
    %v2991 = vld [vmem:[#allocation9 + $0x348] sm:$0xff]
    %v2992 = vld [vmem:[#allocation9 + $0x350] sm:$0xff]
    %v2993 = vld [vmem:[#allocation9 + $0x358] sm:$0xff]
    %v2994 = vld [vmem:[#allocation9 + $0x360] sm:$0xff]
    %v2995 = vld [vmem:[#allocation9 + $0x368] sm:$0xff]
    %v2996 = vld [vmem:[#allocation9 + $0x370] sm:$0xff]
    %v2997 = vld [vmem:[#allocation9 + $0x378] sm:$0xff]
    %v2998 = vld [vmem:[#allocation9 + $0x380] sm:$0xff]
    %v2999 = vld [vmem:[#allocation9 + $0x388] sm:$0xff]
    %v3000 = vld [vmem:[#allocation9 + $0x390] sm:$0xff]
    %v3001 = vld [vmem:[#allocation9 + $0x398] sm:$0xff]
    %v3002 = vld [vmem:[#allocation9 + $0x3a0] sm:$0xff]
    %v3003 = vld [vmem:[#allocation9 + $0x3a8] sm:$0xff]
    %v3004 = vld [vmem:[#allocation9 + $0x3b0] sm:$0xff]
    %v3005 = vld [vmem:[#allocation9 + $0x3b8] sm:$0xff]
    %v3006 = vld [vmem:[#allocation9 + $0x3c0] sm:$0xff]
    %v3007 = vld [vmem:[#allocation9 + $0x3c8] sm:$0xff]
    %v3008 = vld [vmem:[#allocation9 + $0x3d0] sm:$0xff]
    %v3009 = vld [vmem:[#allocation9 + $0x3d8] sm:$0xff]
    %v3010 = vld [vmem:[#allocation9 + $0x3e0] sm:$0xff]
    %v3011 = vld [vmem:[#allocation9 + $0x3e8] sm:$0xff]
    %v3012 = vld [vmem:[#allocation9 + $0x3f0] sm:$0xff]
    %v3013 = vld [vmem:[#allocation9 + $0x3f8] sm:$0xff]
    %v3014 = vld [vmem:[#allocation9 + $0x400] sm:$0xff]
    %v3015 = vld [vmem:[#allocation9 + $0x408] sm:$0xff]
    %v3016 = vld [vmem:[#allocation9 + $0x410] sm:$0xff]
    %v3017 = vld [vmem:[#allocation9 + $0x418] sm:$0xff]
    %v3018 = vld [vmem:[#allocation9 + $0x420] sm:$0xff]
    %v3019 = vld [vmem:[#allocation9 + $0x428] sm:$0xff]
    %v3020 = vld [vmem:[#allocation9 + $0x430] sm:$0xff]
    %v3021 = vld [vmem:[#allocation9 + $0x438] sm:$0xff]
    %v3022 = vld [vmem:[#allocation9 + $0x440] sm:$0xff]
    %v3023 = vld [vmem:[#allocation9 + $0x448] sm:$0xff]
    %v3024 = vld [vmem:[#allocation9 + $0x450] sm:$0xff]
    %v3025 = vld [vmem:[#allocation9 + $0x458] sm:$0xff]
    %v3026 = vld [vmem:[#allocation9 + $0x460] sm:$0xff]
    %v3027 = vld [vmem:[#allocation9 + $0x468] sm:$0xff]
    %v3028 = vld [vmem:[#allocation9 + $0x470] sm:$0xff]
    %v3029 = vld [vmem:[#allocation9 + $0x478] sm:$0xff]
    %v3030 = vld [vmem:[#allocation9 + $0x480] sm:$0xff]
    %v3031 = vld [vmem:[#allocation9 + $0x488] sm:$0xff]
    %v3032 = vld [vmem:[#allocation9 + $0x490] sm:$0xff]
    %v3033 = vld [vmem:[#allocation9 + $0x498] sm:$0xff]
    %v3034 = vld [vmem:[#allocation9 + $0x4a0] sm:$0xff]
    %v3035 = vld [vmem:[#allocation9 + $0x4a8] sm:$0xff]
    %v3036 = vld [vmem:[#allocation9 + $0x4b0] sm:$0xff]
    %v3037 = vld [vmem:[#allocation9 + $0x4b8] sm:$0xff]
    %v3038 = vld [vmem:[#allocation9 + $0x4c0] sm:$0xff]
    %v3039 = vld [vmem:[#allocation9 + $0x4c8] sm:$0xff]
    %v3040 = vld [vmem:[#allocation9 + $0x4d0] sm:$0xff]
    %v3041 = vld [vmem:[#allocation9 + $0x4d8] sm:$0xff]
    %v3042 = vld [vmem:[#allocation9 + $0x4e0] sm:$0xff]
    %v3043 = vld [vmem:[#allocation9 + $0x4e8] sm:$0xff]
    %v3044 = vld [vmem:[#allocation9 + $0x4f0] sm:$0xff]
    %v3045 = vld [vmem:[#allocation9 + $0x4f8] sm:$0xff]
    %v3046 = vld [vmem:[#allocation9 + $0x500] sm:$0xff]
    %v3047 = vld [vmem:[#allocation9 + $0x508] sm:$0xff]
    %v3048 = vld [vmem:[#allocation9 + $0x510] sm:$0xff]
    %v3049 = vld [vmem:[#allocation9 + $0x518] sm:$0xff]
    %v3050 = vld [vmem:[#allocation9 + $0x520] sm:$0xff]
    %v3051 = vld [vmem:[#allocation9 + $0x528] sm:$0xff]
    %v3052 = vld [vmem:[#allocation9 + $0x530] sm:$0xff]
    %v3053 = vld [vmem:[#allocation9 + $0x538] sm:$0xff]
    %v3054 = vld [vmem:[#allocation9 + $0x540] sm:$0xff]
    %v3055 = vld [vmem:[#allocation9 + $0x548] sm:$0xff]
    %v3056 = vld [vmem:[#allocation9 + $0x550] sm:$0xff]
    %v3057 = vld [vmem:[#allocation9 + $0x558] sm:$0xff]
    %v3058 = vld [vmem:[#allocation9 + $0x560] sm:$0xff]
    %v3059 = vld [vmem:[#allocation9 + $0x568] sm:$0xff]
    %v3060 = vld [vmem:[#allocation9 + $0x570] sm:$0xff]
    %v3061 = vld [vmem:[#allocation9 + $0x578] sm:$0xff]
    %v3062 = vld [vmem:[#allocation9 + $0x580] sm:$0xff]
    %v3063 = vld [vmem:[#allocation9 + $0x588] sm:$0xff]
    %v3064 = vld [vmem:[#allocation9 + $0x590] sm:$0xff]
    %v3065 = vld [vmem:[#allocation9 + $0x598] sm:$0xff]
    %v3066 = vld [vmem:[#allocation9 + $0x5a0] sm:$0xff]
    %v3067 = vld [vmem:[#allocation9 + $0x5a8] sm:$0xff]
    %v3068 = vld [vmem:[#allocation9 + $0x5b0] sm:$0xff]
    %v3069 = vld [vmem:[#allocation9 + $0x5b8] sm:$0xff]
    %v3070 = vld [vmem:[#allocation9 + $0x5c0] sm:$0xff]
    %v3071 = vld [vmem:[#allocation9 + $0x5c8] sm:$0xff]
    %v3072 = vld [vmem:[#allocation9 + $0x5d0] sm:$0xff]
    %v3073 = vld [vmem:[#allocation9 + $0x5d8] sm:$0xff]
    %v3074 = vld [vmem:[#allocation9 + $0x5e0] sm:$0xff]
    %v3075 = vld [vmem:[#allocation9 + $0x5e8] sm:$0xff]
    %v3076 = vld [vmem:[#allocation9 + $0x5f0] sm:$0xff]
    %v3077 = vld [vmem:[#allocation9 + $0x5f8] sm:$0xff]
    %v3078 = vld [vmem:[%s12] sm:$0x3f]
    %v3080 = vlaneseq
    %v3081 = vshrl.u32 %v3080, 7
    %v3082 = vsub.s32 0, %v3081
    %v3083 = vrot.slane %v3078, %v3082
    %v3084 = vlaneseq
    %v3085 = vshrl.u32 %v3084, 7
    %v3086 = vsub.s32 1, %v3085
    %v3087 = vrot.slane %v3078, %v3086
    %v3088 = vlaneseq
    %v3089 = vshrl.u32 %v3088, 7
    %v3090 = vsub.s32 2, %v3089
    %v3091 = vrot.slane %v3078, %v3090
    %v3092 = vlaneseq
    %v3093 = vshrl.u32 %v3092, 7
    %v3094 = vsub.s32 3, %v3093
    %v3095 = vrot.slane %v3078, %v3094
    %v3096 = vlaneseq
    %v3097 = vshrl.u32 %v3096, 7
    %v3098 = vsub.s32 4, %v3097
    %v3099 = vrot.slane %v3078, %v3098
    %v3100 = vlaneseq
    %v3101 = vshrl.u32 %v3100, 7
    %v3102 = vsub.s32 5, %v3101
    %v3103 = vrot.slane %v3078, %v3102
    %v3302 = vunpack.c.l.b16 %v2886
    %v3303 = vunpack.c.h.b16 %v2886
    %v3304 = vunpack.c.l.b16 %v2887
    %v3305 = vunpack.c.h.b16 %v2887
    %v3306 = vunpack.c.l.b16 %v2888
    %v3307 = vunpack.c.h.b16 %v2888
    %v3308 = vunpack.c.l.b16 %v2889
    %v3309 = vunpack.c.h.b16 %v2889
    %v3310 = vunpack.c.l.b16 %v2890
    %v3311 = vunpack.c.h.b16 %v2890
    %v3312 = vunpack.c.l.b16 %v2891
    %v3313 = vunpack.c.h.b16 %v2891
    %v3314 = vunpack.c.l.b16 %v2892
    %v3315 = vunpack.c.h.b16 %v2892
    %v3316 = vunpack.c.l.b16 %v2893
    %v3317 = vunpack.c.h.b16 %v2893
    %v3318 = vunpack.c.l.b16 %v2894
    %v3319 = vunpack.c.h.b16 %v2894
    %v3320 = vunpack.c.l.b16 %v2895
    %v3321 = vunpack.c.h.b16 %v2895
    %v3322 = vunpack.c.l.b16 %v2896
    %v3323 = vunpack.c.h.b16 %v2896
    %v3324 = vunpack.c.l.b16 %v2897
    %v3325 = vunpack.c.h.b16 %v2897
    %v3326 = vunpack.c.l.b16 %v2898
    %v3327 = vunpack.c.h.b16 %v2898
    %v3328 = vunpack.c.l.b16 %v2899
    %v3329 = vunpack.c.h.b16 %v2899
    %v3330 = vunpack.c.l.b16 %v2900
    %v3331 = vunpack.c.h.b16 %v2900
    %v3332 = vunpack.c.l.b16 %v2901
    %v3333 = vunpack.c.h.b16 %v2901
    %v3334 = vunpack.c.l.b16 %v2902
    %v3335 = vunpack.c.h.b16 %v2902
    %v3336 = vunpack.c.l.b16 %v2903
    %v3337 = vunpack.c.h.b16 %v2903
    %v3338 = vunpack.c.l.b16 %v2904
    %v3339 = vunpack.c.h.b16 %v2904
    %v3340 = vunpack.c.l.b16 %v2905
    %v3341 = vunpack.c.h.b16 %v2905
    %v3342 = vunpack.c.l.b16 %v2906
    %v3343 = vunpack.c.h.b16 %v2906
    %v3344 = vunpack.c.l.b16 %v2907
    %v3345 = vunpack.c.h.b16 %v2907
    %v3346 = vunpack.c.l.b16 %v2908
    %v3347 = vunpack.c.h.b16 %v2908
    %v3348 = vunpack.c.l.b16 %v2909
    %v3349 = vunpack.c.h.b16 %v2909
    %v3350 = vunpack.c.l.b16 %v2910
    %v3351 = vunpack.c.h.b16 %v2910
    %v3352 = vunpack.c.l.b16 %v2911
    %v3353 = vunpack.c.h.b16 %v2911
    %v3354 = vunpack.c.l.b16 %v2912
    %v3355 = vunpack.c.h.b16 %v2912
    %v3356 = vunpack.c.l.b16 %v2913
    %v3357 = vunpack.c.h.b16 %v2913
    %v3358 = vunpack.c.l.b16 %v2914
    %v3359 = vunpack.c.h.b16 %v2914
    %v3360 = vunpack.c.l.b16 %v2915
    %v3361 = vunpack.c.h.b16 %v2915
    %v3362 = vunpack.c.l.b16 %v2916
    %v3363 = vunpack.c.h.b16 %v2916
    %v3364 = vunpack.c.l.b16 %v2917
    %v3365 = vunpack.c.h.b16 %v2917
    %v3366 = vunpack.c.l.b16 %v2918
    %v3367 = vunpack.c.h.b16 %v2918
    %v3368 = vunpack.c.l.b16 %v2919
    %v3369 = vunpack.c.h.b16 %v2919
    %v3370 = vunpack.c.l.b16 %v2920
    %v3371 = vunpack.c.h.b16 %v2920
    %v3372 = vunpack.c.l.b16 %v2921
    %v3373 = vunpack.c.h.b16 %v2921
    %v3374 = vunpack.c.l.b16 %v2922
    %v3375 = vunpack.c.h.b16 %v2922
    %v3376 = vunpack.c.l.b16 %v2923
    %v3377 = vunpack.c.h.b16 %v2923
    %v3378 = vunpack.c.l.b16 %v2924
    %v3379 = vunpack.c.h.b16 %v2924
    %v3380 = vunpack.c.l.b16 %v2925
    %v3381 = vunpack.c.h.b16 %v2925
    %v3382 = vunpack.c.l.b16 %v2926
    %v3383 = vunpack.c.h.b16 %v2926
    %v3384 = vunpack.c.l.b16 %v2927
    %v3385 = vunpack.c.h.b16 %v2927
    %v3386 = vunpack.c.l.b16 %v2928
    %v3387 = vunpack.c.h.b16 %v2928
    %v3388 = vunpack.c.l.b16 %v2929
    %v3389 = vunpack.c.h.b16 %v2929
    %v3390 = vunpack.c.l.b16 %v2930
    %v3391 = vunpack.c.h.b16 %v2930
    %v3392 = vunpack.c.l.b16 %v2931
    %v3393 = vunpack.c.h.b16 %v2931
    %v3394 = vunpack.c.l.b16 %v2932
    %v3395 = vunpack.c.h.b16 %v2932
    %v3396 = vunpack.c.l.b16 %v2933
    %v3397 = vunpack.c.h.b16 %v2933
    %v3398 = vunpack.c.l.b16 %v2934
    %v3399 = vunpack.c.h.b16 %v2934
    %v3400 = vunpack.c.l.b16 %v2935
    %v3401 = vunpack.c.h.b16 %v2935
    %v3402 = vunpack.c.l.b16 %v2936
    %v3403 = vunpack.c.h.b16 %v2936
    %v3404 = vunpack.c.l.b16 %v2937
    %v3405 = vunpack.c.h.b16 %v2937
    %v3406 = vunpack.c.l.b16 %v2938
    %v3407 = vunpack.c.h.b16 %v2938
    %v3408 = vunpack.c.l.b16 %v2939
    %v3409 = vunpack.c.h.b16 %v2939
    %v3410 = vunpack.c.l.b16 %v2940
    %v3411 = vunpack.c.h.b16 %v2940
    %v3412 = vunpack.c.l.b16 %v2941
    %v3413 = vunpack.c.h.b16 %v2941
    %v3414 = vunpack.c.l.b16 %v2942
    %v3415 = vunpack.c.h.b16 %v2942
    %v3416 = vunpack.c.l.b16 %v2943
    %v3417 = vunpack.c.h.b16 %v2943
    %v3418 = vunpack.c.l.b16 %v2944
    %v3419 = vunpack.c.h.b16 %v2944
    %v3420 = vunpack.c.l.b16 %v2945
    %v3421 = vunpack.c.h.b16 %v2945
    %v3422 = vunpack.c.l.b16 %v2946
    %v3423 = vunpack.c.h.b16 %v2946
    %v3424 = vunpack.c.l.b16 %v2947
    %v3425 = vunpack.c.h.b16 %v2947
    %v3426 = vunpack.c.l.b16 %v2948
    %v3427 = vunpack.c.h.b16 %v2948
    %v3428 = vunpack.c.l.b16 %v2949
    %v3429 = vunpack.c.h.b16 %v2949
    %v3430 = vunpack.c.l.b16 %v2950
    %v3431 = vunpack.c.h.b16 %v2950
    %v3432 = vunpack.c.l.b16 %v2951
    %v3433 = vunpack.c.h.b16 %v2951
    %v3434 = vunpack.c.l.b16 %v2952
    %v3435 = vunpack.c.h.b16 %v2952
    %v3436 = vunpack.c.l.b16 %v2953
    %v3437 = vunpack.c.h.b16 %v2953
    %v3438 = vunpack.c.l.b16 %v2954
    %v3439 = vunpack.c.h.b16 %v2954
    %v3440 = vunpack.c.l.b16 %v2955
    %v3441 = vunpack.c.h.b16 %v2955
    %v3442 = vunpack.c.l.b16 %v2956
    %v3443 = vunpack.c.h.b16 %v2956
    %v3444 = vunpack.c.l.b16 %v2957
    %v3445 = vunpack.c.h.b16 %v2957
    %v3446 = vunpack.c.l.b16 %v2958
    %v3447 = vunpack.c.h.b16 %v2958
    %v3448 = vunpack.c.l.b16 %v2959
    %v3449 = vunpack.c.h.b16 %v2959
    %v3450 = vunpack.c.l.b16 %v2960
    %v3451 = vunpack.c.h.b16 %v2960
    %v3452 = vunpack.c.l.b16 %v2961
    %v3453 = vunpack.c.h.b16 %v2961
    %v3454 = vunpack.c.l.b16 %v2962
    %v3455 = vunpack.c.h.b16 %v2962
    %v3456 = vunpack.c.l.b16 %v2963
    %v3457 = vunpack.c.h.b16 %v2963
    %v3458 = vunpack.c.l.b16 %v2964
    %v3459 = vunpack.c.h.b16 %v2964
    %v3460 = vunpack.c.l.b16 %v2965
    %v3461 = vunpack.c.h.b16 %v2965
    %v3462 = vunpack.c.l.b16 %v2966
    %v3463 = vunpack.c.h.b16 %v2966
    %v3464 = vunpack.c.l.b16 %v2967
    %v3465 = vunpack.c.h.b16 %v2967
    %v3466 = vunpack.c.l.b16 %v2968
    %v3467 = vunpack.c.h.b16 %v2968
    %v3468 = vunpack.c.l.b16 %v2969
    %v3469 = vunpack.c.h.b16 %v2969
    %v3470 = vunpack.c.l.b16 %v2970
    %v3471 = vunpack.c.h.b16 %v2970
    %v3472 = vunpack.c.l.b16 %v2971
    %v3473 = vunpack.c.h.b16 %v2971
    %v3474 = vunpack.c.l.b16 %v2972
    %v3475 = vunpack.c.h.b16 %v2972
    %v3476 = vunpack.c.l.b16 %v2973
    %v3477 = vunpack.c.h.b16 %v2973
    %v3478 = vunpack.c.l.b16 %v2974
    %v3479 = vunpack.c.h.b16 %v2974
    %v3480 = vunpack.c.l.b16 %v2975
    %v3481 = vunpack.c.h.b16 %v2975
    %v3482 = vunpack.c.l.b16 %v2976
    %v3483 = vunpack.c.h.b16 %v2976
    %v3484 = vunpack.c.l.b16 %v2977
    %v3485 = vunpack.c.h.b16 %v2977
    %v3486 = vunpack.c.l.b16 %v2978
    %v3487 = vunpack.c.h.b16 %v2978
    %v3488 = vunpack.c.l.b16 %v2979
    %v3489 = vunpack.c.h.b16 %v2979
    %v3490 = vunpack.c.l.b16 %v2980
    %v3491 = vunpack.c.h.b16 %v2980
    %v3492 = vunpack.c.l.b16 %v2981
    %v3493 = vunpack.c.h.b16 %v2981
    %v3494 = vunpack.c.l.b16 %v2982
    %v3495 = vunpack.c.h.b16 %v2982
    %v3496 = vunpack.c.l.b16 %v2983
    %v3497 = vunpack.c.h.b16 %v2983
    %v3498 = vunpack.c.l.b16 %v2984
    %v3499 = vunpack.c.h.b16 %v2984
    %v3500 = vunpack.c.l.b16 %v2985
    %v3501 = vunpack.c.h.b16 %v2985
    %v3502 = vunpack.c.l.b16 %v2986
    %v3503 = vunpack.c.h.b16 %v2986
    %v3504 = vunpack.c.l.b16 %v2987
    %v3505 = vunpack.c.h.b16 %v2987
    %v3506 = vunpack.c.l.b16 %v2988
    %v3507 = vunpack.c.h.b16 %v2988
    %v3508 = vunpack.c.l.b16 %v2989
    %v3509 = vunpack.c.h.b16 %v2989
    %v3510 = vunpack.c.l.b16 %v2990
    %v3511 = vunpack.c.h.b16 %v2990
    %v3512 = vunpack.c.l.b16 %v2991
    %v3513 = vunpack.c.h.b16 %v2991
    %v3514 = vunpack.c.l.b16 %v2992
    %v3515 = vunpack.c.h.b16 %v2992
    %v3516 = vunpack.c.l.b16 %v2993
    %v3517 = vunpack.c.h.b16 %v2993
    %v3518 = vunpack.c.l.b16 %v2994
    %v3519 = vunpack.c.h.b16 %v2994
    %v3520 = vunpack.c.l.b16 %v2995
    %v3521 = vunpack.c.h.b16 %v2995
    %v3522 = vunpack.c.l.b16 %v2996
    %v3523 = vunpack.c.h.b16 %v2996
    %v3524 = vunpack.c.l.b16 %v2997
    %v3525 = vunpack.c.h.b16 %v2997
    %v3526 = vunpack.c.l.b16 %v2998
    %v3527 = vunpack.c.h.b16 %v2998
    %v3528 = vunpack.c.l.b16 %v2999
    %v3529 = vunpack.c.h.b16 %v2999
    %v3530 = vunpack.c.l.b16 %v3000
    %v3531 = vunpack.c.h.b16 %v3000
    %v3532 = vunpack.c.l.b16 %v3001
    %v3533 = vunpack.c.h.b16 %v3001
    %v3534 = vunpack.c.l.b16 %v3002
    %v3535 = vunpack.c.h.b16 %v3002
    %v3536 = vunpack.c.l.b16 %v3003
    %v3537 = vunpack.c.h.b16 %v3003
    %v3538 = vunpack.c.l.b16 %v3004
    %v3539 = vunpack.c.h.b16 %v3004
    %v3540 = vunpack.c.l.b16 %v3005
    %v3541 = vunpack.c.h.b16 %v3005
    %v3542 = vunpack.c.l.b16 %v3006
    %v3543 = vunpack.c.h.b16 %v3006
    %v3544 = vunpack.c.l.b16 %v3007
    %v3545 = vunpack.c.h.b16 %v3007
    %v3546 = vunpack.c.l.b16 %v3008
    %v3547 = vunpack.c.h.b16 %v3008
    %v3548 = vunpack.c.l.b16 %v3009
    %v3549 = vunpack.c.h.b16 %v3009
    %v3550 = vunpack.c.l.b16 %v3010
    %v3551 = vunpack.c.h.b16 %v3010
    %v3552 = vunpack.c.l.b16 %v3011
    %v3553 = vunpack.c.h.b16 %v3011
    %v3554 = vunpack.c.l.b16 %v3012
    %v3555 = vunpack.c.h.b16 %v3012
    %v3556 = vunpack.c.l.b16 %v3013
    %v3557 = vunpack.c.h.b16 %v3013
    %v3558 = vunpack.c.l.b16 %v3014
    %v3559 = vunpack.c.h.b16 %v3014
    %v3560 = vunpack.c.l.b16 %v3015
    %v3561 = vunpack.c.h.b16 %v3015
    %v3562 = vunpack.c.l.b16 %v3016
    %v3563 = vunpack.c.h.b16 %v3016
    %v3564 = vunpack.c.l.b16 %v3017
    %v3565 = vunpack.c.h.b16 %v3017
    %v3566 = vunpack.c.l.b16 %v3018
    %v3567 = vunpack.c.h.b16 %v3018
    %v3568 = vunpack.c.l.b16 %v3019
    %v3569 = vunpack.c.h.b16 %v3019
    %v3570 = vunpack.c.l.b16 %v3020
    %v3571 = vunpack.c.h.b16 %v3020
    %v3572 = vunpack.c.l.b16 %v3021
    %v3573 = vunpack.c.h.b16 %v3021
    %v3574 = vunpack.c.l.b16 %v3022
    %v3575 = vunpack.c.h.b16 %v3022
    %v3576 = vunpack.c.l.b16 %v3023
    %v3577 = vunpack.c.h.b16 %v3023
    %v3578 = vunpack.c.l.b16 %v3024
    %v3579 = vunpack.c.h.b16 %v3024
    %v3580 = vunpack.c.l.b16 %v3025
    %v3581 = vunpack.c.h.b16 %v3025
    %v3582 = vunpack.c.l.b16 %v3026
    %v3583 = vunpack.c.h.b16 %v3026
    %v3584 = vunpack.c.l.b16 %v3027
    %v3585 = vunpack.c.h.b16 %v3027
    %v3586 = vunpack.c.l.b16 %v3028
    %v3587 = vunpack.c.h.b16 %v3028
    %v3588 = vunpack.c.l.b16 %v3029
    %v3589 = vunpack.c.h.b16 %v3029
    %v3590 = vunpack.c.l.b16 %v3030
    %v3591 = vunpack.c.h.b16 %v3030
    %v3592 = vunpack.c.l.b16 %v3031
    %v3593 = vunpack.c.h.b16 %v3031
    %v3594 = vunpack.c.l.b16 %v3032
    %v3595 = vunpack.c.h.b16 %v3032
    %v3596 = vunpack.c.l.b16 %v3033
    %v3597 = vunpack.c.h.b16 %v3033
    %v3598 = vunpack.c.l.b16 %v3034
    %v3599 = vunpack.c.h.b16 %v3034
    %v3600 = vunpack.c.l.b16 %v3035
    %v3601 = vunpack.c.h.b16 %v3035
    %v3602 = vunpack.c.l.b16 %v3036
    %v3603 = vunpack.c.h.b16 %v3036
    %v3604 = vunpack.c.l.b16 %v3037
    %v3605 = vunpack.c.h.b16 %v3037
    %v3606 = vunpack.c.l.b16 %v3038
    %v3607 = vunpack.c.h.b16 %v3038
    %v3608 = vunpack.c.l.b16 %v3039
    %v3609 = vunpack.c.h.b16 %v3039
    %v3610 = vunpack.c.l.b16 %v3040
    %v3611 = vunpack.c.h.b16 %v3040
    %v3612 = vunpack.c.l.b16 %v3041
    %v3613 = vunpack.c.h.b16 %v3041
    %v3614 = vunpack.c.l.b16 %v3042
    %v3615 = vunpack.c.h.b16 %v3042
    %v3616 = vunpack.c.l.b16 %v3043
    %v3617 = vunpack.c.h.b16 %v3043
    %v3618 = vunpack.c.l.b16 %v3044
    %v3619 = vunpack.c.h.b16 %v3044
    %v3620 = vunpack.c.l.b16 %v3045
    %v3621 = vunpack.c.h.b16 %v3045
    %v3622 = vunpack.c.l.b16 %v3046
    %v3623 = vunpack.c.h.b16 %v3046
    %v3624 = vunpack.c.l.b16 %v3047
    %v3625 = vunpack.c.h.b16 %v3047
    %v3626 = vunpack.c.l.b16 %v3048
    %v3627 = vunpack.c.h.b16 %v3048
    %v3628 = vunpack.c.l.b16 %v3049
    %v3629 = vunpack.c.h.b16 %v3049
    %v3630 = vunpack.c.l.b16 %v3050
    %v3631 = vunpack.c.h.b16 %v3050
    %v3632 = vunpack.c.l.b16 %v3051
    %v3633 = vunpack.c.h.b16 %v3051
    %v3634 = vunpack.c.l.b16 %v3052
    %v3635 = vunpack.c.h.b16 %v3052
    %v3636 = vunpack.c.l.b16 %v3053
    %v3637 = vunpack.c.h.b16 %v3053
    %v3638 = vunpack.c.l.b16 %v3054
    %v3639 = vunpack.c.h.b16 %v3054
    %v3640 = vunpack.c.l.b16 %v3055
    %v3641 = vunpack.c.h.b16 %v3055
    %v3642 = vunpack.c.l.b16 %v3056
    %v3643 = vunpack.c.h.b16 %v3056
    %v3644 = vunpack.c.l.b16 %v3057
    %v3645 = vunpack.c.h.b16 %v3057
    %v3646 = vunpack.c.l.b16 %v3058
    %v3647 = vunpack.c.h.b16 %v3058
    %v3648 = vunpack.c.l.b16 %v3059
    %v3649 = vunpack.c.h.b16 %v3059
    %v3650 = vunpack.c.l.b16 %v3060
    %v3651 = vunpack.c.h.b16 %v3060
    %v3652 = vunpack.c.l.b16 %v3061
    %v3653 = vunpack.c.h.b16 %v3061
    %v3654 = vunpack.c.l.b16 %v3062
    %v3655 = vunpack.c.h.b16 %v3062
    %v3656 = vunpack.c.l.b16 %v3063
    %v3657 = vunpack.c.h.b16 %v3063
    %v3658 = vunpack.c.l.b16 %v3064
    %v3659 = vunpack.c.h.b16 %v3064
    %v3660 = vunpack.c.l.b16 %v3065
    %v3661 = vunpack.c.h.b16 %v3065
    %v3662 = vunpack.c.l.b16 %v3066
    %v3663 = vunpack.c.h.b16 %v3066
    %v3664 = vunpack.c.l.b16 %v3067
    %v3665 = vunpack.c.h.b16 %v3067
    %v3666 = vunpack.c.l.b16 %v3068
    %v3667 = vunpack.c.h.b16 %v3068
    %v3668 = vunpack.c.l.b16 %v3069
    %v3669 = vunpack.c.h.b16 %v3069
    %v3670 = vunpack.c.l.b16 %v3070
    %v3671 = vunpack.c.h.b16 %v3070
    %v3672 = vunpack.c.l.b16 %v3071
    %v3673 = vunpack.c.h.b16 %v3071
    %v3674 = vunpack.c.l.b16 %v3072
    %v3675 = vunpack.c.h.b16 %v3072
    %v3676 = vunpack.c.l.b16 %v3073
    %v3677 = vunpack.c.h.b16 %v3073
    %v3678 = vunpack.c.l.b16 %v3074
    %v3679 = vunpack.c.h.b16 %v3074
    %v3680 = vunpack.c.l.b16 %v3075
    %v3681 = vunpack.c.h.b16 %v3075
    %v3682 = vunpack.c.l.b16 %v3076
    %v3683 = vunpack.c.h.b16 %v3076
    %v3684 = vunpack.c.l.b16 %v3077
    %v3685 = vunpack.c.h.b16 %v3077
    %v3686 = vpack.c.b16 %v3308, %v3302
    %v3687 = vpack.c.b16 %v3309, %v3303
    %v3688 = vpack.c.b16 %v3310, %v3304
    %v3689 = vpack.c.b16 %v3311, %v3305
    %v3690 = vpack.c.b16 %v3312, %v3306
    %v3691 = vpack.c.b16 %v3313, %v3307
    %v3692 = vpack.c.b16 %v3320, %v3314
    %v3693 = vpack.c.b16 %v3321, %v3315
    %v3694 = vpack.c.b16 %v3322, %v3316
    %v3695 = vpack.c.b16 %v3323, %v3317
    %v3696 = vpack.c.b16 %v3324, %v3318
    %v3697 = vpack.c.b16 %v3325, %v3319
    %v3698 = vpack.c.b16 %v3332, %v3326
    %v3699 = vpack.c.b16 %v3333, %v3327
    %v3700 = vpack.c.b16 %v3334, %v3328
    %v3701 = vpack.c.b16 %v3335, %v3329
    %v3702 = vpack.c.b16 %v3336, %v3330
    %v3703 = vpack.c.b16 %v3337, %v3331
    %v3704 = vpack.c.b16 %v3344, %v3338
    %v3705 = vpack.c.b16 %v3345, %v3339
    %v3706 = vpack.c.b16 %v3346, %v3340
    %v3707 = vpack.c.b16 %v3347, %v3341
    %v3708 = vpack.c.b16 %v3348, %v3342
    %v3709 = vpack.c.b16 %v3349, %v3343
    %v3710 = vpack.c.b16 %v3356, %v3350
    %v3711 = vpack.c.b16 %v3357, %v3351
    %v3712 = vpack.c.b16 %v3358, %v3352
    %v3713 = vpack.c.b16 %v3359, %v3353
    %v3714 = vpack.c.b16 %v3360, %v3354
    %v3715 = vpack.c.b16 %v3361, %v3355
    %v3716 = vpack.c.b16 %v3368, %v3362
    %v3717 = vpack.c.b16 %v3369, %v3363
    %v3718 = vpack.c.b16 %v3370, %v3364
    %v3719 = vpack.c.b16 %v3371, %v3365
    %v3720 = vpack.c.b16 %v3372, %v3366
    %v3721 = vpack.c.b16 %v3373, %v3367
    %v3722 = vpack.c.b16 %v3380, %v3374
    %v3723 = vpack.c.b16 %v3381, %v3375
    %v3724 = vpack.c.b16 %v3382, %v3376
    %v3725 = vpack.c.b16 %v3383, %v3377
    %v3726 = vpack.c.b16 %v3384, %v3378
    %v3727 = vpack.c.b16 %v3385, %v3379
    %v3728 = vpack.c.b16 %v3392, %v3386
    %v3729 = vpack.c.b16 %v3393, %v3387
    %v3730 = vpack.c.b16 %v3394, %v3388
    %v3731 = vpack.c.b16 %v3395, %v3389
    %v3732 = vpack.c.b16 %v3396, %v3390
    %v3733 = vpack.c.b16 %v3397, %v3391
    %v3734 = vpack.c.b16 %v3404, %v3398
    %v3735 = vpack.c.b16 %v3405, %v3399
    %v3736 = vpack.c.b16 %v3406, %v3400
    %v3737 = vpack.c.b16 %v3407, %v3401
    %v3738 = vpack.c.b16 %v3408, %v3402
    %v3739 = vpack.c.b16 %v3409, %v3403
    %v3740 = vpack.c.b16 %v3416, %v3410
    %v3741 = vpack.c.b16 %v3417, %v3411
    %v3742 = vpack.c.b16 %v3418, %v3412
    %v3743 = vpack.c.b16 %v3419, %v3413
    %v3744 = vpack.c.b16 %v3420, %v3414
    %v3745 = vpack.c.b16 %v3421, %v3415
    %v3746 = vpack.c.b16 %v3428, %v3422
    %v3747 = vpack.c.b16 %v3429, %v3423
    %v3748 = vpack.c.b16 %v3430, %v3424
    %v3749 = vpack.c.b16 %v3431, %v3425
    %v3750 = vpack.c.b16 %v3432, %v3426
    %v3751 = vpack.c.b16 %v3433, %v3427
    %v3752 = vpack.c.b16 %v3440, %v3434
    %v3753 = vpack.c.b16 %v3441, %v3435
    %v3754 = vpack.c.b16 %v3442, %v3436
    %v3755 = vpack.c.b16 %v3443, %v3437
    %v3756 = vpack.c.b16 %v3444, %v3438
    %v3757 = vpack.c.b16 %v3445, %v3439
    %v3758 = vpack.c.b16 %v3452, %v3446
    %v3759 = vpack.c.b16 %v3453, %v3447
    %v3760 = vpack.c.b16 %v3454, %v3448
    %v3761 = vpack.c.b16 %v3455, %v3449
    %v3762 = vpack.c.b16 %v3456, %v3450
    %v3763 = vpack.c.b16 %v3457, %v3451
    %v3764 = vpack.c.b16 %v3464, %v3458
    %v3765 = vpack.c.b16 %v3465, %v3459
    %v3766 = vpack.c.b16 %v3466, %v3460
    %v3767 = vpack.c.b16 %v3467, %v3461
    %v3768 = vpack.c.b16 %v3468, %v3462
    %v3769 = vpack.c.b16 %v3469, %v3463
    %v3770 = vpack.c.b16 %v3476, %v3470
    %v3771 = vpack.c.b16 %v3477, %v3471
    %v3772 = vpack.c.b16 %v3478, %v3472
    %v3773 = vpack.c.b16 %v3479, %v3473
    %v3774 = vpack.c.b16 %v3480, %v3474
    %v3775 = vpack.c.b16 %v3481, %v3475
    %v3776 = vpack.c.b16 %v3488, %v3482
    %v3777 = vpack.c.b16 %v3489, %v3483
    %v3778 = vpack.c.b16 %v3490, %v3484
    %v3779 = vpack.c.b16 %v3491, %v3485
    %v3780 = vpack.c.b16 %v3492, %v3486
    %v3781 = vpack.c.b16 %v3493, %v3487
    %v3782 = vpack.c.b16 %v3500, %v3494
    %v3783 = vpack.c.b16 %v3501, %v3495
    %v3784 = vpack.c.b16 %v3502, %v3496
    %v3785 = vpack.c.b16 %v3503, %v3497
    %v3786 = vpack.c.b16 %v3504, %v3498
    %v3787 = vpack.c.b16 %v3505, %v3499
    %v3788 = vpack.c.b16 %v3512, %v3506
    %v3789 = vpack.c.b16 %v3513, %v3507
    %v3790 = vpack.c.b16 %v3514, %v3508
    %v3791 = vpack.c.b16 %v3515, %v3509
    %v3792 = vpack.c.b16 %v3516, %v3510
    %v3793 = vpack.c.b16 %v3517, %v3511
    %v3794 = vpack.c.b16 %v3524, %v3518
    %v3795 = vpack.c.b16 %v3525, %v3519
    %v3796 = vpack.c.b16 %v3526, %v3520
    %v3797 = vpack.c.b16 %v3527, %v3521
    %v3798 = vpack.c.b16 %v3528, %v3522
    %v3799 = vpack.c.b16 %v3529, %v3523
    %v3800 = vpack.c.b16 %v3536, %v3530
    %v3801 = vpack.c.b16 %v3537, %v3531
    %v3802 = vpack.c.b16 %v3538, %v3532
    %v3803 = vpack.c.b16 %v3539, %v3533
    %v3804 = vpack.c.b16 %v3540, %v3534
    %v3805 = vpack.c.b16 %v3541, %v3535
    %v3806 = vpack.c.b16 %v3548, %v3542
    %v3807 = vpack.c.b16 %v3549, %v3543
    %v3808 = vpack.c.b16 %v3550, %v3544
    %v3809 = vpack.c.b16 %v3551, %v3545
    %v3810 = vpack.c.b16 %v3552, %v3546
    %v3811 = vpack.c.b16 %v3553, %v3547
    %v3812 = vpack.c.b16 %v3560, %v3554
    %v3813 = vpack.c.b16 %v3561, %v3555
    %v3814 = vpack.c.b16 %v3562, %v3556
    %v3815 = vpack.c.b16 %v3563, %v3557
    %v3816 = vpack.c.b16 %v3564, %v3558
    %v3817 = vpack.c.b16 %v3565, %v3559
    %v3818 = vpack.c.b16 %v3572, %v3566
    %v3819 = vpack.c.b16 %v3573, %v3567
    %v3820 = vpack.c.b16 %v3574, %v3568
    %v3821 = vpack.c.b16 %v3575, %v3569
    %v3822 = vpack.c.b16 %v3576, %v3570
    %v3823 = vpack.c.b16 %v3577, %v3571
    %v3824 = vpack.c.b16 %v3584, %v3578
    %v3825 = vpack.c.b16 %v3585, %v3579
    %v3826 = vpack.c.b16 %v3586, %v3580
    %v3827 = vpack.c.b16 %v3587, %v3581
    %v3828 = vpack.c.b16 %v3588, %v3582
    %v3829 = vpack.c.b16 %v3589, %v3583
    %v3830 = vpack.c.b16 %v3596, %v3590
    %v3831 = vpack.c.b16 %v3597, %v3591
    %v3832 = vpack.c.b16 %v3598, %v3592
    %v3833 = vpack.c.b16 %v3599, %v3593
    %v3834 = vpack.c.b16 %v3600, %v3594
    %v3835 = vpack.c.b16 %v3601, %v3595
    %v3836 = vpack.c.b16 %v3608, %v3602
    %v3837 = vpack.c.b16 %v3609, %v3603
    %v3838 = vpack.c.b16 %v3610, %v3604
    %v3839 = vpack.c.b16 %v3611, %v3605
    %v3840 = vpack.c.b16 %v3612, %v3606
    %v3841 = vpack.c.b16 %v3613, %v3607
    %v3842 = vpack.c.b16 %v3620, %v3614
    %v3843 = vpack.c.b16 %v3621, %v3615
    %v3844 = vpack.c.b16 %v3622, %v3616
    %v3845 = vpack.c.b16 %v3623, %v3617
    %v3846 = vpack.c.b16 %v3624, %v3618
    %v3847 = vpack.c.b16 %v3625, %v3619
    %v3848 = vpack.c.b16 %v3632, %v3626
    %v3849 = vpack.c.b16 %v3633, %v3627
    %v3850 = vpack.c.b16 %v3634, %v3628
    %v3851 = vpack.c.b16 %v3635, %v3629
    %v3852 = vpack.c.b16 %v3636, %v3630
    %v3853 = vpack.c.b16 %v3637, %v3631
    %v3854 = vpack.c.b16 %v3644, %v3638
    %v3855 = vpack.c.b16 %v3645, %v3639
    %v3856 = vpack.c.b16 %v3646, %v3640
    %v3857 = vpack.c.b16 %v3647, %v3641
    %v3858 = vpack.c.b16 %v3648, %v3642
    %v3859 = vpack.c.b16 %v3649, %v3643
    %v3860 = vpack.c.b16 %v3656, %v3650
    %v3861 = vpack.c.b16 %v3657, %v3651
    %v3862 = vpack.c.b16 %v3658, %v3652
    %v3863 = vpack.c.b16 %v3659, %v3653
    %v3864 = vpack.c.b16 %v3660, %v3654
    %v3865 = vpack.c.b16 %v3661, %v3655
    %v3866 = vpack.c.b16 %v3668, %v3662
    %v3867 = vpack.c.b16 %v3669, %v3663
    %v3868 = vpack.c.b16 %v3670, %v3664
    %v3869 = vpack.c.b16 %v3671, %v3665
    %v3870 = vpack.c.b16 %v3672, %v3666
    %v3871 = vpack.c.b16 %v3673, %v3667
    %v3872 = vpack.c.b16 %v3680, %v3674
    %v3873 = vpack.c.b16 %v3681, %v3675
    %v3874 = vpack.c.b16 %v3682, %v3676
    %v3875 = vpack.c.b16 %v3683, %v3677
    %v3876 = vpack.c.b16 %v3684, %v3678
    %v3877 = vpack.c.b16 %v3685, %v3679
    %4070 = vmatprep.subr.bf16.mxu0 %v3687
    %4071 = vmatpush1.bf16.msra.mxu0 %v3686
    %4072 = vmatprep.subr.bf16.mxu0 %v3693
    %4073 = vmatpush1.bf16.msra.mxu0 %v3692
    %4074 = vmatprep.subr.bf16.mxu0 %v3699
    %4075 = vmatpush1.bf16.msra.mxu0 %v3698
    %4076 = vmatprep.subr.bf16.mxu0 %v3705
    %4077 = vmatpush1.bf16.msra.mxu0 %v3704
    %4078 = vmatprep.subr.bf16.mxu0 %v3711
    %4079 = vmatpush1.bf16.msra.mxu0 %v3710
    %4080 = vmatprep.subr.bf16.mxu0 %v3717
    %4081 = vmatpush1.bf16.msra.mxu0 %v3716
    %4082 = vmatprep.subr.bf16.mxu0 %v3723
    %4083 = vmatpush1.bf16.msra.mxu0 %v3722
    %4084 = vmatprep.subr.bf16.mxu0 %v3729
    %4085 = vmatpush1.bf16.msra.mxu0 %v3728
    %4086 = vmatprep.subr.bf16.mxu0 %v3735
    %4087 = vmatpush1.bf16.msra.mxu0 %v3734
    %4088 = vmatprep.subr.bf16.mxu0 %v3741
    %4089 = vmatpush1.bf16.msra.mxu0 %v3740
    %4090 = vmatprep.subr.bf16.mxu0 %v3747
    %4091 = vmatpush1.bf16.msra.mxu0 %v3746
    %4092 = vmatprep.subr.bf16.mxu0 %v3753
    %4093 = vmatpush1.bf16.msra.mxu0 %v3752
    %4094 = vmatprep.subr.bf16.mxu0 %v3759
    %4095 = vmatpush1.bf16.msra.mxu0 %v3758
    %4096 = vmatprep.subr.bf16.mxu0 %v3765
    %4097 = vmatpush1.bf16.msra.mxu0 %v3764
    %4098 = vmatprep.subr.bf16.mxu0 %v3771
    %4099 = vmatpush1.bf16.msra.mxu0 %v3770
    %4100 = vmatprep.subr.bf16.mxu0 %v3777
    %4101 = vmatpush1.bf16.msra.mxu0 %v3776
    %4102 = vmatprep.mubr.bf16.mxu0 %v2883
    %4103 = vmatmul.mubr.bf16.gmra.mrb[0].mxu0 %v2882
    %v4104 = vpop.f32.mrb[0].mxu0
    %v4105 = vadd.f32 %v3083, %v4104
    %v4106 = vpop.f32.mrb[0].mxu0
    %v4107 = vadd.f32 %v3087, %v4106
    %v4108 = vpop.f32.mrb[0].mxu0
    %v4109 = vpop.f32.mrb[0].mxu0
    %4110 = vdwg.mxu0
    %4111 = vmatprep.subr.bf16.mxu0 %v3783
    %4112 = vmatpush1.bf16.msra.mxu0 %v3782
    %4113 = vmatprep.subr.bf16.mxu0 %v3789
    %4114 = vmatpush1.bf16.msra.mxu0 %v3788
    %4115 = vmatprep.subr.bf16.mxu0 %v3795
    %4116 = vmatpush1.bf16.msra.mxu0 %v3794
    %4117 = vmatprep.subr.bf16.mxu0 %v3801
    %4118 = vmatpush1.bf16.msra.mxu0 %v3800
    %4119 = vmatprep.subr.bf16.mxu0 %v3807
    %4120 = vmatpush1.bf16.msra.mxu0 %v3806
    %4121 = vmatprep.subr.bf16.mxu0 %v3813
    %4122 = vmatpush1.bf16.msra.mxu0 %v3812
    %4123 = vmatprep.subr.bf16.mxu0 %v3819
    %4124 = vmatpush1.bf16.msra.mxu0 %v3818
    %4125 = vmatprep.subr.bf16.mxu0 %v3825
    %4126 = vmatpush1.bf16.msra.mxu0 %v3824
    %4127 = vmatprep.subr.bf16.mxu0 %v3831
    %4128 = vmatpush1.bf16.msra.mxu0 %v3830
    %4129 = vmatprep.subr.bf16.mxu0 %v3837
    %4130 = vmatpush1.bf16.msra.mxu0 %v3836
    %4131 = vmatprep.subr.bf16.mxu0 %v3843
    %4132 = vmatpush1.bf16.msra.mxu0 %v3842
    %4133 = vmatprep.subr.bf16.mxu0 %v3849
    %4134 = vmatpush1.bf16.msra.mxu0 %v3848
    %4135 = vmatprep.subr.bf16.mxu0 %v3855
    %4136 = vmatpush1.bf16.msra.mxu0 %v3854
    %4137 = vmatprep.subr.bf16.mxu0 %v3861
    %4138 = vmatpush1.bf16.msra.mxu0 %v3860
    %4139 = vmatprep.subr.bf16.mxu0 %v3867
    %4140 = vmatpush1.bf16.msra.mxu0 %v3866
    %4141 = vmatprep.subr.bf16.mxu0 %v3873
    %4142 = vmatpush1.bf16.msra.mxu0 %v3872
    %4143 = vmatprep.mubr.bf16.mxu0 %v2885
    %4144 = vmatmul.mubr.bf16.gmra.mrb[0].mxu0 %v2884
    %v4145 = vpop.f32.mrb[0].mxu0
    %v4146 = vadd.f32 %v4105, %v4145
    %v4147 = vpop.f32.mrb[0].mxu0
    %v4148 = vadd.f32 %v4107, %v4147
    %v4149 = vpop.f32.mrb[0].mxu0
    %v4150 = vpop.f32.mrb[0].mxu0
    %4151 = vdwg.mxu0
    %4152 = vmatprep.subr.bf16.mxu0 %v3689
    %4153 = vmatpush1.bf16.msra.mxu0 %v3688
    %4154 = vmatprep.subr.bf16.mxu0 %v3695
    %4155 = vmatpush1.bf16.msra.mxu0 %v3694
    %4156 = vmatprep.subr.bf16.mxu0 %v3701
    %4157 = vmatpush1.bf16.msra.mxu0 %v3700
    %4158 = vmatprep.subr.bf16.mxu0 %v3707
    %4159 = vmatpush1.bf16.msra.mxu0 %v3706
    %4160 = vmatprep.subr.bf16.mxu0 %v3713
    %4161 = vmatpush1.bf16.msra.mxu0 %v3712
    %4162 = vmatprep.subr.bf16.mxu0 %v3719
    %4163 = vmatpush1.bf16.msra.mxu0 %v3718
    %4164 = vmatprep.subr.bf16.mxu0 %v3725
    %4165 = vmatpush1.bf16.msra.mxu0 %v3724
    %4166 = vmatprep.subr.bf16.mxu0 %v3731
    %4167 = vmatpush1.bf16.msra.mxu0 %v3730
    %4168 = vmatprep.subr.bf16.mxu0 %v3737
    %4169 = vmatpush1.bf16.msra.mxu0 %v3736
    %4170 = vmatprep.subr.bf16.mxu0 %v3743
    %4171 = vmatpush1.bf16.msra.mxu0 %v3742
    %4172 = vmatprep.subr.bf16.mxu0 %v3749
    %4173 = vmatpush1.bf16.msra.mxu0 %v3748
    %4174 = vmatprep.subr.bf16.mxu0 %v3755
    %4175 = vmatpush1.bf16.msra.mxu0 %v3754
    %4176 = vmatprep.subr.bf16.mxu0 %v3761
    %4177 = vmatpush1.bf16.msra.mxu0 %v3760
    %4178 = vmatprep.subr.bf16.mxu0 %v3767
    %4179 = vmatpush1.bf16.msra.mxu0 %v3766
    %4180 = vmatprep.subr.bf16.mxu0 %v3773
    %4181 = vmatpush1.bf16.msra.mxu0 %v3772
    %4182 = vmatprep.subr.bf16.mxu0 %v3779
    %4183 = vmatpush1.bf16.msra.mxu0 %v3778
    %4184 = vmatprep.mubr.bf16.mxu0 %v2883
    %4185 = vmatmul.mubr.bf16.gmra.mrb[0].mxu0 %v2882
    %v4186 = vpop.f32.mrb[0].mxu0
    %v4187 = vadd.f32 %v3091, %v4186
    %v4188 = vpop.f32.mrb[0].mxu0
    %v4189 = vadd.f32 %v3095, %v4188
    %v4190 = vpop.f32.mrb[0].mxu0
    %v4191 = vpop.f32.mrb[0].mxu0
    %4192 = vdwg.mxu0
    %4193 = vmatprep.subr.bf16.mxu0 %v3785
    %4194 = vmatpush1.bf16.msra.mxu0 %v3784
    %4195 = vmatprep.subr.bf16.mxu0 %v3791
    %4196 = vmatpush1.bf16.msra.mxu0 %v3790
    %4197 = vmatprep.subr.bf16.mxu0 %v3797
    %4198 = vmatpush1.bf16.msra.mxu0 %v3796
    %4199 = vmatprep.subr.bf16.mxu0 %v3803
    %4200 = vmatpush1.bf16.msra.mxu0 %v3802
    %4201 = vmatprep.subr.bf16.mxu0 %v3809
    %4202 = vmatpush1.bf16.msra.mxu0 %v3808
    %4203 = vmatprep.subr.bf16.mxu0 %v3815
    %4204 = vmatpush1.bf16.msra.mxu0 %v3814
    %4205 = vmatprep.subr.bf16.mxu0 %v3821
    %4206 = vmatpush1.bf16.msra.mxu0 %v3820
    %4207 = vmatprep.subr.bf16.mxu0 %v3827
    %4208 = vmatpush1.bf16.msra.mxu0 %v3826
    %4209 = vmatprep.subr.bf16.mxu0 %v3833
    %4210 = vmatpush1.bf16.msra.mxu0 %v3832
    %4211 = vmatprep.subr.bf16.mxu0 %v3839
    %4212 = vmatpush1.bf16.msra.mxu0 %v3838
    %4213 = vmatprep.subr.bf16.mxu0 %v3845
    %4214 = vmatpush1.bf16.msra.mxu0 %v3844
    %4215 = vmatprep.subr.bf16.mxu0 %v3851
    %4216 = vmatpush1.bf16.msra.mxu0 %v3850
    %4217 = vmatprep.subr.bf16.mxu0 %v3857
    %4218 = vmatpush1.bf16.msra.mxu0 %v3856
    %4219 = vmatprep.subr.bf16.mxu0 %v3863
    %4220 = vmatpush1.bf16.msra.mxu0 %v3862
    %4221 = vmatprep.subr.bf16.mxu0 %v3869
    %4222 = vmatpush1.bf16.msra.mxu0 %v3868
    %4223 = vmatprep.subr.bf16.mxu0 %v3875
    %4224 = vmatpush1.bf16.msra.mxu0 %v3874
    %4225 = vmatprep.mubr.bf16.mxu0 %v2885
    %4226 = vmatmul.mubr.bf16.gmra.mrb[0].mxu0 %v2884
    %v4227 = vpop.f32.mrb[0].mxu0
    %v4228 = vadd.f32 %v4187, %v4227
    %v4229 = vpop.f32.mrb[0].mxu0
    %v4230 = vadd.f32 %v4189, %v4229
    %v4231 = vpop.f32.mrb[0].mxu0
    %v4232 = vpop.f32.mrb[0].mxu0
    %4233 = vdwg.mxu0
    %4234 = vmatprep.subr.bf16.mxu0 %v3691
    %4235 = vmatpush1.bf16.msra.mxu0 %v3690
    %4236 = vmatprep.subr.bf16.mxu0 %v3697
    %4237 = vmatpush1.bf16.msra.mxu0 %v3696
    %4238 = vmatprep.subr.bf16.mxu0 %v3703
    %4239 = vmatpush1.bf16.msra.mxu0 %v3702
    %4240 = vmatprep.subr.bf16.mxu0 %v3709
    %4241 = vmatpush1.bf16.msra.mxu0 %v3708
    %4242 = vmatprep.subr.bf16.mxu0 %v3715
    %4243 = vmatpush1.bf16.msra.mxu0 %v3714
    %4244 = vmatprep.subr.bf16.mxu0 %v3721
    %4245 = vmatpush1.bf16.msra.mxu0 %v3720
    %4246 = vmatprep.subr.bf16.mxu0 %v3727
    %4247 = vmatpush1.bf16.msra.mxu0 %v3726
    %4248 = vmatprep.subr.bf16.mxu0 %v3733
    %4249 = vmatpush1.bf16.msra.mxu0 %v3732
    %4250 = vmatprep.subr.bf16.mxu0 %v3739
    %4251 = vmatpush1.bf16.msra.mxu0 %v3738
    %4252 = vmatprep.subr.bf16.mxu0 %v3745
    %4253 = vmatpush1.bf16.msra.mxu0 %v3744
    %4254 = vmatprep.subr.bf16.mxu0 %v3751
    %4255 = vmatpush1.bf16.msra.mxu0 %v3750
    %4256 = vmatprep.subr.bf16.mxu0 %v3757
    %4257 = vmatpush1.bf16.msra.mxu0 %v3756
    %4258 = vmatprep.subr.bf16.mxu0 %v3763
    %4259 = vmatpush1.bf16.msra.mxu0 %v3762
    %4260 = vmatprep.subr.bf16.mxu0 %v3769
    %4261 = vmatpush1.bf16.msra.mxu0 %v3768
    %4262 = vmatprep.subr.bf16.mxu0 %v3775
    %4263 = vmatpush1.bf16.msra.mxu0 %v3774
    %4264 = vmatprep.subr.bf16.mxu0 %v3781
    %4265 = vmatpush1.bf16.msra.mxu0 %v3780
    %4266 = vmatprep.mubr.bf16.mxu0 %v2883
    %4267 = vmatmul.mubr.bf16.gmra.mrb[0].mxu0 %v2882
    %v4268 = vpop.f32.mrb[0].mxu0
    %v4269 = vadd.f32 %v3099, %v4268
    %v4270 = vpop.f32.mrb[0].mxu0
    %v4271 = vadd.f32 %v3103, %v4270
    %v4272 = vpop.f32.mrb[0].mxu0
    %v4273 = vpop.f32.mrb[0].mxu0
    %4274 = vdwg.mxu0
    %4275 = vmatprep.subr.bf16.mxu0 %v3787
    %4276 = vmatpush1.bf16.msra.mxu0 %v3786
    %4277 = vmatprep.subr.bf16.mxu0 %v3793
    %4278 = vmatpush1.bf16.msra.mxu0 %v3792
    %4279 = vmatprep.subr.bf16.mxu0 %v3799
    %4280 = vmatpush1.bf16.msra.mxu0 %v3798
    %4281 = vmatprep.subr.bf16.mxu0 %v3805
    %4282 = vmatpush1.bf16.msra.mxu0 %v3804
    %4283 = vmatprep.subr.bf16.mxu0 %v3811
    %4284 = vmatpush1.bf16.msra.mxu0 %v3810
    %4285 = vmatprep.subr.bf16.mxu0 %v3817
    %4286 = vmatpush1.bf16.msra.mxu0 %v3816
    %4287 = vmatprep.subr.bf16.mxu0 %v3823
    %4288 = vmatpush1.bf16.msra.mxu0 %v3822
    %4289 = vmatprep.subr.bf16.mxu0 %v3829
    %4290 = vmatpush1.bf16.msra.mxu0 %v3828
    %4291 = vmatprep.subr.bf16.mxu0 %v3835
    %4292 = vmatpush1.bf16.msra.mxu0 %v3834
    %4293 = vmatprep.subr.bf16.mxu0 %v3841
    %4294 = vmatpush1.bf16.msra.mxu0 %v3840
    %4295 = vmatprep.subr.bf16.mxu0 %v3847
    %4296 = vmatpush1.bf16.msra.mxu0 %v3846
    %4297 = vmatprep.subr.bf16.mxu0 %v3853
    %4298 = vmatpush1.bf16.msra.mxu0 %v3852
    %4299 = vmatprep.subr.bf16.mxu0 %v3859
    %4300 = vmatpush1.bf16.msra.mxu0 %v3858
    %4301 = vmatprep.subr.bf16.mxu0 %v3865
    %4302 = vmatpush1.bf16.msra.mxu0 %v3864
    %4303 = vmatprep.subr.bf16.mxu0 %v3871
    %4304 = vmatpush1.bf16.msra.mxu0 %v3870
    %4305 = vmatprep.subr.bf16.mxu0 %v3877
    %4306 = vmatpush1.bf16.msra.mxu0 %v3876
    %4307 = vmatprep.mubr.bf16.mxu0 %v2885
    %4308 = vmatmul.mubr.bf16.gmra.mrb[0].mxu0 %v2884
    %v4309 = vpop.f32.mrb[0].mxu0
    %v4310 = vadd.f32 %v4269, %v4309
    %v4311 = vpop.f32.mrb[0].mxu0
    %v4312 = vadd.f32 %v4271, %v4311
    %v4313 = vpop.f32.mrb[0].mxu0
    %v4314 = vpop.f32.mrb[0].mxu0
    %4315 = vdwg.mxu0
    %v4316 = vsub.f32 0.0, %v4146
    %v4317 = vsub.f32 0.0, %v4148
    %v4318 = vsub.f32 0.0, %v4228
    %v4319 = vsub.f32 0.0, %v4230
    %v4320 = vsub.f32 0.0, %v4310
    %v4321 = vsub.f32 0.0, %v4312
    %v4322 = vmul.f32 %v4316, 1.442695
    %v4323 = vpow.pop %v4322
    %v4324 = vmul.f32 %v4317, 1.442695
    %v4325 = vpow.pop %v4324
    %v4326 = vmul.f32 %v4318, 1.442695
    %v4327 = vpow.pop %v4326
    %v4328 = vmul.f32 %v4319, 1.442695
    %v4329 = vpow.pop %v4328
    %v4330 = vmul.f32 %v4320, 1.442695
    %v4331 = vpow.pop %v4330
    %v4332 = vmul.f32 %v4321, 1.442695
    %v4333 = vpow.pop %v4332
    %v4334 = vadd.f32 %v4323, 1.0
    %v4335 = vadd.f32 %v4325, 1.0
    %v4336 = vadd.f32 %v4327, 1.0
    %v4337 = vadd.f32 %v4329, 1.0
    %v4338 = vadd.f32 %v4331, 1.0
    %v4339 = vadd.f32 %v4333, 1.0
    %v4340 = vrcp.pop %v4334
    %v4341 = vrcp.pop %v4335
    %v4342 = vrcp.pop %v4336
    %v4343 = vrcp.pop %v4337
    %v4344 = vrcp.pop %v4338
    %v4345 = vrcp.pop %v4339
    %v4346 = vmul.f32 %v4340, 256.0
    %v4347 = vmul.f32 %v4341, 256.0
    %v4348 = vmul.f32 %v4342, 256.0
    %v4349 = vmul.f32 %v4343, 256.0
    %v4350 = vmul.f32 %v4344, 256.0
    %v4351 = vmul.f32 %v4345, 256.0
    %4352 = vst [vmem:[%s13] sm:$0xff] %v4346
    %4353 = vst [vmem:[%s13 + $0x8] sm:$0xff] %v4347
    %4354 = vst [vmem:[%s13 + $0x10] sm:$0xff] %v4348
    %4355 = vst [vmem:[%s13 + $0x18] sm:$0xff] %v4349
    %4356 = vst [vmem:[%s13 + $0x20] sm:$0xff] %v4350
    %4357 = vst [vmem:[%s13 + $0x28] sm:$0xff] %v4351
    // Predicated region
    $region74: #{net_forward.1} parent=1 // pred_check
      _
    $region75: #{net_forward.1} parent=1 // pred_check_branch
      %4359 = sbr.rel (0) target = $region77
    $region76: #{net_forward.1} parent=1 // pred_region
      _
    $region77: #{net_forward.1} parent=1 // pred_fallthru
      _
    // Predicated region
    $region78: #{net_forward.1} parent=1 // pred_check
      _
    $region79: #{net_forward.1} parent=1 // pred_check_branch
      %4361 = sbr.rel (0) target = $region81
    $region80: #{net_forward.1} parent=1 // pred_region
      _
    $region81: #{net_forward.1} parent=1 // pred_fallthru
      _
    %4362 = vsyncpa [#allocation3], 1
    %4363 = vsyncpa [#allocation5], 1
    %4364 = vsyncpa [#allocation8], 1

</llo_original>
